<compile_context>
chip_gen: v6e
topology: v6e:2x2x1
jax: 0.10.0
libtpu: 0.0.40
codegen_flags: <defaults>
</compile_context>

<pallas_src>
from functools import partial

import jax
import jax.numpy as jnp
from jax.experimental import pallas as pl
from jax.experimental.pallas import tpu as pltpu

INPUT_DIM = 2048
H1 = 512
H2 = 32
OUT = 1


def _round_up(n, m):
    return ((n + m - 1) // m) * m


def learner_kernel(x_ref, w1_ref, b1_ref, w23_ref, b23_ref, o_ref):
    # Layer 1: bf16 MXU matmul, f32 accumulation, bias + ReLU in f32.
    h1 = jnp.dot(x_ref[...], w1_ref[...], preferred_element_type=jnp.float32)
    h1 = jnp.maximum(h1 + b1_ref[...], 0.0)
    # Fused layers 2+3 (single matvec): [block_m, 512] @ [512, 1] -> [block_m, 1].
    h3 = jnp.dot(h1.astype(jnp.bfloat16), w23_ref[...],
                 preferred_element_type=jnp.float32)
    h3 = h3 + b23_ref[...]
    # Sigmoid: exp + approx reciprocal both land on the EUP slot.
    o_ref[...] = pl.reciprocal(1.0 + jnp.exp(-h3), approx=True)


@partial(jax.jit, static_argnames=("block_m",))
def learner_forward(x, params, *, block_m=256):
    """x: [B, 2048] float32. params: dict w1,b1,w2,b2,w3,b3 with weights stored [in, out]."""
    B = x.shape[0]

    # --- Algebraic fusion of layers 2 and 3 (no nonlinearity between them) ---
    w23 = jnp.dot(params["w2"], params["w3"],
                  preferred_element_type=jnp.float32)                     # [512, 1]
    b23 = (jnp.dot(params["b2"], params["w3"],
                   preferred_element_type=jnp.float32) + params["b3"])    # [1, 1]

    # bf16 MXU operands (accumulation stays f32 inside the kernel).
    w1_bf16 = params["w1"].astype(jnp.bfloat16)
    w23_bf16 = w23.astype(jnp.bfloat16)
    b1 = params["b1"].astype(jnp.float32)
    b23 = b23.astype(jnp.float32)

    # --- Batch tiling: row tile multiple of 16 (bf16 sublane packing), pad B ---
    bm = _round_up(min(block_m, _round_up(B, 16)), 16)
    b_pad = _round_up(B, bm)
    x_bf16 = x.astype(jnp.bfloat16)
    if b_pad != B:
        x_bf16 = jnp.pad(x_bf16, ((0, b_pad - B), (0, 0)))

    grid = (b_pad // bm,)
    out = pl.pallas_call(
        learner_kernel,
        out_shape=jax.ShapeDtypeStruct((b_pad, OUT), jnp.float32),
        grid_spec=pltpu.PrefetchScalarGridSpec(
            num_scalar_prefetch=0,
            grid=grid,
            in_specs=[
                pl.BlockSpec((bm, INPUT_DIM), lambda i: (i, 0)),   # x tile   (bf16)
                pl.BlockSpec((INPUT_DIM, H1), lambda i: (0, 0)),   # W1       (bf16, resident)
                pl.BlockSpec((1, H1), lambda i: (0, 0)),           # b1       (f32)
                pl.BlockSpec((H1, OUT), lambda i: (0, 0)),         # fused W23 (bf16)
                pl.BlockSpec((1, OUT), lambda i: (0, 0)),          # fused b23 (f32)
            ],
            out_specs=pl.BlockSpec((bm, OUT), lambda i: (i, 0)),
        ),
        compiler_params=pltpu.CompilerParams(
            dimension_semantics=("parallel",),
            vmem_limit_bytes=32 * 1024 * 1024,
        ),
    )(x_bf16, w1_bf16, b1, w23_bf16, b23)
    return out[:B]


def init_params(key):
    """Xavier-normal weights (Learner.weight_init) + PyTorch-default uniform biases.
    Weights stored pre-transposed as [in, out] (F.linear uses [out, in])."""
    ks = jax.random.split(key, 6)

    def xavier(k, fan_in, fan_out):
        std = (2.0 / (fan_in + fan_out)) ** 0.5
        return std * jax.random.normal(k, (fan_in, fan_out), dtype=jnp.float32)

    def bias(k, fan_in, fan_out):
        bound = 1.0 / (fan_in ** 0.5)
        return jax.random.uniform(k, (1, fan_out), jnp.float32, -bound, bound)

    return {
        "w1": xavier(ks[0], INPUT_DIM, H1), "b1": bias(ks[1], INPUT_DIM, H1),
        "w2": xavier(ks[2], H1, H2),        "b2": bias(ks[3], H1, H2),
        "w3": xavier(ks[4], H2, OUT),       "b3": bias(ks[5], H2, OUT),
    }


def reference_forward_f32(x, params):
    """Pure-f32 reference matching the PyTorch forward() (eval mode)."""
    h1 = jnp.maximum(x @ params["w1"] + params["b1"], 0.0)
    h2 = h1 @ params["w2"] + params["b2"]          # no ReLU here in forward()
    h3 = h2 @ params["w3"] + params["b3"]
    return jax.nn.sigmoid(h3)


def reference_forward_matched(x, params):
    """Reference using the same fusion + bf16 matmul / f32 accumulate recipe as the kernel."""
    w23 = params["w2"] @ params["w3"]
    b23 = params["b2"] @ params["w3"] + params["b3"]
    h1 = jnp.maximum(
        jnp.dot(x.astype(jnp.bfloat16), params["w1"].astype(jnp.bfloat16),
                preferred_element_type=jnp.float32) + params["b1"], 0.0)
    h3 = jnp.dot(h1.astype(jnp.bfloat16), w23.astype(jnp.bfloat16),
                 preferred_element_type=jnp.float32) + b23
    return jax.nn.sigmoid(h3)


if __name__ == "__main__":
    key = jax.random.PRNGKey(0)
    kx1, kx2, kp = jax.random.split(key, 3)
    params = init_params(kp)

    # Small smoke test (B=8 -> padded to one 16-row tile, grid=(1,)).
    x_small = jax.random.normal(kx1, (8, INPUT_DIM), dtype=jnp.float32)
    out_small = jax.block_until_ready(learner_forward(x_small, params))
    assert out_small.shape == (8, OUT)

    # Exercise the real tile size + padding + multi-step grid:
    # B=384, block_m=256 -> padded to 512, grid=(2,) (also shards across v7x TCs).
    x_large = jax.random.normal(kx2, (384, INPUT_DIM), dtype=jnp.float32)
    out_large = jax.block_until_ready(learner_forward(x_large, params))
    assert out_large.shape == (384, OUT)

    for x, out in ((x_small, out_small), (x_large, out_large)):
        ref_matched = reference_forward_matched(x, params)   # same bf16 recipe
        ref_f32 = reference_forward_f32(x, params)            # original f32 semantics
        assert jnp.allclose(out, ref_matched, atol=1e-2, rtol=0.0), "mismatch vs bf16-matched reference"
        assert jnp.allclose(out, ref_f32, atol=3e-2, rtol=0.0), "mismatch vs f32 reference"

    print("KERNEL_OK")
</pallas_src>

<mosaic_0001>
module attributes {stable_mosaic.version = 11 : i64} {
  func.func @learner_kernel(%arg0: i32, %arg1: memref<16x2048xbf16, #tpu.memory_space<vmem>>, %arg2: memref<2048x512xbf16, #tpu.memory_space<vmem>>, %arg3: memref<1x512xf32, #tpu.memory_space<vmem>>, %arg4: memref<512x1xbf16, #tpu.memory_space<vmem>>, %arg5: memref<1x1xf32, #tpu.memory_space<vmem>>, %arg6: memref<16x1xf32, #tpu.memory_space<vmem>>) attributes {dimension_semantics = [#tpu.dimension_semantics<parallel>], iteration_bounds = array<i64: 1>, scalar_prefetch = 0 : i64, scratch_operands = 0 : i64, tpu.core_type = #tpu.core_type<tc>, window_params = [{transform_indices = @transform_0, window_bounds = array<i64: 16, 2048>}, {pipeline_mode = #tpu.pipeline_mode<synchronous>, transform_indices = @transform_1, window_bounds = array<i64: 2048, 512>}, {pipeline_mode = #tpu.pipeline_mode<synchronous>, transform_indices = @transform_2, window_bounds = array<i64: 1, 512>}, {pipeline_mode = #tpu.pipeline_mode<synchronous>, transform_indices = @transform_3, window_bounds = array<i64: 512, 1>}, {pipeline_mode = #tpu.pipeline_mode<synchronous>, transform_indices = @transform_4, window_bounds = array<i64: 1, 1>}, {transform_indices = @transform_5, window_bounds = array<i64: 16, 1>}]} {
    %c0 = arith.constant 0 : index
    %c0_0 = arith.constant 0 : index
    %0 = vector.load %arg1[%c0, %c0_0] : memref<16x2048xbf16, #tpu.memory_space<vmem>>, vector<16x2048xbf16>
    %c0_1 = arith.constant 0 : index
    %c0_2 = arith.constant 0 : index
    %1 = vector.load %arg2[%c0_1, %c0_2] : memref<2048x512xbf16, #tpu.memory_space<vmem>>, vector<2048x512xbf16>
    %cst = arith.constant dense<0.000000e+00> : vector<16x512xf32>
    %2 = tpu.matmul %0, %1, %cst {dimension_numbers = #tpu.dot_dimension_numbers<[1], [0], [0], [1], [0, 0, 1, 1], [], []>} : vector<16x2048xbf16>, vector<2048x512xbf16>, vector<16x512xf32> -> vector<16x512xf32>
    %c0_3 = arith.constant 0 : index
    %c0_4 = arith.constant 0 : index
    %3 = vector.load %arg3[%c0_3, %c0_4] : memref<1x512xf32, #tpu.memory_space<vmem>>, vector<1x512xf32>
    %4 = vector.broadcast %3 : vector<1x512xf32> to vector<16x512xf32>
    %5 = arith.addf %2, %4 : vector<16x512xf32>
    %cst_5 = arith.constant 0.000000e+00 : f32
    %6 = vector.broadcast %cst_5 : f32 to vector<16x512xf32>
    %7 = arith.maximumf %5, %6 : vector<16x512xf32>
    %8 = arith.truncf %7 : vector<16x512xf32> to vector<16x512xbf16>
    %c0_6 = arith.constant 0 : index
    %c0_7 = arith.constant 0 : index
    %9 = vector.load %arg4[%c0_6, %c0_7] : memref<512x1xbf16, #tpu.memory_space<vmem>>, vector<512x1xbf16>
    %cst_8 = arith.constant dense<0.000000e+00> : vector<16x1xf32>
    %10 = tpu.matmul %8, %9, %cst_8 {dimension_numbers = #tpu.dot_dimension_numbers<[1], [0], [0], [1], [0, 0, 1, 1], [], []>} : vector<16x512xbf16>, vector<512x1xbf16>, vector<16x1xf32> -> vector<16x1xf32>
    %c0_9 = arith.constant 0 : index
    %c0_10 = arith.constant 0 : index
    %11 = vector.load %arg5[%c0_9, %c0_10] : memref<1x1xf32, #tpu.memory_space<vmem>>, vector<1x1xf32>
    %12 = vector.broadcast %11 : vector<1x1xf32> to vector<16x1xf32>
    %13 = arith.addf %10, %12 : vector<16x1xf32>
    %cst_11 = arith.constant 0.000000e+00 : f32
    %14 = vector.broadcast %cst_11 : f32 to vector<16x1xf32>
    %15 = arith.subf %14, %13 : vector<16x1xf32>
    %16 = math.exp %15 : vector<16x1xf32>
    %cst_12 = arith.constant 1.000000e+00 : f32
    %17 = vector.broadcast %cst_12 : f32 to vector<16x1xf32>
    %18 = arith.addf %17, %16 : vector<16x1xf32>
    %19 = tpu.reciprocal %18 {approx = true} : vector<16x1xf32> -> vector<16x1xf32>
    %c0_13 = arith.constant 0 : index
    %c0_14 = arith.constant 0 : index
    %20 = vector.load %arg6[%c0_13, %c0_14] : memref<16x1xf32, #tpu.memory_space<vmem>>, vector<16x1xf32>
    tpu.vector_store %arg6[%c0_13, %c0_14], %19 {strides = array<i32>} : memref<16x1xf32, #tpu.memory_space<vmem>>, vector<16x1xf32>,
    return
  }
  func.func @transform_0(%arg0: i32) -> (i32, i32) {
    %c0_i32 = arith.constant 0 : i32
    %c0_i32_0 = arith.constant 0 : i32
    return %arg0, %c0_i32 : i32, i32
  }
  func.func @transform_1(%arg0: i32) -> (i32, i32) {
    %c0_i32 = arith.constant 0 : i32
    %c0_i32_0 = arith.constant 0 : i32
    %c0_i32_1 = arith.constant 0 : i32
    return %c0_i32, %c0_i32_0 : i32, i32
  }
  func.func @transform_2(%arg0: i32) -> (i32, i32) {
    %c0_i32 = arith.constant 0 : i32
    %c0_i32_0 = arith.constant 0 : i32
    %c0_i32_1 = arith.constant 0 : i32
    return %c0_i32, %c0_i32_0 : i32, i32
  }
  func.func @transform_3(%arg0: i32) -> (i32, i32) {
    %c0_i32 = arith.constant 0 : i32
    %c0_i32_0 = arith.constant 0 : i32
    %c0_i32_1 = arith.constant 0 : i32
    return %c0_i32, %c0_i32_0 : i32, i32
  }
  func.func @transform_4(%arg0: i32) -> (i32, i32) {
    %c0_i32 = arith.constant 0 : i32
    %c0_i32_0 = arith.constant 0 : i32
    %c0_i32_1 = arith.constant 0 : i32
    return %c0_i32, %c0_i32_0 : i32, i32
  }
  func.func @transform_5(%arg0: i32) -> (i32, i32) {
    %c0_i32 = arith.constant 0 : i32
    %c0_i32_0 = arith.constant 0 : i32
    return %arg0, %c0_i32 : i32, i32
  }
}

</mosaic_0001>

<llo_original>
// kernel: learner_forward.1
$region0: #{learner_forward.1}
  #allocation0 [shape = 'u32[]', space=smem, size = 0x4, offset = 0x4, fixed_abs, tag = 'smem constant byte address 0x4 - core index']
  #allocation1 [shape = 'u32[144,128]{1,0:T(1,128)}', space=vmem, size = 0x12000, scoped, tag = 'internal scratch']
  #allocation2 [shape = 'f32[1,1]{1,0:T(1,128)S(1)}', space=vmem, size = 0x200, scoped, tag = 'scoped memory for learner_forward.1']
  %s0 = inlined_call_operand.vmem [shape: bf16[16,2048], index: 0, kind: input, shape index: {}]
  %s1 = inlined_call_operand.vmem [shape: bf16[2048,512], index: 1, kind: input, shape index: {}]
  %s2 = inlined_call_operand.vmem [shape: f32[1,512], index: 2, kind: input, shape index: {}]
  %s3 = inlined_call_operand.vmem [shape: bf16[512,1], index: 3, kind: input, shape index: {}]
  %s4 = inlined_call_operand.<no memory space> [shape: f32[1,1], index: 4, kind: input, shape index: {}]
  %s5 = inlined_call_operand.vmem [shape: f32[16,1], index: 5, kind: output, shape index: {}]
  %s6 = sld [smem:[#allocation0]]
  $region30: #{learner_forward.1} parent=0
    _
  %s8 = ssub.s32 1, %s6
  %s9 = scalar_select 0, %s8, %s6
  %v10 = vstv %s4
  %11 = vst [vmem:[#allocation2] sm:$0x1] %v10
  // Predicated region
  $region2: #{learner_forward.1} parent=0 // pred_check
    _
  $region3: #{learner_forward.1} parent=0 // pred_check_branch
    %13 = sbr.rel (0) target = $region5
  $region4: #{learner_forward.1} parent=0 // pred_region
    _
  $region5: #{learner_forward.1} parent=0 // pred_fallthru
    _
  // Predicated region
  $region6: #{learner_forward.1} parent=0 // pred_check
    _
  $region7: #{learner_forward.1} parent=0 // pred_check_branch
    %15 = sbr.rel (0) target = $region9
  $region8: #{learner_forward.1} parent=0 // pred_region
    _
  $region9: #{learner_forward.1} parent=0 // pred_fallthru
    _
  // Predicated region
  $region10: #{learner_forward.1} parent=0 // pred_check
    _
  $region11: #{learner_forward.1} parent=0 // pred_check_branch
    %17 = sbr.rel (0) target = $region13
  $region12: #{learner_forward.1} parent=0 // pred_region
    _
  $region13: #{learner_forward.1} parent=0 // pred_fallthru
    _
  // Predicated region
  $region14: #{learner_forward.1} parent=0 // pred_check
    _
  $region15: #{learner_forward.1} parent=0 // pred_check_branch
    %19 = sbr.rel (0) target = $region17
  $region16: #{learner_forward.1} parent=0 // pred_region
    _
  $region17: #{learner_forward.1} parent=0 // pred_fallthru
    _
  // Predicated region
  $region18: #{learner_forward.1} parent=0 // pred_check
    _
  $region19: #{learner_forward.1} parent=0 // pred_check_branch
    %21 = sbr.rel (0) target = $region21
  $region20: #{learner_forward.1} parent=0 // pred_region
    _
  $region21: #{learner_forward.1} parent=0 // pred_fallthru
    _
  %v23 = vld [vmem:[%s0] sm:$0xff]
  %v24 = vld [vmem:[%s0 + $0x8] sm:$0xff]
  %v25 = vld [vmem:[%s0 + $0x10] sm:$0xff]
  %v26 = vld [vmem:[%s0 + $0x18] sm:$0xff]
  %v27 = vld [vmem:[%s0 + $0x20] sm:$0xff]
  %v28 = vld [vmem:[%s0 + $0x28] sm:$0xff]
  %v29 = vld [vmem:[%s0 + $0x30] sm:$0xff]
  %v30 = vld [vmem:[%s0 + $0x38] sm:$0xff]
  %v31 = vld [vmem:[%s0 + $0x40] sm:$0xff]
  %v32 = vld [vmem:[%s0 + $0x48] sm:$0xff]
  %v33 = vld [vmem:[%s0 + $0x50] sm:$0xff]
  %v34 = vld [vmem:[%s0 + $0x58] sm:$0xff]
  %v35 = vld [vmem:[%s0 + $0x60] sm:$0xff]
  %v36 = vld [vmem:[%s0 + $0x68] sm:$0xff]
  %v37 = vld [vmem:[%s0 + $0x70] sm:$0xff]
  %v38 = vld [vmem:[%s0 + $0x78] sm:$0xff]
  %v39 = vld [vmem:[%s1] sm:$0xff]
  %v40 = vld [vmem:[%s1 + $0x8] sm:$0xff]
  %v41 = vld [vmem:[%s1 + $0x10] sm:$0xff]
  %v42 = vld [vmem:[%s1 + $0x18] sm:$0xff]
  %v43 = vld [vmem:[%s1 + $0x20] sm:$0xff]
  %v44 = vld [vmem:[%s1 + $0x28] sm:$0xff]
  %v45 = vld [vmem:[%s1 + $0x30] sm:$0xff]
  %v46 = vld [vmem:[%s1 + $0x38] sm:$0xff]
  %v47 = vld [vmem:[%s1 + $0x40] sm:$0xff]
  %v48 = vld [vmem:[%s1 + $0x48] sm:$0xff]
  %v49 = vld [vmem:[%s1 + $0x50] sm:$0xff]
  %v50 = vld [vmem:[%s1 + $0x58] sm:$0xff]
  %v51 = vld [vmem:[%s1 + $0x60] sm:$0xff]
  %v52 = vld [vmem:[%s1 + $0x68] sm:$0xff]
  %v53 = vld [vmem:[%s1 + $0x70] sm:$0xff]
  %v54 = vld [vmem:[%s1 + $0x78] sm:$0xff]
  %v55 = vld [vmem:[%s1 + $0x80] sm:$0xff]
  %v56 = vld [vmem:[%s1 + $0x88] sm:$0xff]
  %v57 = vld [vmem:[%s1 + $0x90] sm:$0xff]
  %v58 = vld [vmem:[%s1 + $0x98] sm:$0xff]
  %v59 = vld [vmem:[%s1 + $0xa0] sm:$0xff]
  %v60 = vld [vmem:[%s1 + $0xa8] sm:$0xff]
  %v61 = vld [vmem:[%s1 + $0xb0] sm:$0xff]
  %v62 = vld [vmem:[%s1 + $0xb8] sm:$0xff]
  %v63 = vld [vmem:[%s1 + $0xc0] sm:$0xff]
  %v64 = vld [vmem:[%s1 + $0xc8] sm:$0xff]
  %v65 = vld [vmem:[%s1 + $0xd0] sm:$0xff]
  %v66 = vld [vmem:[%s1 + $0xd8] sm:$0xff]
  %v67 = vld [vmem:[%s1 + $0xe0] sm:$0xff]
  %v68 = vld [vmem:[%s1 + $0xe8] sm:$0xff]
  %v69 = vld [vmem:[%s1 + $0xf0] sm:$0xff]
  %v70 = vld [vmem:[%s1 + $0xf8] sm:$0xff]
  %v71 = vld [vmem:[%s1 + $0x100] sm:$0xff]
  %v72 = vld [vmem:[%s1 + $0x108] sm:$0xff]
  %v73 = vld [vmem:[%s1 + $0x110] sm:$0xff]
  %v74 = vld [vmem:[%s1 + $0x118] sm:$0xff]
  %v75 = vld [vmem:[%s1 + $0x120] sm:$0xff]
  %v76 = vld [vmem:[%s1 + $0x128] sm:$0xff]
  %v77 = vld [vmem:[%s1 + $0x130] sm:$0xff]
  %v78 = vld [vmem:[%s1 + $0x138] sm:$0xff]
  %v79 = vld [vmem:[%s1 + $0x140] sm:$0xff]
  %v80 = vld [vmem:[%s1 + $0x148] sm:$0xff]
  %v81 = vld [vmem:[%s1 + $0x150] sm:$0xff]
  %v82 = vld [vmem:[%s1 + $0x158] sm:$0xff]
  %v83 = vld [vmem:[%s1 + $0x160] sm:$0xff]
  %v84 = vld [vmem:[%s1 + $0x168] sm:$0xff]
  %v85 = vld [vmem:[%s1 + $0x170] sm:$0xff]
  %v86 = vld [vmem:[%s1 + $0x178] sm:$0xff]
  %v87 = vld [vmem:[%s1 + $0x180] sm:$0xff]
  %v88 = vld [vmem:[%s1 + $0x188] sm:$0xff]
  %v89 = vld [vmem:[%s1 + $0x190] sm:$0xff]
  %v90 = vld [vmem:[%s1 + $0x198] sm:$0xff]
  %v91 = vld [vmem:[%s1 + $0x1a0] sm:$0xff]
  %v92 = vld [vmem:[%s1 + $0x1a8] sm:$0xff]
  %v93 = vld [vmem:[%s1 + $0x1b0] sm:$0xff]
  %v94 = vld [vmem:[%s1 + $0x1b8] sm:$0xff]
  %v95 = vld [vmem:[%s1 + $0x1c0] sm:$0xff]
  %v96 = vld [vmem:[%s1 + $0x1c8] sm:$0xff]
  %v97 = vld [vmem:[%s1 + $0x1d0] sm:$0xff]
  %v98 = vld [vmem:[%s1 + $0x1d8] sm:$0xff]
  %v99 = vld [vmem:[%s1 + $0x1e0] sm:$0xff]
  %v100 = vld [vmem:[%s1 + $0x1e8] sm:$0xff]
  %v101 = vld [vmem:[%s1 + $0x1f0] sm:$0xff]
  %v102 = vld [vmem:[%s1 + $0x1f8] sm:$0xff]
  %v103 = vld [vmem:[%s1 + $0x200] sm:$0xff]
  %v104 = vld [vmem:[%s1 + $0x208] sm:$0xff]
  %v105 = vld [vmem:[%s1 + $0x210] sm:$0xff]
  %v106 = vld [vmem:[%s1 + $0x218] sm:$0xff]
  %v107 = vld [vmem:[%s1 + $0x220] sm:$0xff]
  %v108 = vld [vmem:[%s1 + $0x228] sm:$0xff]
  %v109 = vld [vmem:[%s1 + $0x230] sm:$0xff]
  %v110 = vld [vmem:[%s1 + $0x238] sm:$0xff]
  %v111 = vld [vmem:[%s1 + $0x240] sm:$0xff]
  %v112 = vld [vmem:[%s1 + $0x248] sm:$0xff]
  %v113 = vld [vmem:[%s1 + $0x250] sm:$0xff]
  %v114 = vld [vmem:[%s1 + $0x258] sm:$0xff]
  %v115 = vld [vmem:[%s1 + $0x260] sm:$0xff]
  %v116 = vld [vmem:[%s1 + $0x268] sm:$0xff]
  %v117 = vld [vmem:[%s1 + $0x270] sm:$0xff]
  %v118 = vld [vmem:[%s1 + $0x278] sm:$0xff]
  %v119 = vld [vmem:[%s1 + $0x280] sm:$0xff]
  %v120 = vld [vmem:[%s1 + $0x288] sm:$0xff]
  %v121 = vld [vmem:[%s1 + $0x290] sm:$0xff]
  %v122 = vld [vmem:[%s1 + $0x298] sm:$0xff]
  %v123 = vld [vmem:[%s1 + $0x2a0] sm:$0xff]
  %v124 = vld [vmem:[%s1 + $0x2a8] sm:$0xff]
  %v125 = vld [vmem:[%s1 + $0x2b0] sm:$0xff]
  %v126 = vld [vmem:[%s1 + $0x2b8] sm:$0xff]
  %v127 = vld [vmem:[%s1 + $0x2c0] sm:$0xff]
  %v128 = vld [vmem:[%s1 + $0x2c8] sm:$0xff]
  %v129 = vld [vmem:[%s1 + $0x2d0] sm:$0xff]
  %v130 = vld [vmem:[%s1 + $0x2d8] sm:$0xff]
  %v131 = vld [vmem:[%s1 + $0x2e0] sm:$0xff]
  %v132 = vld [vmem:[%s1 + $0x2e8] sm:$0xff]
  %v133 = vld [vmem:[%s1 + $0x2f0] sm:$0xff]
  %v134 = vld [vmem:[%s1 + $0x2f8] sm:$0xff]
  %v135 = vld [vmem:[%s1 + $0x300] sm:$0xff]
  %v136 = vld [vmem:[%s1 + $0x308] sm:$0xff]
  %v137 = vld [vmem:[%s1 + $0x310] sm:$0xff]
  %v138 = vld [vmem:[%s1 + $0x318] sm:$0xff]
  %v139 = vld [vmem:[%s1 + $0x320] sm:$0xff]
  %v140 = vld [vmem:[%s1 + $0x328] sm:$0xff]
  %v141 = vld [vmem:[%s1 + $0x330] sm:$0xff]
  %v142 = vld [vmem:[%s1 + $0x338] sm:$0xff]
  %v143 = vld [vmem:[%s1 + $0x340] sm:$0xff]
  %v144 = vld [vmem:[%s1 + $0x348] sm:$0xff]
  %v145 = vld [vmem:[%s1 + $0x350] sm:$0xff]
  %v146 = vld [vmem:[%s1 + $0x358] sm:$0xff]
  %v147 = vld [vmem:[%s1 + $0x360] sm:$0xff]
  %v148 = vld [vmem:[%s1 + $0x368] sm:$0xff]
  %v149 = vld [vmem:[%s1 + $0x370] sm:$0xff]
  %v150 = vld [vmem:[%s1 + $0x378] sm:$0xff]
  %v151 = vld [vmem:[%s1 + $0x380] sm:$0xff]
  %v152 = vld [vmem:[%s1 + $0x388] sm:$0xff]
  %v153 = vld [vmem:[%s1 + $0x390] sm:$0xff]
  %v154 = vld [vmem:[%s1 + $0x398] sm:$0xff]
  %v155 = vld [vmem:[%s1 + $0x3a0] sm:$0xff]
  %v156 = vld [vmem:[%s1 + $0x3a8] sm:$0xff]
  %v157 = vld [vmem:[%s1 + $0x3b0] sm:$0xff]
  %v158 = vld [vmem:[%s1 + $0x3b8] sm:$0xff]
  %v159 = vld [vmem:[%s1 + $0x3c0] sm:$0xff]
  %v160 = vld [vmem:[%s1 + $0x3c8] sm:$0xff]
  %v161 = vld [vmem:[%s1 + $0x3d0] sm:$0xff]
  %v162 = vld [vmem:[%s1 + $0x3d8] sm:$0xff]
  %v163 = vld [vmem:[%s1 + $0x3e0] sm:$0xff]
  %v164 = vld [vmem:[%s1 + $0x3e8] sm:$0xff]
  %v165 = vld [vmem:[%s1 + $0x3f0] sm:$0xff]
  %v166 = vld [vmem:[%s1 + $0x3f8] sm:$0xff]
  %v167 = vld [vmem:[%s1 + $0x400] sm:$0xff]
  %v168 = vld [vmem:[%s1 + $0x408] sm:$0xff]
  %v169 = vld [vmem:[%s1 + $0x410] sm:$0xff]
  %v170 = vld [vmem:[%s1 + $0x418] sm:$0xff]
  %v171 = vld [vmem:[%s1 + $0x420] sm:$0xff]
  %v172 = vld [vmem:[%s1 + $0x428] sm:$0xff]
  %v173 = vld [vmem:[%s1 + $0x430] sm:$0xff]
  %v174 = vld [vmem:[%s1 + $0x438] sm:$0xff]
  %v175 = vld [vmem:[%s1 + $0x440] sm:$0xff]
  %v176 = vld [vmem:[%s1 + $0x448] sm:$0xff]
  %v177 = vld [vmem:[%s1 + $0x450] sm:$0xff]
  %v178 = vld [vmem:[%s1 + $0x458] sm:$0xff]
  %v179 = vld [vmem:[%s1 + $0x460] sm:$0xff]
  %v180 = vld [vmem:[%s1 + $0x468] sm:$0xff]
  %v181 = vld [vmem:[%s1 + $0x470] sm:$0xff]
  %v182 = vld [vmem:[%s1 + $0x478] sm:$0xff]
  %v183 = vld [vmem:[%s1 + $0x480] sm:$0xff]
  %v184 = vld [vmem:[%s1 + $0x488] sm:$0xff]
  %v185 = vld [vmem:[%s1 + $0x490] sm:$0xff]
  %v186 = vld [vmem:[%s1 + $0x498] sm:$0xff]
  %v187 = vld [vmem:[%s1 + $0x4a0] sm:$0xff]
  %v188 = vld [vmem:[%s1 + $0x4a8] sm:$0xff]
  %v189 = vld [vmem:[%s1 + $0x4b0] sm:$0xff]
  %v190 = vld [vmem:[%s1 + $0x4b8] sm:$0xff]
  %v191 = vld [vmem:[%s1 + $0x4c0] sm:$0xff]
  %v192 = vld [vmem:[%s1 + $0x4c8] sm:$0xff]
  %v193 = vld [vmem:[%s1 + $0x4d0] sm:$0xff]
  %v194 = vld [vmem:[%s1 + $0x4d8] sm:$0xff]
  %v195 = vld [vmem:[%s1 + $0x4e0] sm:$0xff]
  %v196 = vld [vmem:[%s1 + $0x4e8] sm:$0xff]
  %v197 = vld [vmem:[%s1 + $0x4f0] sm:$0xff]
  %v198 = vld [vmem:[%s1 + $0x4f8] sm:$0xff]
  %v199 = vld [vmem:[%s1 + $0x500] sm:$0xff]
  %v200 = vld [vmem:[%s1 + $0x508] sm:$0xff]
  %v201 = vld [vmem:[%s1 + $0x510] sm:$0xff]
  %v202 = vld [vmem:[%s1 + $0x518] sm:$0xff]
  %v203 = vld [vmem:[%s1 + $0x520] sm:$0xff]
  %v204 = vld [vmem:[%s1 + $0x528] sm:$0xff]
  %v205 = vld [vmem:[%s1 + $0x530] sm:$0xff]
  %v206 = vld [vmem:[%s1 + $0x538] sm:$0xff]
  %v207 = vld [vmem:[%s1 + $0x540] sm:$0xff]
  %v208 = vld [vmem:[%s1 + $0x548] sm:$0xff]
  %v209 = vld [vmem:[%s1 + $0x550] sm:$0xff]
  %v210 = vld [vmem:[%s1 + $0x558] sm:$0xff]
  %v211 = vld [vmem:[%s1 + $0x560] sm:$0xff]
  %v212 = vld [vmem:[%s1 + $0x568] sm:$0xff]
  %v213 = vld [vmem:[%s1 + $0x570] sm:$0xff]
  %v214 = vld [vmem:[%s1 + $0x578] sm:$0xff]
  %v215 = vld [vmem:[%s1 + $0x580] sm:$0xff]
  %v216 = vld [vmem:[%s1 + $0x588] sm:$0xff]
  %v217 = vld [vmem:[%s1 + $0x590] sm:$0xff]
  %v218 = vld [vmem:[%s1 + $0x598] sm:$0xff]
  %v219 = vld [vmem:[%s1 + $0x5a0] sm:$0xff]
  %v220 = vld [vmem:[%s1 + $0x5a8] sm:$0xff]
  %v221 = vld [vmem:[%s1 + $0x5b0] sm:$0xff]
  %v222 = vld [vmem:[%s1 + $0x5b8] sm:$0xff]
  %v223 = vld [vmem:[%s1 + $0x5c0] sm:$0xff]
  %v224 = vld [vmem:[%s1 + $0x5c8] sm:$0xff]
  %v225 = vld [vmem:[%s1 + $0x5d0] sm:$0xff]
  %v226 = vld [vmem:[%s1 + $0x5d8] sm:$0xff]
  %v227 = vld [vmem:[%s1 + $0x5e0] sm:$0xff]
  %v228 = vld [vmem:[%s1 + $0x5e8] sm:$0xff]
  %v229 = vld [vmem:[%s1 + $0x5f0] sm:$0xff]
  %v230 = vld [vmem:[%s1 + $0x5f8] sm:$0xff]
  %v231 = vld [vmem:[%s1 + $0x600] sm:$0xff]
  %v232 = vld [vmem:[%s1 + $0x608] sm:$0xff]
  %v233 = vld [vmem:[%s1 + $0x610] sm:$0xff]
  %v234 = vld [vmem:[%s1 + $0x618] sm:$0xff]
  %v235 = vld [vmem:[%s1 + $0x620] sm:$0xff]
  %v236 = vld [vmem:[%s1 + $0x628] sm:$0xff]
  %v237 = vld [vmem:[%s1 + $0x630] sm:$0xff]
  %v238 = vld [vmem:[%s1 + $0x638] sm:$0xff]
  %v239 = vld [vmem:[%s1 + $0x640] sm:$0xff]
  %v240 = vld [vmem:[%s1 + $0x648] sm:$0xff]
  %v241 = vld [vmem:[%s1 + $0x650] sm:$0xff]
  %v242 = vld [vmem:[%s1 + $0x658] sm:$0xff]
  %v243 = vld [vmem:[%s1 + $0x660] sm:$0xff]
  %v244 = vld [vmem:[%s1 + $0x668] sm:$0xff]
  %v245 = vld [vmem:[%s1 + $0x670] sm:$0xff]
  %v246 = vld [vmem:[%s1 + $0x678] sm:$0xff]
  %v247 = vld [vmem:[%s1 + $0x680] sm:$0xff]
  %v248 = vld [vmem:[%s1 + $0x688] sm:$0xff]
  %v249 = vld [vmem:[%s1 + $0x690] sm:$0xff]
  %v250 = vld [vmem:[%s1 + $0x698] sm:$0xff]
  %v251 = vld [vmem:[%s1 + $0x6a0] sm:$0xff]
  %v252 = vld [vmem:[%s1 + $0x6a8] sm:$0xff]
  %v253 = vld [vmem:[%s1 + $0x6b0] sm:$0xff]
  %v254 = vld [vmem:[%s1 + $0x6b8] sm:$0xff]
  %v255 = vld [vmem:[%s1 + $0x6c0] sm:$0xff]
  %v256 = vld [vmem:[%s1 + $0x6c8] sm:$0xff]
  %v257 = vld [vmem:[%s1 + $0x6d0] sm:$0xff]
  %v258 = vld [vmem:[%s1 + $0x6d8] sm:$0xff]
  %v259 = vld [vmem:[%s1 + $0x6e0] sm:$0xff]
  %v260 = vld [vmem:[%s1 + $0x6e8] sm:$0xff]
  %v261 = vld [vmem:[%s1 + $0x6f0] sm:$0xff]
  %v262 = vld [vmem:[%s1 + $0x6f8] sm:$0xff]
  %v263 = vld [vmem:[%s1 + $0x700] sm:$0xff]
  %v264 = vld [vmem:[%s1 + $0x708] sm:$0xff]
  %v265 = vld [vmem:[%s1 + $0x710] sm:$0xff]
  %v266 = vld [vmem:[%s1 + $0x718] sm:$0xff]
  %v267 = vld [vmem:[%s1 + $0x720] sm:$0xff]
  %v268 = vld [vmem:[%s1 + $0x728] sm:$0xff]
  %v269 = vld [vmem:[%s1 + $0x730] sm:$0xff]
  %v270 = vld [vmem:[%s1 + $0x738] sm:$0xff]
  %v271 = vld [vmem:[%s1 + $0x740] sm:$0xff]
  %v272 = vld [vmem:[%s1 + $0x748] sm:$0xff]
  %v273 = vld [vmem:[%s1 + $0x750] sm:$0xff]
  %v274 = vld [vmem:[%s1 + $0x758] sm:$0xff]
  %v275 = vld [vmem:[%s1 + $0x760] sm:$0xff]
  %v276 = vld [vmem:[%s1 + $0x768] sm:$0xff]
  %v277 = vld [vmem:[%s1 + $0x770] sm:$0xff]
  %v278 = vld [vmem:[%s1 + $0x778] sm:$0xff]
  %v279 = vld [vmem:[%s1 + $0x780] sm:$0xff]
  %v280 = vld [vmem:[%s1 + $0x788] sm:$0xff]
  %v281 = vld [vmem:[%s1 + $0x790] sm:$0xff]
  %v282 = vld [vmem:[%s1 + $0x798] sm:$0xff]
  %v283 = vld [vmem:[%s1 + $0x7a0] sm:$0xff]
  %v284 = vld [vmem:[%s1 + $0x7a8] sm:$0xff]
  %v285 = vld [vmem:[%s1 + $0x7b0] sm:$0xff]
  %v286 = vld [vmem:[%s1 + $0x7b8] sm:$0xff]
  %v287 = vld [vmem:[%s1 + $0x7c0] sm:$0xff]
  %v288 = vld [vmem:[%s1 + $0x7c8] sm:$0xff]
  %v289 = vld [vmem:[%s1 + $0x7d0] sm:$0xff]
  %v290 = vld [vmem:[%s1 + $0x7d8] sm:$0xff]
  %v291 = vld [vmem:[%s1 + $0x7e0] sm:$0xff]
  %v292 = vld [vmem:[%s1 + $0x7e8] sm:$0xff]
  %v293 = vld [vmem:[%s1 + $0x7f0] sm:$0xff]
  %v294 = vld [vmem:[%s1 + $0x7f8] sm:$0xff]
  %v295 = vld [vmem:[%s1 + $0x800] sm:$0xff]
  %v296 = vld [vmem:[%s1 + $0x808] sm:$0xff]
  %v297 = vld [vmem:[%s1 + $0x810] sm:$0xff]
  %v298 = vld [vmem:[%s1 + $0x818] sm:$0xff]
  %v299 = vld [vmem:[%s1 + $0x820] sm:$0xff]
  %v300 = vld [vmem:[%s1 + $0x828] sm:$0xff]
  %v301 = vld [vmem:[%s1 + $0x830] sm:$0xff]
  %v302 = vld [vmem:[%s1 + $0x838] sm:$0xff]
  %v303 = vld [vmem:[%s1 + $0x840] sm:$0xff]
  %v304 = vld [vmem:[%s1 + $0x848] sm:$0xff]
  %v305 = vld [vmem:[%s1 + $0x850] sm:$0xff]
  %v306 = vld [vmem:[%s1 + $0x858] sm:$0xff]
  %v307 = vld [vmem:[%s1 + $0x860] sm:$0xff]
  %v308 = vld [vmem:[%s1 + $0x868] sm:$0xff]
  %v309 = vld [vmem:[%s1 + $0x870] sm:$0xff]
  %v310 = vld [vmem:[%s1 + $0x878] sm:$0xff]
  %v311 = vld [vmem:[%s1 + $0x880] sm:$0xff]
  %v312 = vld [vmem:[%s1 + $0x888] sm:$0xff]
  %v313 = vld [vmem:[%s1 + $0x890] sm:$0xff]
  %v314 = vld [vmem:[%s1 + $0x898] sm:$0xff]
  %v315 = vld [vmem:[%s1 + $0x8a0] sm:$0xff]
  %v316 = vld [vmem:[%s1 + $0x8a8] sm:$0xff]
  %v317 = vld [vmem:[%s1 + $0x8b0] sm:$0xff]
  %v318 = vld [vmem:[%s1 + $0x8b8] sm:$0xff]
  %v319 = vld [vmem:[%s1 + $0x8c0] sm:$0xff]
  %v320 = vld [vmem:[%s1 + $0x8c8] sm:$0xff]
  %v321 = vld [vmem:[%s1 + $0x8d0] sm:$0xff]
  %v322 = vld [vmem:[%s1 + $0x8d8] sm:$0xff]
  %v323 = vld [vmem:[%s1 + $0x8e0] sm:$0xff]
  %v324 = vld [vmem:[%s1 + $0x8e8] sm:$0xff]
  %v325 = vld [vmem:[%s1 + $0x8f0] sm:$0xff]
  %v326 = vld [vmem:[%s1 + $0x8f8] sm:$0xff]
  %v327 = vld [vmem:[%s1 + $0x900] sm:$0xff]
  %v328 = vld [vmem:[%s1 + $0x908] sm:$0xff]
  %v329 = vld [vmem:[%s1 + $0x910] sm:$0xff]
  %v330 = vld [vmem:[%s1 + $0x918] sm:$0xff]
  %v331 = vld [vmem:[%s1 + $0x920] sm:$0xff]
  %v332 = vld [vmem:[%s1 + $0x928] sm:$0xff]
  %v333 = vld [vmem:[%s1 + $0x930] sm:$0xff]
  %v334 = vld [vmem:[%s1 + $0x938] sm:$0xff]
  %v335 = vld [vmem:[%s1 + $0x940] sm:$0xff]
  %v336 = vld [vmem:[%s1 + $0x948] sm:$0xff]
  %v337 = vld [vmem:[%s1 + $0x950] sm:$0xff]
  %v338 = vld [vmem:[%s1 + $0x958] sm:$0xff]
  %v339 = vld [vmem:[%s1 + $0x960] sm:$0xff]
  %v340 = vld [vmem:[%s1 + $0x968] sm:$0xff]
  %v341 = vld [vmem:[%s1 + $0x970] sm:$0xff]
  %v342 = vld [vmem:[%s1 + $0x978] sm:$0xff]
  %v343 = vld [vmem:[%s1 + $0x980] sm:$0xff]
  %v344 = vld [vmem:[%s1 + $0x988] sm:$0xff]
  %v345 = vld [vmem:[%s1 + $0x990] sm:$0xff]
  %v346 = vld [vmem:[%s1 + $0x998] sm:$0xff]
  %v347 = vld [vmem:[%s1 + $0x9a0] sm:$0xff]
  %v348 = vld [vmem:[%s1 + $0x9a8] sm:$0xff]
  %v349 = vld [vmem:[%s1 + $0x9b0] sm:$0xff]
  %v350 = vld [vmem:[%s1 + $0x9b8] sm:$0xff]
  %v351 = vld [vmem:[%s1 + $0x9c0] sm:$0xff]
  %v352 = vld [vmem:[%s1 + $0x9c8] sm:$0xff]
  %v353 = vld [vmem:[%s1 + $0x9d0] sm:$0xff]
  %v354 = vld [vmem:[%s1 + $0x9d8] sm:$0xff]
  %v355 = vld [vmem:[%s1 + $0x9e0] sm:$0xff]
  %v356 = vld [vmem:[%s1 + $0x9e8] sm:$0xff]
  %v357 = vld [vmem:[%s1 + $0x9f0] sm:$0xff]
  %v358 = vld [vmem:[%s1 + $0x9f8] sm:$0xff]
  %v359 = vld [vmem:[%s1 + $0xa00] sm:$0xff]
  %v360 = vld [vmem:[%s1 + $0xa08] sm:$0xff]
  %v361 = vld [vmem:[%s1 + $0xa10] sm:$0xff]
  %v362 = vld [vmem:[%s1 + $0xa18] sm:$0xff]
  %v363 = vld [vmem:[%s1 + $0xa20] sm:$0xff]
  %v364 = vld [vmem:[%s1 + $0xa28] sm:$0xff]
  %v365 = vld [vmem:[%s1 + $0xa30] sm:$0xff]
  %v366 = vld [vmem:[%s1 + $0xa38] sm:$0xff]
  %v367 = vld [vmem:[%s1 + $0xa40] sm:$0xff]
  %v368 = vld [vmem:[%s1 + $0xa48] sm:$0xff]
  %v369 = vld [vmem:[%s1 + $0xa50] sm:$0xff]
  %v370 = vld [vmem:[%s1 + $0xa58] sm:$0xff]
  %v371 = vld [vmem:[%s1 + $0xa60] sm:$0xff]
  %v372 = vld [vmem:[%s1 + $0xa68] sm:$0xff]
  %v373 = vld [vmem:[%s1 + $0xa70] sm:$0xff]
  %v374 = vld [vmem:[%s1 + $0xa78] sm:$0xff]
  %v375 = vld [vmem:[%s1 + $0xa80] sm:$0xff]
  %v376 = vld [vmem:[%s1 + $0xa88] sm:$0xff]
  %v377 = vld [vmem:[%s1 + $0xa90] sm:$0xff]
  %v378 = vld [vmem:[%s1 + $0xa98] sm:$0xff]
  %v379 = vld [vmem:[%s1 + $0xaa0] sm:$0xff]
  %v380 = vld [vmem:[%s1 + $0xaa8] sm:$0xff]
  %v381 = vld [vmem:[%s1 + $0xab0] sm:$0xff]
  %v382 = vld [vmem:[%s1 + $0xab8] sm:$0xff]
  %v383 = vld [vmem:[%s1 + $0xac0] sm:$0xff]
  %v384 = vld [vmem:[%s1 + $0xac8] sm:$0xff]
  %v385 = vld [vmem:[%s1 + $0xad0] sm:$0xff]
  %v386 = vld [vmem:[%s1 + $0xad8] sm:$0xff]
  %v387 = vld [vmem:[%s1 + $0xae0] sm:$0xff]
  %v388 = vld [vmem:[%s1 + $0xae8] sm:$0xff]
  %v389 = vld [vmem:[%s1 + $0xaf0] sm:$0xff]
  %v390 = vld [vmem:[%s1 + $0xaf8] sm:$0xff]
  %v391 = vld [vmem:[%s1 + $0xb00] sm:$0xff]
  %v392 = vld [vmem:[%s1 + $0xb08] sm:$0xff]
  %v393 = vld [vmem:[%s1 + $0xb10] sm:$0xff]
  %v394 = vld [vmem:[%s1 + $0xb18] sm:$0xff]
  %v395 = vld [vmem:[%s1 + $0xb20] sm:$0xff]
  %v396 = vld [vmem:[%s1 + $0xb28] sm:$0xff]
  %v397 = vld [vmem:[%s1 + $0xb30] sm:$0xff]
  %v398 = vld [vmem:[%s1 + $0xb38] sm:$0xff]
  %v399 = vld [vmem:[%s1 + $0xb40] sm:$0xff]
  %v400 = vld [vmem:[%s1 + $0xb48] sm:$0xff]
  %v401 = vld [vmem:[%s1 + $0xb50] sm:$0xff]
  %v402 = vld [vmem:[%s1 + $0xb58] sm:$0xff]
  %v403 = vld [vmem:[%s1 + $0xb60] sm:$0xff]
  %v404 = vld [vmem:[%s1 + $0xb68] sm:$0xff]
  %v405 = vld [vmem:[%s1 + $0xb70] sm:$0xff]
  %v406 = vld [vmem:[%s1 + $0xb78] sm:$0xff]
  %v407 = vld [vmem:[%s1 + $0xb80] sm:$0xff]
  %v408 = vld [vmem:[%s1 + $0xb88] sm:$0xff]
  %v409 = vld [vmem:[%s1 + $0xb90] sm:$0xff]
  %v410 = vld [vmem:[%s1 + $0xb98] sm:$0xff]
  %v411 = vld [vmem:[%s1 + $0xba0] sm:$0xff]
  %v412 = vld [vmem:[%s1 + $0xba8] sm:$0xff]
  %v413 = vld [vmem:[%s1 + $0xbb0] sm:$0xff]
  %v414 = vld [vmem:[%s1 + $0xbb8] sm:$0xff]
  %v415 = vld [vmem:[%s1 + $0xbc0] sm:$0xff]
  %v416 = vld [vmem:[%s1 + $0xbc8] sm:$0xff]
  %v417 = vld [vmem:[%s1 + $0xbd0] sm:$0xff]
  %v418 = vld [vmem:[%s1 + $0xbd8] sm:$0xff]
  %v419 = vld [vmem:[%s1 + $0xbe0] sm:$0xff]
  %v420 = vld [vmem:[%s1 + $0xbe8] sm:$0xff]
  %v421 = vld [vmem:[%s1 + $0xbf0] sm:$0xff]
  %v422 = vld [vmem:[%s1 + $0xbf8] sm:$0xff]
  %v423 = vld [vmem:[%s1 + $0xc00] sm:$0xff]
  %v424 = vld [vmem:[%s1 + $0xc08] sm:$0xff]
  %v425 = vld [vmem:[%s1 + $0xc10] sm:$0xff]
  %v426 = vld [vmem:[%s1 + $0xc18] sm:$0xff]
  %v427 = vld [vmem:[%s1 + $0xc20] sm:$0xff]
  %v428 = vld [vmem:[%s1 + $0xc28] sm:$0xff]
  %v429 = vld [vmem:[%s1 + $0xc30] sm:$0xff]
  %v430 = vld [vmem:[%s1 + $0xc38] sm:$0xff]
  %v431 = vld [vmem:[%s1 + $0xc40] sm:$0xff]
  %v432 = vld [vmem:[%s1 + $0xc48] sm:$0xff]
  %v433 = vld [vmem:[%s1 + $0xc50] sm:$0xff]
  %v434 = vld [vmem:[%s1 + $0xc58] sm:$0xff]
  %v435 = vld [vmem:[%s1 + $0xc60] sm:$0xff]
  %v436 = vld [vmem:[%s1 + $0xc68] sm:$0xff]
  %v437 = vld [vmem:[%s1 + $0xc70] sm:$0xff]
  %v438 = vld [vmem:[%s1 + $0xc78] sm:$0xff]
  %v439 = vld [vmem:[%s1 + $0xc80] sm:$0xff]
  %v440 = vld [vmem:[%s1 + $0xc88] sm:$0xff]
  %v441 = vld [vmem:[%s1 + $0xc90] sm:$0xff]
  %v442 = vld [vmem:[%s1 + $0xc98] sm:$0xff]
  %v443 = vld [vmem:[%s1 + $0xca0] sm:$0xff]
  %v444 = vld [vmem:[%s1 + $0xca8] sm:$0xff]
  %v445 = vld [vmem:[%s1 + $0xcb0] sm:$0xff]
  %v446 = vld [vmem:[%s1 + $0xcb8] sm:$0xff]
  %v447 = vld [vmem:[%s1 + $0xcc0] sm:$0xff]
  %v448 = vld [vmem:[%s1 + $0xcc8] sm:$0xff]
  %v449 = vld [vmem:[%s1 + $0xcd0] sm:$0xff]
  %v450 = vld [vmem:[%s1 + $0xcd8] sm:$0xff]
  %v451 = vld [vmem:[%s1 + $0xce0] sm:$0xff]
  %v452 = vld [vmem:[%s1 + $0xce8] sm:$0xff]
  %v453 = vld [vmem:[%s1 + $0xcf0] sm:$0xff]
  %v454 = vld [vmem:[%s1 + $0xcf8] sm:$0xff]
  %v455 = vld [vmem:[%s1 + $0xd00] sm:$0xff]
  %v456 = vld [vmem:[%s1 + $0xd08] sm:$0xff]
  %v457 = vld [vmem:[%s1 + $0xd10] sm:$0xff]
  %v458 = vld [vmem:[%s1 + $0xd18] sm:$0xff]
  %v459 = vld [vmem:[%s1 + $0xd20] sm:$0xff]
  %v460 = vld [vmem:[%s1 + $0xd28] sm:$0xff]
  %v461 = vld [vmem:[%s1 + $0xd30] sm:$0xff]
  %v462 = vld [vmem:[%s1 + $0xd38] sm:$0xff]
  %v463 = vld [vmem:[%s1 + $0xd40] sm:$0xff]
  %v464 = vld [vmem:[%s1 + $0xd48] sm:$0xff]
  %v465 = vld [vmem:[%s1 + $0xd50] sm:$0xff]
  %v466 = vld [vmem:[%s1 + $0xd58] sm:$0xff]
  %v467 = vld [vmem:[%s1 + $0xd60] sm:$0xff]
  %v468 = vld [vmem:[%s1 + $0xd68] sm:$0xff]
  %v469 = vld [vmem:[%s1 + $0xd70] sm:$0xff]
  %v470 = vld [vmem:[%s1 + $0xd78] sm:$0xff]
  %v471 = vld [vmem:[%s1 + $0xd80] sm:$0xff]
  %v472 = vld [vmem:[%s1 + $0xd88] sm:$0xff]
  %v473 = vld [vmem:[%s1 + $0xd90] sm:$0xff]
  %v474 = vld [vmem:[%s1 + $0xd98] sm:$0xff]
  %v475 = vld [vmem:[%s1 + $0xda0] sm:$0xff]
  %v476 = vld [vmem:[%s1 + $0xda8] sm:$0xff]
  %v477 = vld [vmem:[%s1 + $0xdb0] sm:$0xff]
  %v478 = vld [vmem:[%s1 + $0xdb8] sm:$0xff]
  %v479 = vld [vmem:[%s1 + $0xdc0] sm:$0xff]
  %v480 = vld [vmem:[%s1 + $0xdc8] sm:$0xff]
  %v481 = vld [vmem:[%s1 + $0xdd0] sm:$0xff]
  %v482 = vld [vmem:[%s1 + $0xdd8] sm:$0xff]
  %v483 = vld [vmem:[%s1 + $0xde0] sm:$0xff]
  %v484 = vld [vmem:[%s1 + $0xde8] sm:$0xff]
  %v485 = vld [vmem:[%s1 + $0xdf0] sm:$0xff]
  %v486 = vld [vmem:[%s1 + $0xdf8] sm:$0xff]
  %v487 = vld [vmem:[%s1 + $0xe00] sm:$0xff]
  %v488 = vld [vmem:[%s1 + $0xe08] sm:$0xff]
  %v489 = vld [vmem:[%s1 + $0xe10] sm:$0xff]
  %v490 = vld [vmem:[%s1 + $0xe18] sm:$0xff]
  %v491 = vld [vmem:[%s1 + $0xe20] sm:$0xff]
  %v492 = vld [vmem:[%s1 + $0xe28] sm:$0xff]
  %v493 = vld [vmem:[%s1 + $0xe30] sm:$0xff]
  %v494 = vld [vmem:[%s1 + $0xe38] sm:$0xff]
  %v495 = vld [vmem:[%s1 + $0xe40] sm:$0xff]
  %v496 = vld [vmem:[%s1 + $0xe48] sm:$0xff]
  %v497 = vld [vmem:[%s1 + $0xe50] sm:$0xff]
  %v498 = vld [vmem:[%s1 + $0xe58] sm:$0xff]
  %v499 = vld [vmem:[%s1 + $0xe60] sm:$0xff]
  %v500 = vld [vmem:[%s1 + $0xe68] sm:$0xff]
  %v501 = vld [vmem:[%s1 + $0xe70] sm:$0xff]
  %v502 = vld [vmem:[%s1 + $0xe78] sm:$0xff]
  %v503 = vld [vmem:[%s1 + $0xe80] sm:$0xff]
  %v504 = vld [vmem:[%s1 + $0xe88] sm:$0xff]
  %v505 = vld [vmem:[%s1 + $0xe90] sm:$0xff]
  %v506 = vld [vmem:[%s1 + $0xe98] sm:$0xff]
  %v507 = vld [vmem:[%s1 + $0xea0] sm:$0xff]
  %v508 = vld [vmem:[%s1 + $0xea8] sm:$0xff]
  %v509 = vld [vmem:[%s1 + $0xeb0] sm:$0xff]
  %v510 = vld [vmem:[%s1 + $0xeb8] sm:$0xff]
  %v511 = vld [vmem:[%s1 + $0xec0] sm:$0xff]
  %v512 = vld [vmem:[%s1 + $0xec8] sm:$0xff]
  %v513 = vld [vmem:[%s1 + $0xed0] sm:$0xff]
  %v514 = vld [vmem:[%s1 + $0xed8] sm:$0xff]
  %v515 = vld [vmem:[%s1 + $0xee0] sm:$0xff]
  %v516 = vld [vmem:[%s1 + $0xee8] sm:$0xff]
  %v517 = vld [vmem:[%s1 + $0xef0] sm:$0xff]
  %v518 = vld [vmem:[%s1 + $0xef8] sm:$0xff]
  %v519 = vld [vmem:[%s1 + $0xf00] sm:$0xff]
  %v520 = vld [vmem:[%s1 + $0xf08] sm:$0xff]
  %v521 = vld [vmem:[%s1 + $0xf10] sm:$0xff]
  %v522 = vld [vmem:[%s1 + $0xf18] sm:$0xff]
  %v523 = vld [vmem:[%s1 + $0xf20] sm:$0xff]
  %v524 = vld [vmem:[%s1 + $0xf28] sm:$0xff]
  %v525 = vld [vmem:[%s1 + $0xf30] sm:$0xff]
  %v526 = vld [vmem:[%s1 + $0xf38] sm:$0xff]
  %v527 = vld [vmem:[%s1 + $0xf40] sm:$0xff]
  %v528 = vld [vmem:[%s1 + $0xf48] sm:$0xff]
  %v529 = vld [vmem:[%s1 + $0xf50] sm:$0xff]
  %v530 = vld [vmem:[%s1 + $0xf58] sm:$0xff]
  %v531 = vld [vmem:[%s1 + $0xf60] sm:$0xff]
  %v532 = vld [vmem:[%s1 + $0xf68] sm:$0xff]
  %v533 = vld [vmem:[%s1 + $0xf70] sm:$0xff]
  %v534 = vld [vmem:[%s1 + $0xf78] sm:$0xff]
  %v535 = vld [vmem:[%s1 + $0xf80] sm:$0xff]
  %v536 = vld [vmem:[%s1 + $0xf88] sm:$0xff]
  %v537 = vld [vmem:[%s1 + $0xf90] sm:$0xff]
  %v538 = vld [vmem:[%s1 + $0xf98] sm:$0xff]
  %v539 = vld [vmem:[%s1 + $0xfa0] sm:$0xff]
  %v540 = vld [vmem:[%s1 + $0xfa8] sm:$0xff]
  %v541 = vld [vmem:[%s1 + $0xfb0] sm:$0xff]
  %v542 = vld [vmem:[%s1 + $0xfb8] sm:$0xff]
  %v543 = vld [vmem:[%s1 + $0xfc0] sm:$0xff]
  %v544 = vld [vmem:[%s1 + $0xfc8] sm:$0xff]
  %v545 = vld [vmem:[%s1 + $0xfd0] sm:$0xff]
  %v546 = vld [vmem:[%s1 + $0xfd8] sm:$0xff]
  %v547 = vld [vmem:[%s1 + $0xfe0] sm:$0xff]
  %v548 = vld [vmem:[%s1 + $0xfe8] sm:$0xff]
  %v549 = vld [vmem:[%s1 + $0xff0] sm:$0xff]
  %v550 = vld [vmem:[%s1 + $0xff8] sm:$0xff]
  %v551 = vld [vmem:[%s2] sm:$0xf]
  %v553 = vlaneseq
  %v554 = vshrl.u32 %v553, 7
  %v555 = vsub.s32 0, %v554
  %v556 = vrot.slane %v551, %v555
  %v557 = vlaneseq
  %v558 = vshrl.u32 %v557, 7
  %v559 = vsub.s32 1, %v558
  %v560 = vrot.slane %v551, %v559
  %v561 = vlaneseq
  %v562 = vshrl.u32 %v561, 7
  %v563 = vsub.s32 2, %v562
  %v564 = vrot.slane %v551, %v563
  %v565 = vlaneseq
  %v566 = vshrl.u32 %v565, 7
  %v567 = vsub.s32 3, %v566
  %v568 = vrot.slane %v551, %v567
  %v589 = vunpack.c.l.b16 %v23
  %v590 = vunpack.c.h.b16 %v23
  %v591 = vunpack.c.l.b16 %v24
  %v592 = vunpack.c.h.b16 %v24
  %v593 = vunpack.c.l.b16 %v25
  %v594 = vunpack.c.h.b16 %v25
  %v595 = vunpack.c.l.b16 %v26
  %v596 = vunpack.c.h.b16 %v26
  %v597 = vunpack.c.l.b16 %v27
  %v598 = vunpack.c.h.b16 %v27
  %v599 = vunpack.c.l.b16 %v28
  %v600 = vunpack.c.h.b16 %v28
  %v601 = vunpack.c.l.b16 %v29
  %v602 = vunpack.c.h.b16 %v29
  %v603 = vunpack.c.l.b16 %v30
  %v604 = vunpack.c.h.b16 %v30
  %v605 = vunpack.c.l.b16 %v31
  %v606 = vunpack.c.h.b16 %v31
  %v607 = vunpack.c.l.b16 %v32
  %v608 = vunpack.c.h.b16 %v32
  %v609 = vunpack.c.l.b16 %v33
  %v610 = vunpack.c.h.b16 %v33
  %v611 = vunpack.c.l.b16 %v34
  %v612 = vunpack.c.h.b16 %v34
  %v613 = vunpack.c.l.b16 %v35
  %v614 = vunpack.c.h.b16 %v35
  %v615 = vunpack.c.l.b16 %v36
  %v616 = vunpack.c.h.b16 %v36
  %v617 = vunpack.c.l.b16 %v37
  %v618 = vunpack.c.h.b16 %v37
  %v619 = vunpack.c.l.b16 %v38
  %v620 = vunpack.c.h.b16 %v38
  %v621 = vpack.c.b16 %v605, %v589
  %v622 = vpack.c.b16 %v606, %v590
  %v623 = vpack.c.b16 %v607, %v591
  %v624 = vpack.c.b16 %v608, %v592
  %v625 = vpack.c.b16 %v609, %v593
  %v626 = vpack.c.b16 %v610, %v594
  %v627 = vpack.c.b16 %v611, %v595
  %v628 = vpack.c.b16 %v612, %v596
  %v629 = vpack.c.b16 %v613, %v597
  %v630 = vpack.c.b16 %v614, %v598
  %v631 = vpack.c.b16 %v615, %v599
  %v632 = vpack.c.b16 %v616, %v600
  %v633 = vpack.c.b16 %v617, %v601
  %v634 = vpack.c.b16 %v618, %v602
  %v635 = vpack.c.b16 %v619, %v603
  %v636 = vpack.c.b16 %v620, %v604
  %v1165 = vunpack.c.l.b16 %v39
  %v1166 = vunpack.c.h.b16 %v39
  %v1167 = vunpack.c.l.b16 %v40
  %v1168 = vunpack.c.h.b16 %v40
  %v1169 = vunpack.c.l.b16 %v41
  %v1170 = vunpack.c.h.b16 %v41
  %v1171 = vunpack.c.l.b16 %v42
  %v1172 = vunpack.c.h.b16 %v42
  %v1173 = vunpack.c.l.b16 %v43
  %v1174 = vunpack.c.h.b16 %v43
  %v1175 = vunpack.c.l.b16 %v44
  %v1176 = vunpack.c.h.b16 %v44
  %v1177 = vunpack.c.l.b16 %v45
  %v1178 = vunpack.c.h.b16 %v45
  %v1179 = vunpack.c.l.b16 %v46
  %v1180 = vunpack.c.h.b16 %v46
  %v1181 = vunpack.c.l.b16 %v47
  %v1182 = vunpack.c.h.b16 %v47
  %v1183 = vunpack.c.l.b16 %v48
  %v1184 = vunpack.c.h.b16 %v48
  %v1185 = vunpack.c.l.b16 %v49
  %v1186 = vunpack.c.h.b16 %v49
  %v1187 = vunpack.c.l.b16 %v50
  %v1188 = vunpack.c.h.b16 %v50
  %v1189 = vunpack.c.l.b16 %v51
  %v1190 = vunpack.c.h.b16 %v51
  %v1191 = vunpack.c.l.b16 %v52
  %v1192 = vunpack.c.h.b16 %v52
  %v1193 = vunpack.c.l.b16 %v53
  %v1194 = vunpack.c.h.b16 %v53
  %v1195 = vunpack.c.l.b16 %v54
  %v1196 = vunpack.c.h.b16 %v54
  %v1197 = vunpack.c.l.b16 %v55
  %v1198 = vunpack.c.h.b16 %v55
  %v1199 = vunpack.c.l.b16 %v56
  %v1200 = vunpack.c.h.b16 %v56
  %v1201 = vunpack.c.l.b16 %v57
  %v1202 = vunpack.c.h.b16 %v57
  %v1203 = vunpack.c.l.b16 %v58
  %v1204 = vunpack.c.h.b16 %v58
  %v1205 = vunpack.c.l.b16 %v59
  %v1206 = vunpack.c.h.b16 %v59
  %v1207 = vunpack.c.l.b16 %v60
  %v1208 = vunpack.c.h.b16 %v60
  %v1209 = vunpack.c.l.b16 %v61
  %v1210 = vunpack.c.h.b16 %v61
  %v1211 = vunpack.c.l.b16 %v62
  %v1212 = vunpack.c.h.b16 %v62
  %v1213 = vunpack.c.l.b16 %v63
  %v1214 = vunpack.c.h.b16 %v63
  %v1215 = vunpack.c.l.b16 %v64
  %v1216 = vunpack.c.h.b16 %v64
  %v1217 = vunpack.c.l.b16 %v65
  %v1218 = vunpack.c.h.b16 %v65
  %v1219 = vunpack.c.l.b16 %v66
  %v1220 = vunpack.c.h.b16 %v66
  %v1221 = vunpack.c.l.b16 %v67
  %v1222 = vunpack.c.h.b16 %v67
  %v1223 = vunpack.c.l.b16 %v68
  %v1224 = vunpack.c.h.b16 %v68
  %v1225 = vunpack.c.l.b16 %v69
  %v1226 = vunpack.c.h.b16 %v69
  %v1227 = vunpack.c.l.b16 %v70
  %v1228 = vunpack.c.h.b16 %v70
  %v1229 = vunpack.c.l.b16 %v71
  %v1230 = vunpack.c.h.b16 %v71
  %v1231 = vunpack.c.l.b16 %v72
  %v1232 = vunpack.c.h.b16 %v72
  %v1233 = vunpack.c.l.b16 %v73
  %v1234 = vunpack.c.h.b16 %v73
  %v1235 = vunpack.c.l.b16 %v74
  %v1236 = vunpack.c.h.b16 %v74
  %v1237 = vunpack.c.l.b16 %v75
  %v1238 = vunpack.c.h.b16 %v75
  %v1239 = vunpack.c.l.b16 %v76
  %v1240 = vunpack.c.h.b16 %v76
  %v1241 = vunpack.c.l.b16 %v77
  %v1242 = vunpack.c.h.b16 %v77
  %v1243 = vunpack.c.l.b16 %v78
  %v1244 = vunpack.c.h.b16 %v78
  %v1245 = vunpack.c.l.b16 %v79
  %v1246 = vunpack.c.h.b16 %v79
  %v1247 = vunpack.c.l.b16 %v80
  %v1248 = vunpack.c.h.b16 %v80
  %v1249 = vunpack.c.l.b16 %v81
  %v1250 = vunpack.c.h.b16 %v81
  %v1251 = vunpack.c.l.b16 %v82
  %v1252 = vunpack.c.h.b16 %v82
  %v1253 = vunpack.c.l.b16 %v83
  %v1254 = vunpack.c.h.b16 %v83
  %v1255 = vunpack.c.l.b16 %v84
  %v1256 = vunpack.c.h.b16 %v84
  %v1257 = vunpack.c.l.b16 %v85
  %v1258 = vunpack.c.h.b16 %v85
  %v1259 = vunpack.c.l.b16 %v86
  %v1260 = vunpack.c.h.b16 %v86
  %v1261 = vunpack.c.l.b16 %v87
  %v1262 = vunpack.c.h.b16 %v87
  %v1263 = vunpack.c.l.b16 %v88
  %v1264 = vunpack.c.h.b16 %v88
  %v1265 = vunpack.c.l.b16 %v89
  %v1266 = vunpack.c.h.b16 %v89
  %v1267 = vunpack.c.l.b16 %v90
  %v1268 = vunpack.c.h.b16 %v90
  %v1269 = vunpack.c.l.b16 %v91
  %v1270 = vunpack.c.h.b16 %v91
  %v1271 = vunpack.c.l.b16 %v92
  %v1272 = vunpack.c.h.b16 %v92
  %v1273 = vunpack.c.l.b16 %v93
  %v1274 = vunpack.c.h.b16 %v93
  %v1275 = vunpack.c.l.b16 %v94
  %v1276 = vunpack.c.h.b16 %v94
  %v1277 = vunpack.c.l.b16 %v95
  %v1278 = vunpack.c.h.b16 %v95
  %v1279 = vunpack.c.l.b16 %v96
  %v1280 = vunpack.c.h.b16 %v96
  %v1281 = vunpack.c.l.b16 %v97
  %v1282 = vunpack.c.h.b16 %v97
  %v1283 = vunpack.c.l.b16 %v98
  %v1284 = vunpack.c.h.b16 %v98
  %v1285 = vunpack.c.l.b16 %v99
  %v1286 = vunpack.c.h.b16 %v99
  %v1287 = vunpack.c.l.b16 %v100
  %v1288 = vunpack.c.h.b16 %v100
  %v1289 = vunpack.c.l.b16 %v101
  %v1290 = vunpack.c.h.b16 %v101
  %v1291 = vunpack.c.l.b16 %v102
  %v1292 = vunpack.c.h.b16 %v102
  %v1293 = vunpack.c.l.b16 %v103
  %v1294 = vunpack.c.h.b16 %v103
  %v1295 = vunpack.c.l.b16 %v104
  %v1296 = vunpack.c.h.b16 %v104
  %v1297 = vunpack.c.l.b16 %v105
  %v1298 = vunpack.c.h.b16 %v105
  %v1299 = vunpack.c.l.b16 %v106
  %v1300 = vunpack.c.h.b16 %v106
  %v1301 = vunpack.c.l.b16 %v107
  %v1302 = vunpack.c.h.b16 %v107
  %v1303 = vunpack.c.l.b16 %v108
  %v1304 = vunpack.c.h.b16 %v108
  %v1305 = vunpack.c.l.b16 %v109
  %v1306 = vunpack.c.h.b16 %v109
  %v1307 = vunpack.c.l.b16 %v110
  %v1308 = vunpack.c.h.b16 %v110
  %v1309 = vunpack.c.l.b16 %v111
  %v1310 = vunpack.c.h.b16 %v111
  %v1311 = vunpack.c.l.b16 %v112
  %v1312 = vunpack.c.h.b16 %v112
  %v1313 = vunpack.c.l.b16 %v113
  %v1314 = vunpack.c.h.b16 %v113
  %v1315 = vunpack.c.l.b16 %v114
  %v1316 = vunpack.c.h.b16 %v114
  %v1317 = vunpack.c.l.b16 %v115
  %v1318 = vunpack.c.h.b16 %v115
  %v1319 = vunpack.c.l.b16 %v116
  %v1320 = vunpack.c.h.b16 %v116
  %v1321 = vunpack.c.l.b16 %v117
  %v1322 = vunpack.c.h.b16 %v117
  %v1323 = vunpack.c.l.b16 %v118
  %v1324 = vunpack.c.h.b16 %v118
  %v1325 = vunpack.c.l.b16 %v119
  %v1326 = vunpack.c.h.b16 %v119
  %v1327 = vunpack.c.l.b16 %v120
  %v1328 = vunpack.c.h.b16 %v120
  %v1329 = vunpack.c.l.b16 %v121
  %v1330 = vunpack.c.h.b16 %v121
  %v1331 = vunpack.c.l.b16 %v122
  %v1332 = vunpack.c.h.b16 %v122
  %v1333 = vunpack.c.l.b16 %v123
  %v1334 = vunpack.c.h.b16 %v123
  %v1335 = vunpack.c.l.b16 %v124
  %v1336 = vunpack.c.h.b16 %v124
  %v1337 = vunpack.c.l.b16 %v125
  %v1338 = vunpack.c.h.b16 %v125
  %v1339 = vunpack.c.l.b16 %v126
  %v1340 = vunpack.c.h.b16 %v126
  %v1341 = vunpack.c.l.b16 %v127
  %v1342 = vunpack.c.h.b16 %v127
  %v1343 = vunpack.c.l.b16 %v128
  %v1344 = vunpack.c.h.b16 %v128
  %v1345 = vunpack.c.l.b16 %v129
  %v1346 = vunpack.c.h.b16 %v129
  %v1347 = vunpack.c.l.b16 %v130
  %v1348 = vunpack.c.h.b16 %v130
  %v1349 = vunpack.c.l.b16 %v131
  %v1350 = vunpack.c.h.b16 %v131
  %v1351 = vunpack.c.l.b16 %v132
  %v1352 = vunpack.c.h.b16 %v132
  %v1353 = vunpack.c.l.b16 %v133
  %v1354 = vunpack.c.h.b16 %v133
  %v1355 = vunpack.c.l.b16 %v134
  %v1356 = vunpack.c.h.b16 %v134
  %v1357 = vunpack.c.l.b16 %v135
  %v1358 = vunpack.c.h.b16 %v135
  %v1359 = vunpack.c.l.b16 %v136
  %v1360 = vunpack.c.h.b16 %v136
  %v1361 = vunpack.c.l.b16 %v137
  %v1362 = vunpack.c.h.b16 %v137
  %v1363 = vunpack.c.l.b16 %v138
  %v1364 = vunpack.c.h.b16 %v138
  %v1365 = vunpack.c.l.b16 %v139
  %v1366 = vunpack.c.h.b16 %v139
  %v1367 = vunpack.c.l.b16 %v140
  %v1368 = vunpack.c.h.b16 %v140
  %v1369 = vunpack.c.l.b16 %v141
  %v1370 = vunpack.c.h.b16 %v141
  %v1371 = vunpack.c.l.b16 %v142
  %v1372 = vunpack.c.h.b16 %v142
  %v1373 = vunpack.c.l.b16 %v143
  %v1374 = vunpack.c.h.b16 %v143
  %v1375 = vunpack.c.l.b16 %v144
  %v1376 = vunpack.c.h.b16 %v144
  %v1377 = vunpack.c.l.b16 %v145
  %v1378 = vunpack.c.h.b16 %v145
  %v1379 = vunpack.c.l.b16 %v146
  %v1380 = vunpack.c.h.b16 %v146
  %v1381 = vunpack.c.l.b16 %v147
  %v1382 = vunpack.c.h.b16 %v147
  %v1383 = vunpack.c.l.b16 %v148
  %v1384 = vunpack.c.h.b16 %v148
  %v1385 = vunpack.c.l.b16 %v149
  %v1386 = vunpack.c.h.b16 %v149
  %v1387 = vunpack.c.l.b16 %v150
  %v1388 = vunpack.c.h.b16 %v150
  %v1389 = vunpack.c.l.b16 %v151
  %v1390 = vunpack.c.h.b16 %v151
  %v1391 = vunpack.c.l.b16 %v152
  %v1392 = vunpack.c.h.b16 %v152
  %v1393 = vunpack.c.l.b16 %v153
  %v1394 = vunpack.c.h.b16 %v153
  %v1395 = vunpack.c.l.b16 %v154
  %v1396 = vunpack.c.h.b16 %v154
  %v1397 = vunpack.c.l.b16 %v155
  %v1398 = vunpack.c.h.b16 %v155
  %v1399 = vunpack.c.l.b16 %v156
  %v1400 = vunpack.c.h.b16 %v156
  %v1401 = vunpack.c.l.b16 %v157
  %v1402 = vunpack.c.h.b16 %v157
  %v1403 = vunpack.c.l.b16 %v158
  %v1404 = vunpack.c.h.b16 %v158
  %v1405 = vunpack.c.l.b16 %v159
  %v1406 = vunpack.c.h.b16 %v159
  %v1407 = vunpack.c.l.b16 %v160
  %v1408 = vunpack.c.h.b16 %v160
  %v1409 = vunpack.c.l.b16 %v161
  %v1410 = vunpack.c.h.b16 %v161
  %v1411 = vunpack.c.l.b16 %v162
  %v1412 = vunpack.c.h.b16 %v162
  %v1413 = vunpack.c.l.b16 %v163
  %v1414 = vunpack.c.h.b16 %v163
  %v1415 = vunpack.c.l.b16 %v164
  %v1416 = vunpack.c.h.b16 %v164
  %v1417 = vunpack.c.l.b16 %v165
  %v1418 = vunpack.c.h.b16 %v165
  %v1419 = vunpack.c.l.b16 %v166
  %v1420 = vunpack.c.h.b16 %v166
  %v1421 = vunpack.c.l.b16 %v167
  %v1422 = vunpack.c.h.b16 %v167
  %v1423 = vunpack.c.l.b16 %v168
  %v1424 = vunpack.c.h.b16 %v168
  %v1425 = vunpack.c.l.b16 %v169
  %v1426 = vunpack.c.h.b16 %v169
  %v1427 = vunpack.c.l.b16 %v170
  %v1428 = vunpack.c.h.b16 %v170
  %v1429 = vunpack.c.l.b16 %v171
  %v1430 = vunpack.c.h.b16 %v171
  %v1431 = vunpack.c.l.b16 %v172
  %v1432 = vunpack.c.h.b16 %v172
  %v1433 = vunpack.c.l.b16 %v173
  %v1434 = vunpack.c.h.b16 %v173
  %v1435 = vunpack.c.l.b16 %v174
  %v1436 = vunpack.c.h.b16 %v174
  %v1437 = vunpack.c.l.b16 %v175
  %v1438 = vunpack.c.h.b16 %v175
  %v1439 = vunpack.c.l.b16 %v176
  %v1440 = vunpack.c.h.b16 %v176
  %v1441 = vunpack.c.l.b16 %v177
  %v1442 = vunpack.c.h.b16 %v177
  %v1443 = vunpack.c.l.b16 %v178
  %v1444 = vunpack.c.h.b16 %v178
  %v1445 = vunpack.c.l.b16 %v179
  %v1446 = vunpack.c.h.b16 %v179
  %v1447 = vunpack.c.l.b16 %v180
  %v1448 = vunpack.c.h.b16 %v180
  %v1449 = vunpack.c.l.b16 %v181
  %v1450 = vunpack.c.h.b16 %v181
  %v1451 = vunpack.c.l.b16 %v182
  %v1452 = vunpack.c.h.b16 %v182
  %v1453 = vunpack.c.l.b16 %v183
  %v1454 = vunpack.c.h.b16 %v183
  %v1455 = vunpack.c.l.b16 %v184
  %v1456 = vunpack.c.h.b16 %v184
  %v1457 = vunpack.c.l.b16 %v185
  %v1458 = vunpack.c.h.b16 %v185
  %v1459 = vunpack.c.l.b16 %v186
  %v1460 = vunpack.c.h.b16 %v186
  %v1461 = vunpack.c.l.b16 %v187
  %v1462 = vunpack.c.h.b16 %v187
  %v1463 = vunpack.c.l.b16 %v188
  %v1464 = vunpack.c.h.b16 %v188
  %v1465 = vunpack.c.l.b16 %v189
  %v1466 = vunpack.c.h.b16 %v189
  %v1467 = vunpack.c.l.b16 %v190
  %v1468 = vunpack.c.h.b16 %v190
  %v1469 = vunpack.c.l.b16 %v191
  %v1470 = vunpack.c.h.b16 %v191
  %v1471 = vunpack.c.l.b16 %v192
  %v1472 = vunpack.c.h.b16 %v192
  %v1473 = vunpack.c.l.b16 %v193
  %v1474 = vunpack.c.h.b16 %v193
  %v1475 = vunpack.c.l.b16 %v194
  %v1476 = vunpack.c.h.b16 %v194
  %v1477 = vunpack.c.l.b16 %v195
  %v1478 = vunpack.c.h.b16 %v195
  %v1479 = vunpack.c.l.b16 %v196
  %v1480 = vunpack.c.h.b16 %v196
  %v1481 = vunpack.c.l.b16 %v197
  %v1482 = vunpack.c.h.b16 %v197
  %v1483 = vunpack.c.l.b16 %v198
  %v1484 = vunpack.c.h.b16 %v198
  %v1485 = vunpack.c.l.b16 %v199
  %v1486 = vunpack.c.h.b16 %v199
  %v1487 = vunpack.c.l.b16 %v200
  %v1488 = vunpack.c.h.b16 %v200
  %v1489 = vunpack.c.l.b16 %v201
  %v1490 = vunpack.c.h.b16 %v201
  %v1491 = vunpack.c.l.b16 %v202
  %v1492 = vunpack.c.h.b16 %v202
  %v1493 = vunpack.c.l.b16 %v203
  %v1494 = vunpack.c.h.b16 %v203
  %v1495 = vunpack.c.l.b16 %v204
  %v1496 = vunpack.c.h.b16 %v204
  %v1497 = vunpack.c.l.b16 %v205
  %v1498 = vunpack.c.h.b16 %v205
  %v1499 = vunpack.c.l.b16 %v206
  %v1500 = vunpack.c.h.b16 %v206
  %v1501 = vunpack.c.l.b16 %v207
  %v1502 = vunpack.c.h.b16 %v207
  %v1503 = vunpack.c.l.b16 %v208
  %v1504 = vunpack.c.h.b16 %v208
  %v1505 = vunpack.c.l.b16 %v209
  %v1506 = vunpack.c.h.b16 %v209
  %v1507 = vunpack.c.l.b16 %v210
  %v1508 = vunpack.c.h.b16 %v210
  %v1509 = vunpack.c.l.b16 %v211
  %v1510 = vunpack.c.h.b16 %v211
  %v1511 = vunpack.c.l.b16 %v212
  %v1512 = vunpack.c.h.b16 %v212
  %v1513 = vunpack.c.l.b16 %v213
  %v1514 = vunpack.c.h.b16 %v213
  %v1515 = vunpack.c.l.b16 %v214
  %v1516 = vunpack.c.h.b16 %v214
  %v1517 = vunpack.c.l.b16 %v215
  %v1518 = vunpack.c.h.b16 %v215
  %v1519 = vunpack.c.l.b16 %v216
  %v1520 = vunpack.c.h.b16 %v216
  %v1521 = vunpack.c.l.b16 %v217
  %v1522 = vunpack.c.h.b16 %v217
  %v1523 = vunpack.c.l.b16 %v218
  %v1524 = vunpack.c.h.b16 %v218
  %v1525 = vunpack.c.l.b16 %v219
  %v1526 = vunpack.c.h.b16 %v219
  %v1527 = vunpack.c.l.b16 %v220
  %v1528 = vunpack.c.h.b16 %v220
  %v1529 = vunpack.c.l.b16 %v221
  %v1530 = vunpack.c.h.b16 %v221
  %v1531 = vunpack.c.l.b16 %v222
  %v1532 = vunpack.c.h.b16 %v222
  %v1533 = vunpack.c.l.b16 %v223
  %v1534 = vunpack.c.h.b16 %v223
  %v1535 = vunpack.c.l.b16 %v224
  %v1536 = vunpack.c.h.b16 %v224
  %v1537 = vunpack.c.l.b16 %v225
  %v1538 = vunpack.c.h.b16 %v225
  %v1539 = vunpack.c.l.b16 %v226
  %v1540 = vunpack.c.h.b16 %v226
  %v1541 = vunpack.c.l.b16 %v227
  %v1542 = vunpack.c.h.b16 %v227
  %v1543 = vunpack.c.l.b16 %v228
  %v1544 = vunpack.c.h.b16 %v228
  %v1545 = vunpack.c.l.b16 %v229
  %v1546 = vunpack.c.h.b16 %v229
  %v1547 = vunpack.c.l.b16 %v230
  %v1548 = vunpack.c.h.b16 %v230
  %v1549 = vunpack.c.l.b16 %v231
  %v1550 = vunpack.c.h.b16 %v231
  %v1551 = vunpack.c.l.b16 %v232
  %v1552 = vunpack.c.h.b16 %v232
  %v1553 = vunpack.c.l.b16 %v233
  %v1554 = vunpack.c.h.b16 %v233
  %v1555 = vunpack.c.l.b16 %v234
  %v1556 = vunpack.c.h.b16 %v234
  %v1557 = vunpack.c.l.b16 %v235
  %v1558 = vunpack.c.h.b16 %v235
  %v1559 = vunpack.c.l.b16 %v236
  %v1560 = vunpack.c.h.b16 %v236
  %v1561 = vunpack.c.l.b16 %v237
  %v1562 = vunpack.c.h.b16 %v237
  %v1563 = vunpack.c.l.b16 %v238
  %v1564 = vunpack.c.h.b16 %v238
  %v1565 = vunpack.c.l.b16 %v239
  %v1566 = vunpack.c.h.b16 %v239
  %v1567 = vunpack.c.l.b16 %v240
  %v1568 = vunpack.c.h.b16 %v240
  %v1569 = vunpack.c.l.b16 %v241
  %v1570 = vunpack.c.h.b16 %v241
  %v1571 = vunpack.c.l.b16 %v242
  %v1572 = vunpack.c.h.b16 %v242
  %v1573 = vunpack.c.l.b16 %v243
  %v1574 = vunpack.c.h.b16 %v243
  %v1575 = vunpack.c.l.b16 %v244
  %v1576 = vunpack.c.h.b16 %v244
  %v1577 = vunpack.c.l.b16 %v245
  %v1578 = vunpack.c.h.b16 %v245
  %v1579 = vunpack.c.l.b16 %v246
  %v1580 = vunpack.c.h.b16 %v246
  %v1581 = vunpack.c.l.b16 %v247
  %v1582 = vunpack.c.h.b16 %v247
  %v1583 = vunpack.c.l.b16 %v248
  %v1584 = vunpack.c.h.b16 %v248
  %v1585 = vunpack.c.l.b16 %v249
  %v1586 = vunpack.c.h.b16 %v249
  %v1587 = vunpack.c.l.b16 %v250
  %v1588 = vunpack.c.h.b16 %v250
  %v1589 = vunpack.c.l.b16 %v251
  %v1590 = vunpack.c.h.b16 %v251
  %v1591 = vunpack.c.l.b16 %v252
  %v1592 = vunpack.c.h.b16 %v252
  %v1593 = vunpack.c.l.b16 %v253
  %v1594 = vunpack.c.h.b16 %v253
  %v1595 = vunpack.c.l.b16 %v254
  %v1596 = vunpack.c.h.b16 %v254
  %v1597 = vunpack.c.l.b16 %v255
  %v1598 = vunpack.c.h.b16 %v255
  %v1599 = vunpack.c.l.b16 %v256
  %v1600 = vunpack.c.h.b16 %v256
  %v1601 = vunpack.c.l.b16 %v257
  %v1602 = vunpack.c.h.b16 %v257
  %v1603 = vunpack.c.l.b16 %v258
  %v1604 = vunpack.c.h.b16 %v258
  %v1605 = vunpack.c.l.b16 %v259
  %v1606 = vunpack.c.h.b16 %v259
  %v1607 = vunpack.c.l.b16 %v260
  %v1608 = vunpack.c.h.b16 %v260
  %v1609 = vunpack.c.l.b16 %v261
  %v1610 = vunpack.c.h.b16 %v261
  %v1611 = vunpack.c.l.b16 %v262
  %v1612 = vunpack.c.h.b16 %v262
  %v1613 = vunpack.c.l.b16 %v263
  %v1614 = vunpack.c.h.b16 %v263
  %v1615 = vunpack.c.l.b16 %v264
  %v1616 = vunpack.c.h.b16 %v264
  %v1617 = vunpack.c.l.b16 %v265
  %v1618 = vunpack.c.h.b16 %v265
  %v1619 = vunpack.c.l.b16 %v266
  %v1620 = vunpack.c.h.b16 %v266
  %v1621 = vunpack.c.l.b16 %v267
  %v1622 = vunpack.c.h.b16 %v267
  %v1623 = vunpack.c.l.b16 %v268
  %v1624 = vunpack.c.h.b16 %v268
  %v1625 = vunpack.c.l.b16 %v269
  %v1626 = vunpack.c.h.b16 %v269
  %v1627 = vunpack.c.l.b16 %v270
  %v1628 = vunpack.c.h.b16 %v270
  %v1629 = vunpack.c.l.b16 %v271
  %v1630 = vunpack.c.h.b16 %v271
  %v1631 = vunpack.c.l.b16 %v272
  %v1632 = vunpack.c.h.b16 %v272
  %v1633 = vunpack.c.l.b16 %v273
  %v1634 = vunpack.c.h.b16 %v273
  %v1635 = vunpack.c.l.b16 %v274
  %v1636 = vunpack.c.h.b16 %v274
  %v1637 = vunpack.c.l.b16 %v275
  %v1638 = vunpack.c.h.b16 %v275
  %v1639 = vunpack.c.l.b16 %v276
  %v1640 = vunpack.c.h.b16 %v276
  %v1641 = vunpack.c.l.b16 %v277
  %v1642 = vunpack.c.h.b16 %v277
  %v1643 = vunpack.c.l.b16 %v278
  %v1644 = vunpack.c.h.b16 %v278
  %v1645 = vunpack.c.l.b16 %v279
  %v1646 = vunpack.c.h.b16 %v279
  %v1647 = vunpack.c.l.b16 %v280
  %v1648 = vunpack.c.h.b16 %v280
  %v1649 = vunpack.c.l.b16 %v281
  %v1650 = vunpack.c.h.b16 %v281
  %v1651 = vunpack.c.l.b16 %v282
  %v1652 = vunpack.c.h.b16 %v282
  %v1653 = vunpack.c.l.b16 %v283
  %v1654 = vunpack.c.h.b16 %v283
  %v1655 = vunpack.c.l.b16 %v284
  %v1656 = vunpack.c.h.b16 %v284
  %v1657 = vunpack.c.l.b16 %v285
  %v1658 = vunpack.c.h.b16 %v285
  %v1659 = vunpack.c.l.b16 %v286
  %v1660 = vunpack.c.h.b16 %v286
  %v1661 = vunpack.c.l.b16 %v287
  %v1662 = vunpack.c.h.b16 %v287
  %v1663 = vunpack.c.l.b16 %v288
  %v1664 = vunpack.c.h.b16 %v288
  %v1665 = vunpack.c.l.b16 %v289
  %v1666 = vunpack.c.h.b16 %v289
  %v1667 = vunpack.c.l.b16 %v290
  %v1668 = vunpack.c.h.b16 %v290
  %v1669 = vunpack.c.l.b16 %v291
  %v1670 = vunpack.c.h.b16 %v291
  %v1671 = vunpack.c.l.b16 %v292
  %v1672 = vunpack.c.h.b16 %v292
  %v1673 = vunpack.c.l.b16 %v293
  %v1674 = vunpack.c.h.b16 %v293
  %v1675 = vunpack.c.l.b16 %v294
  %v1676 = vunpack.c.h.b16 %v294
  %v1677 = vunpack.c.l.b16 %v295
  %v1678 = vunpack.c.h.b16 %v295
  %v1679 = vunpack.c.l.b16 %v296
  %v1680 = vunpack.c.h.b16 %v296
  %v1681 = vunpack.c.l.b16 %v297
  %v1682 = vunpack.c.h.b16 %v297
  %v1683 = vunpack.c.l.b16 %v298
  %v1684 = vunpack.c.h.b16 %v298
  %v1685 = vunpack.c.l.b16 %v299
  %v1686 = vunpack.c.h.b16 %v299
  %v1687 = vunpack.c.l.b16 %v300
  %v1688 = vunpack.c.h.b16 %v300
  %v1689 = vunpack.c.l.b16 %v301
  %v1690 = vunpack.c.h.b16 %v301
  %v1691 = vunpack.c.l.b16 %v302
  %v1692 = vunpack.c.h.b16 %v302
  %v1693 = vunpack.c.l.b16 %v303
  %v1694 = vunpack.c.h.b16 %v303
  %v1695 = vunpack.c.l.b16 %v304
  %v1696 = vunpack.c.h.b16 %v304
  %v1697 = vunpack.c.l.b16 %v305
  %v1698 = vunpack.c.h.b16 %v305
  %v1699 = vunpack.c.l.b16 %v306
  %v1700 = vunpack.c.h.b16 %v306
  %v1701 = vunpack.c.l.b16 %v307
  %v1702 = vunpack.c.h.b16 %v307
  %v1703 = vunpack.c.l.b16 %v308
  %v1704 = vunpack.c.h.b16 %v308
  %v1705 = vunpack.c.l.b16 %v309
  %v1706 = vunpack.c.h.b16 %v309
  %v1707 = vunpack.c.l.b16 %v310
  %v1708 = vunpack.c.h.b16 %v310
  %v1709 = vunpack.c.l.b16 %v311
  %v1710 = vunpack.c.h.b16 %v311
  %v1711 = vunpack.c.l.b16 %v312
  %v1712 = vunpack.c.h.b16 %v312
  %v1713 = vunpack.c.l.b16 %v313
  %v1714 = vunpack.c.h.b16 %v313
  %v1715 = vunpack.c.l.b16 %v314
  %v1716 = vunpack.c.h.b16 %v314
  %v1717 = vunpack.c.l.b16 %v315
  %v1718 = vunpack.c.h.b16 %v315
  %v1719 = vunpack.c.l.b16 %v316
  %v1720 = vunpack.c.h.b16 %v316
  %v1721 = vunpack.c.l.b16 %v317
  %v1722 = vunpack.c.h.b16 %v317
  %v1723 = vunpack.c.l.b16 %v318
  %v1724 = vunpack.c.h.b16 %v318
  %v1725 = vunpack.c.l.b16 %v319
  %v1726 = vunpack.c.h.b16 %v319
  %v1727 = vunpack.c.l.b16 %v320
  %v1728 = vunpack.c.h.b16 %v320
  %v1729 = vunpack.c.l.b16 %v321
  %v1730 = vunpack.c.h.b16 %v321
  %v1731 = vunpack.c.l.b16 %v322
  %v1732 = vunpack.c.h.b16 %v322
  %v1733 = vunpack.c.l.b16 %v323
  %v1734 = vunpack.c.h.b16 %v323
  %v1735 = vunpack.c.l.b16 %v324
  %v1736 = vunpack.c.h.b16 %v324
  %v1737 = vunpack.c.l.b16 %v325
  %v1738 = vunpack.c.h.b16 %v325
  %v1739 = vunpack.c.l.b16 %v326
  %v1740 = vunpack.c.h.b16 %v326
  %v1741 = vunpack.c.l.b16 %v327
  %v1742 = vunpack.c.h.b16 %v327
  %v1743 = vunpack.c.l.b16 %v328
  %v1744 = vunpack.c.h.b16 %v328
  %v1745 = vunpack.c.l.b16 %v329
  %v1746 = vunpack.c.h.b16 %v329
  %v1747 = vunpack.c.l.b16 %v330
  %v1748 = vunpack.c.h.b16 %v330
  %v1749 = vunpack.c.l.b16 %v331
  %v1750 = vunpack.c.h.b16 %v331
  %v1751 = vunpack.c.l.b16 %v332
  %v1752 = vunpack.c.h.b16 %v332
  %v1753 = vunpack.c.l.b16 %v333
  %v1754 = vunpack.c.h.b16 %v333
  %v1755 = vunpack.c.l.b16 %v334
  %v1756 = vunpack.c.h.b16 %v334
  %v1757 = vunpack.c.l.b16 %v335
  %v1758 = vunpack.c.h.b16 %v335
  %v1759 = vunpack.c.l.b16 %v336
  %v1760 = vunpack.c.h.b16 %v336
  %v1761 = vunpack.c.l.b16 %v337
  %v1762 = vunpack.c.h.b16 %v337
  %v1763 = vunpack.c.l.b16 %v338
  %v1764 = vunpack.c.h.b16 %v338
  %v1765 = vunpack.c.l.b16 %v339
  %v1766 = vunpack.c.h.b16 %v339
  %v1767 = vunpack.c.l.b16 %v340
  %v1768 = vunpack.c.h.b16 %v340
  %v1769 = vunpack.c.l.b16 %v341
  %v1770 = vunpack.c.h.b16 %v341
  %v1771 = vunpack.c.l.b16 %v342
  %v1772 = vunpack.c.h.b16 %v342
  %v1773 = vunpack.c.l.b16 %v343
  %v1774 = vunpack.c.h.b16 %v343
  %v1775 = vunpack.c.l.b16 %v344
  %v1776 = vunpack.c.h.b16 %v344
  %v1777 = vunpack.c.l.b16 %v345
  %v1778 = vunpack.c.h.b16 %v345
  %v1779 = vunpack.c.l.b16 %v346
  %v1780 = vunpack.c.h.b16 %v346
  %v1781 = vunpack.c.l.b16 %v347
  %v1782 = vunpack.c.h.b16 %v347
  %v1783 = vunpack.c.l.b16 %v348
  %v1784 = vunpack.c.h.b16 %v348
  %v1785 = vunpack.c.l.b16 %v349
  %v1786 = vunpack.c.h.b16 %v349
  %v1787 = vunpack.c.l.b16 %v350
  %v1788 = vunpack.c.h.b16 %v350
  %v1789 = vunpack.c.l.b16 %v351
  %v1790 = vunpack.c.h.b16 %v351
  %v1791 = vunpack.c.l.b16 %v352
  %v1792 = vunpack.c.h.b16 %v352
  %v1793 = vunpack.c.l.b16 %v353
  %v1794 = vunpack.c.h.b16 %v353
  %v1795 = vunpack.c.l.b16 %v354
  %v1796 = vunpack.c.h.b16 %v354
  %v1797 = vunpack.c.l.b16 %v355
  %v1798 = vunpack.c.h.b16 %v355
  %v1799 = vunpack.c.l.b16 %v356
  %v1800 = vunpack.c.h.b16 %v356
  %v1801 = vunpack.c.l.b16 %v357
  %v1802 = vunpack.c.h.b16 %v357
  %v1803 = vunpack.c.l.b16 %v358
  %v1804 = vunpack.c.h.b16 %v358
  %v1805 = vunpack.c.l.b16 %v359
  %v1806 = vunpack.c.h.b16 %v359
  %v1807 = vunpack.c.l.b16 %v360
  %v1808 = vunpack.c.h.b16 %v360
  %v1809 = vunpack.c.l.b16 %v361
  %v1810 = vunpack.c.h.b16 %v361
  %v1811 = vunpack.c.l.b16 %v362
  %v1812 = vunpack.c.h.b16 %v362
  %v1813 = vunpack.c.l.b16 %v363
  %v1814 = vunpack.c.h.b16 %v363
  %v1815 = vunpack.c.l.b16 %v364
  %v1816 = vunpack.c.h.b16 %v364
  %v1817 = vunpack.c.l.b16 %v365
  %v1818 = vunpack.c.h.b16 %v365
  %v1819 = vunpack.c.l.b16 %v366
  %v1820 = vunpack.c.h.b16 %v366
  %v1821 = vunpack.c.l.b16 %v367
  %v1822 = vunpack.c.h.b16 %v367
  %v1823 = vunpack.c.l.b16 %v368
  %v1824 = vunpack.c.h.b16 %v368
  %v1825 = vunpack.c.l.b16 %v369
  %v1826 = vunpack.c.h.b16 %v369
  %v1827 = vunpack.c.l.b16 %v370
  %v1828 = vunpack.c.h.b16 %v370
  %v1829 = vunpack.c.l.b16 %v371
  %v1830 = vunpack.c.h.b16 %v371
  %v1831 = vunpack.c.l.b16 %v372
  %v1832 = vunpack.c.h.b16 %v372
  %v1833 = vunpack.c.l.b16 %v373
  %v1834 = vunpack.c.h.b16 %v373
  %v1835 = vunpack.c.l.b16 %v374
  %v1836 = vunpack.c.h.b16 %v374
  %v1837 = vunpack.c.l.b16 %v375
  %v1838 = vunpack.c.h.b16 %v375
  %v1839 = vunpack.c.l.b16 %v376
  %v1840 = vunpack.c.h.b16 %v376
  %v1841 = vunpack.c.l.b16 %v377
  %v1842 = vunpack.c.h.b16 %v377
  %v1843 = vunpack.c.l.b16 %v378
  %v1844 = vunpack.c.h.b16 %v378
  %v1845 = vunpack.c.l.b16 %v379
  %v1846 = vunpack.c.h.b16 %v379
  %v1847 = vunpack.c.l.b16 %v380
  %v1848 = vunpack.c.h.b16 %v380
  %v1849 = vunpack.c.l.b16 %v381
  %v1850 = vunpack.c.h.b16 %v381
  %v1851 = vunpack.c.l.b16 %v382
  %v1852 = vunpack.c.h.b16 %v382
  %v1853 = vunpack.c.l.b16 %v383
  %v1854 = vunpack.c.h.b16 %v383
  %v1855 = vunpack.c.l.b16 %v384
  %v1856 = vunpack.c.h.b16 %v384
  %v1857 = vunpack.c.l.b16 %v385
  %v1858 = vunpack.c.h.b16 %v385
  %v1859 = vunpack.c.l.b16 %v386
  %v1860 = vunpack.c.h.b16 %v386
  %v1861 = vunpack.c.l.b16 %v387
  %v1862 = vunpack.c.h.b16 %v387
  %v1863 = vunpack.c.l.b16 %v388
  %v1864 = vunpack.c.h.b16 %v388
  %v1865 = vunpack.c.l.b16 %v389
  %v1866 = vunpack.c.h.b16 %v389
  %v1867 = vunpack.c.l.b16 %v390
  %v1868 = vunpack.c.h.b16 %v390
  %v1869 = vunpack.c.l.b16 %v391
  %v1870 = vunpack.c.h.b16 %v391
  %v1871 = vunpack.c.l.b16 %v392
  %v1872 = vunpack.c.h.b16 %v392
  %v1873 = vunpack.c.l.b16 %v393
  %v1874 = vunpack.c.h.b16 %v393
  %v1875 = vunpack.c.l.b16 %v394
  %v1876 = vunpack.c.h.b16 %v394
  %v1877 = vunpack.c.l.b16 %v395
  %v1878 = vunpack.c.h.b16 %v395
  %v1879 = vunpack.c.l.b16 %v396
  %v1880 = vunpack.c.h.b16 %v396
  %v1881 = vunpack.c.l.b16 %v397
  %v1882 = vunpack.c.h.b16 %v397
  %v1883 = vunpack.c.l.b16 %v398
  %v1884 = vunpack.c.h.b16 %v398
  %v1885 = vunpack.c.l.b16 %v399
  %v1886 = vunpack.c.h.b16 %v399
  %v1887 = vunpack.c.l.b16 %v400
  %v1888 = vunpack.c.h.b16 %v400
  %v1889 = vunpack.c.l.b16 %v401
  %v1890 = vunpack.c.h.b16 %v401
  %v1891 = vunpack.c.l.b16 %v402
  %v1892 = vunpack.c.h.b16 %v402
  %v1893 = vunpack.c.l.b16 %v403
  %v1894 = vunpack.c.h.b16 %v403
  %v1895 = vunpack.c.l.b16 %v404
  %v1896 = vunpack.c.h.b16 %v404
  %v1897 = vunpack.c.l.b16 %v405
  %v1898 = vunpack.c.h.b16 %v405
  %v1899 = vunpack.c.l.b16 %v406
  %v1900 = vunpack.c.h.b16 %v406
  %v1901 = vunpack.c.l.b16 %v407
  %v1902 = vunpack.c.h.b16 %v407
  %v1903 = vunpack.c.l.b16 %v408
  %v1904 = vunpack.c.h.b16 %v408
  %v1905 = vunpack.c.l.b16 %v409
  %v1906 = vunpack.c.h.b16 %v409
  %v1907 = vunpack.c.l.b16 %v410
  %v1908 = vunpack.c.h.b16 %v410
  %v1909 = vunpack.c.l.b16 %v411
  %v1910 = vunpack.c.h.b16 %v411
  %v1911 = vunpack.c.l.b16 %v412
  %v1912 = vunpack.c.h.b16 %v412
  %v1913 = vunpack.c.l.b16 %v413
  %v1914 = vunpack.c.h.b16 %v413
  %v1915 = vunpack.c.l.b16 %v414
  %v1916 = vunpack.c.h.b16 %v414
  %v1917 = vunpack.c.l.b16 %v415
  %v1918 = vunpack.c.h.b16 %v415
  %v1919 = vunpack.c.l.b16 %v416
  %v1920 = vunpack.c.h.b16 %v416
  %v1921 = vunpack.c.l.b16 %v417
  %v1922 = vunpack.c.h.b16 %v417
  %v1923 = vunpack.c.l.b16 %v418
  %v1924 = vunpack.c.h.b16 %v418
  %v1925 = vunpack.c.l.b16 %v419
  %v1926 = vunpack.c.h.b16 %v419
  %v1927 = vunpack.c.l.b16 %v420
  %v1928 = vunpack.c.h.b16 %v420
  %v1929 = vunpack.c.l.b16 %v421
  %v1930 = vunpack.c.h.b16 %v421
  %v1931 = vunpack.c.l.b16 %v422
  %v1932 = vunpack.c.h.b16 %v422
  %v1933 = vunpack.c.l.b16 %v423
  %v1934 = vunpack.c.h.b16 %v423
  %v1935 = vunpack.c.l.b16 %v424
  %v1936 = vunpack.c.h.b16 %v424
  %v1937 = vunpack.c.l.b16 %v425
  %v1938 = vunpack.c.h.b16 %v425
  %v1939 = vunpack.c.l.b16 %v426
  %v1940 = vunpack.c.h.b16 %v426
  %v1941 = vunpack.c.l.b16 %v427
  %v1942 = vunpack.c.h.b16 %v427
  %v1943 = vunpack.c.l.b16 %v428
  %v1944 = vunpack.c.h.b16 %v428
  %v1945 = vunpack.c.l.b16 %v429
  %v1946 = vunpack.c.h.b16 %v429
  %v1947 = vunpack.c.l.b16 %v430
  %v1948 = vunpack.c.h.b16 %v430
  %v1949 = vunpack.c.l.b16 %v431
  %v1950 = vunpack.c.h.b16 %v431
  %v1951 = vunpack.c.l.b16 %v432
  %v1952 = vunpack.c.h.b16 %v432
  %v1953 = vunpack.c.l.b16 %v433
  %v1954 = vunpack.c.h.b16 %v433
  %v1955 = vunpack.c.l.b16 %v434
  %v1956 = vunpack.c.h.b16 %v434
  %v1957 = vunpack.c.l.b16 %v435
  %v1958 = vunpack.c.h.b16 %v435
  %v1959 = vunpack.c.l.b16 %v436
  %v1960 = vunpack.c.h.b16 %v436
  %v1961 = vunpack.c.l.b16 %v437
  %v1962 = vunpack.c.h.b16 %v437
  %v1963 = vunpack.c.l.b16 %v438
  %v1964 = vunpack.c.h.b16 %v438
  %v1965 = vunpack.c.l.b16 %v439
  %v1966 = vunpack.c.h.b16 %v439
  %v1967 = vunpack.c.l.b16 %v440
  %v1968 = vunpack.c.h.b16 %v440
  %v1969 = vunpack.c.l.b16 %v441
  %v1970 = vunpack.c.h.b16 %v441
  %v1971 = vunpack.c.l.b16 %v442
  %v1972 = vunpack.c.h.b16 %v442
  %v1973 = vunpack.c.l.b16 %v443
  %v1974 = vunpack.c.h.b16 %v443
  %v1975 = vunpack.c.l.b16 %v444
  %v1976 = vunpack.c.h.b16 %v444
  %v1977 = vunpack.c.l.b16 %v445
  %v1978 = vunpack.c.h.b16 %v445
  %v1979 = vunpack.c.l.b16 %v446
  %v1980 = vunpack.c.h.b16 %v446
  %v1981 = vunpack.c.l.b16 %v447
  %v1982 = vunpack.c.h.b16 %v447
  %v1983 = vunpack.c.l.b16 %v448
  %v1984 = vunpack.c.h.b16 %v448
  %v1985 = vunpack.c.l.b16 %v449
  %v1986 = vunpack.c.h.b16 %v449
  %v1987 = vunpack.c.l.b16 %v450
  %v1988 = vunpack.c.h.b16 %v450
  %v1989 = vunpack.c.l.b16 %v451
  %v1990 = vunpack.c.h.b16 %v451
  %v1991 = vunpack.c.l.b16 %v452
  %v1992 = vunpack.c.h.b16 %v452
  %v1993 = vunpack.c.l.b16 %v453
  %v1994 = vunpack.c.h.b16 %v453
  %v1995 = vunpack.c.l.b16 %v454
  %v1996 = vunpack.c.h.b16 %v454
  %v1997 = vunpack.c.l.b16 %v455
  %v1998 = vunpack.c.h.b16 %v455
  %v1999 = vunpack.c.l.b16 %v456
  %v2000 = vunpack.c.h.b16 %v456
  %v2001 = vunpack.c.l.b16 %v457
  %v2002 = vunpack.c.h.b16 %v457
  %v2003 = vunpack.c.l.b16 %v458
  %v2004 = vunpack.c.h.b16 %v458
  %v2005 = vunpack.c.l.b16 %v459
  %v2006 = vunpack.c.h.b16 %v459
  %v2007 = vunpack.c.l.b16 %v460
  %v2008 = vunpack.c.h.b16 %v460
  %v2009 = vunpack.c.l.b16 %v461
  %v2010 = vunpack.c.h.b16 %v461
  %v2011 = vunpack.c.l.b16 %v462
  %v2012 = vunpack.c.h.b16 %v462
  %v2013 = vunpack.c.l.b16 %v463
  %v2014 = vunpack.c.h.b16 %v463
  %v2015 = vunpack.c.l.b16 %v464
  %v2016 = vunpack.c.h.b16 %v464
  %v2017 = vunpack.c.l.b16 %v465
  %v2018 = vunpack.c.h.b16 %v465
  %v2019 = vunpack.c.l.b16 %v466
  %v2020 = vunpack.c.h.b16 %v466
  %v2021 = vunpack.c.l.b16 %v467
  %v2022 = vunpack.c.h.b16 %v467
  %v2023 = vunpack.c.l.b16 %v468
  %v2024 = vunpack.c.h.b16 %v468
  %v2025 = vunpack.c.l.b16 %v469
  %v2026 = vunpack.c.h.b16 %v469
  %v2027 = vunpack.c.l.b16 %v470
  %v2028 = vunpack.c.h.b16 %v470
  %v2029 = vunpack.c.l.b16 %v471
  %v2030 = vunpack.c.h.b16 %v471
  %v2031 = vunpack.c.l.b16 %v472
  %v2032 = vunpack.c.h.b16 %v472
  %v2033 = vunpack.c.l.b16 %v473
  %v2034 = vunpack.c.h.b16 %v473
  %v2035 = vunpack.c.l.b16 %v474
  %v2036 = vunpack.c.h.b16 %v474
  %v2037 = vunpack.c.l.b16 %v475
  %v2038 = vunpack.c.h.b16 %v475
  %v2039 = vunpack.c.l.b16 %v476
  %v2040 = vunpack.c.h.b16 %v476
  %v2041 = vunpack.c.l.b16 %v477
  %v2042 = vunpack.c.h.b16 %v477
  %v2043 = vunpack.c.l.b16 %v478
  %v2044 = vunpack.c.h.b16 %v478
  %v2045 = vunpack.c.l.b16 %v479
  %v2046 = vunpack.c.h.b16 %v479
  %v2047 = vunpack.c.l.b16 %v480
  %v2048 = vunpack.c.h.b16 %v480
  %v2049 = vunpack.c.l.b16 %v481
  %v2050 = vunpack.c.h.b16 %v481
  %v2051 = vunpack.c.l.b16 %v482
  %v2052 = vunpack.c.h.b16 %v482
  %v2053 = vunpack.c.l.b16 %v483
  %v2054 = vunpack.c.h.b16 %v483
  %v2055 = vunpack.c.l.b16 %v484
  %v2056 = vunpack.c.h.b16 %v484
  %v2057 = vunpack.c.l.b16 %v485
  %v2058 = vunpack.c.h.b16 %v485
  %v2059 = vunpack.c.l.b16 %v486
  %v2060 = vunpack.c.h.b16 %v486
  %v2061 = vunpack.c.l.b16 %v487
  %v2062 = vunpack.c.h.b16 %v487
  %v2063 = vunpack.c.l.b16 %v488
  %v2064 = vunpack.c.h.b16 %v488
  %v2065 = vunpack.c.l.b16 %v489
  %v2066 = vunpack.c.h.b16 %v489
  %v2067 = vunpack.c.l.b16 %v490
  %v2068 = vunpack.c.h.b16 %v490
  %v2069 = vunpack.c.l.b16 %v491
  %v2070 = vunpack.c.h.b16 %v491
  %v2071 = vunpack.c.l.b16 %v492
  %v2072 = vunpack.c.h.b16 %v492
  %v2073 = vunpack.c.l.b16 %v493
  %v2074 = vunpack.c.h.b16 %v493
  %v2075 = vunpack.c.l.b16 %v494
  %v2076 = vunpack.c.h.b16 %v494
  %v2077 = vunpack.c.l.b16 %v495
  %v2078 = vunpack.c.h.b16 %v495
  %v2079 = vunpack.c.l.b16 %v496
  %v2080 = vunpack.c.h.b16 %v496
  %v2081 = vunpack.c.l.b16 %v497
  %v2082 = vunpack.c.h.b16 %v497
  %v2083 = vunpack.c.l.b16 %v498
  %v2084 = vunpack.c.h.b16 %v498
  %v2085 = vunpack.c.l.b16 %v499
  %v2086 = vunpack.c.h.b16 %v499
  %v2087 = vunpack.c.l.b16 %v500
  %v2088 = vunpack.c.h.b16 %v500
  %v2089 = vunpack.c.l.b16 %v501
  %v2090 = vunpack.c.h.b16 %v501
  %v2091 = vunpack.c.l.b16 %v502
  %v2092 = vunpack.c.h.b16 %v502
  %v2093 = vunpack.c.l.b16 %v503
  %v2094 = vunpack.c.h.b16 %v503
  %v2095 = vunpack.c.l.b16 %v504
  %v2096 = vunpack.c.h.b16 %v504
  %v2097 = vunpack.c.l.b16 %v505
  %v2098 = vunpack.c.h.b16 %v505
  %v2099 = vunpack.c.l.b16 %v506
  %v2100 = vunpack.c.h.b16 %v506
  %v2101 = vunpack.c.l.b16 %v507
  %v2102 = vunpack.c.h.b16 %v507
  %v2103 = vunpack.c.l.b16 %v508
  %v2104 = vunpack.c.h.b16 %v508
  %v2105 = vunpack.c.l.b16 %v509
  %v2106 = vunpack.c.h.b16 %v509
  %v2107 = vunpack.c.l.b16 %v510
  %v2108 = vunpack.c.h.b16 %v510
  %v2109 = vunpack.c.l.b16 %v511
  %v2110 = vunpack.c.h.b16 %v511
  %v2111 = vunpack.c.l.b16 %v512
  %v2112 = vunpack.c.h.b16 %v512
  %v2113 = vunpack.c.l.b16 %v513
  %v2114 = vunpack.c.h.b16 %v513
  %v2115 = vunpack.c.l.b16 %v514
  %v2116 = vunpack.c.h.b16 %v514
  %v2117 = vunpack.c.l.b16 %v515
  %v2118 = vunpack.c.h.b16 %v515
  %v2119 = vunpack.c.l.b16 %v516
  %v2120 = vunpack.c.h.b16 %v516
  %v2121 = vunpack.c.l.b16 %v517
  %v2122 = vunpack.c.h.b16 %v517
  %v2123 = vunpack.c.l.b16 %v518
  %v2124 = vunpack.c.h.b16 %v518
  %v2125 = vunpack.c.l.b16 %v519
  %v2126 = vunpack.c.h.b16 %v519
  %v2127 = vunpack.c.l.b16 %v520
  %v2128 = vunpack.c.h.b16 %v520
  %v2129 = vunpack.c.l.b16 %v521
  %v2130 = vunpack.c.h.b16 %v521
  %v2131 = vunpack.c.l.b16 %v522
  %v2132 = vunpack.c.h.b16 %v522
  %v2133 = vunpack.c.l.b16 %v523
  %v2134 = vunpack.c.h.b16 %v523
  %v2135 = vunpack.c.l.b16 %v524
  %v2136 = vunpack.c.h.b16 %v524
  %v2137 = vunpack.c.l.b16 %v525
  %v2138 = vunpack.c.h.b16 %v525
  %v2139 = vunpack.c.l.b16 %v526
  %v2140 = vunpack.c.h.b16 %v526
  %v2141 = vunpack.c.l.b16 %v527
  %v2142 = vunpack.c.h.b16 %v527
  %v2143 = vunpack.c.l.b16 %v528
  %v2144 = vunpack.c.h.b16 %v528
  %v2145 = vunpack.c.l.b16 %v529
  %v2146 = vunpack.c.h.b16 %v529
  %v2147 = vunpack.c.l.b16 %v530
  %v2148 = vunpack.c.h.b16 %v530
  %v2149 = vunpack.c.l.b16 %v531
  %v2150 = vunpack.c.h.b16 %v531
  %v2151 = vunpack.c.l.b16 %v532
  %v2152 = vunpack.c.h.b16 %v532
  %v2153 = vunpack.c.l.b16 %v533
  %v2154 = vunpack.c.h.b16 %v533
  %v2155 = vunpack.c.l.b16 %v534
  %v2156 = vunpack.c.h.b16 %v534
  %v2157 = vunpack.c.l.b16 %v535
  %v2158 = vunpack.c.h.b16 %v535
  %v2159 = vunpack.c.l.b16 %v536
  %v2160 = vunpack.c.h.b16 %v536
  %v2161 = vunpack.c.l.b16 %v537
  %v2162 = vunpack.c.h.b16 %v537
  %v2163 = vunpack.c.l.b16 %v538
  %v2164 = vunpack.c.h.b16 %v538
  %v2165 = vunpack.c.l.b16 %v539
  %v2166 = vunpack.c.h.b16 %v539
  %v2167 = vunpack.c.l.b16 %v540
  %v2168 = vunpack.c.h.b16 %v540
  %v2169 = vunpack.c.l.b16 %v541
  %v2170 = vunpack.c.h.b16 %v541
  %v2171 = vunpack.c.l.b16 %v542
  %v2172 = vunpack.c.h.b16 %v542
  %v2173 = vunpack.c.l.b16 %v543
  %v2174 = vunpack.c.h.b16 %v543
  %v2175 = vunpack.c.l.b16 %v544
  %v2176 = vunpack.c.h.b16 %v544
  %v2177 = vunpack.c.l.b16 %v545
  %v2178 = vunpack.c.h.b16 %v545
  %v2179 = vunpack.c.l.b16 %v546
  %v2180 = vunpack.c.h.b16 %v546
  %v2181 = vunpack.c.l.b16 %v547
  %v2182 = vunpack.c.h.b16 %v547
  %v2183 = vunpack.c.l.b16 %v548
  %v2184 = vunpack.c.h.b16 %v548
  %v2185 = vunpack.c.l.b16 %v549
  %v2186 = vunpack.c.h.b16 %v549
  %v2187 = vunpack.c.l.b16 %v550
  %v2188 = vunpack.c.h.b16 %v550
  %v2189 = vpack.c.b16 %v1169, %v1165
  %v2190 = vpack.c.b16 %v1170, %v1166
  %v2191 = vpack.c.b16 %v1171, %v1167
  %v2192 = vpack.c.b16 %v1172, %v1168
  %v2193 = vpack.c.b16 %v1177, %v1173
  %v2194 = vpack.c.b16 %v1178, %v1174
  %v2195 = vpack.c.b16 %v1179, %v1175
  %v2196 = vpack.c.b16 %v1180, %v1176
  %v2197 = vpack.c.b16 %v1185, %v1181
  %v2198 = vpack.c.b16 %v1186, %v1182
  %v2199 = vpack.c.b16 %v1187, %v1183
  %v2200 = vpack.c.b16 %v1188, %v1184
  %v2201 = vpack.c.b16 %v1193, %v1189
  %v2202 = vpack.c.b16 %v1194, %v1190
  %v2203 = vpack.c.b16 %v1195, %v1191
  %v2204 = vpack.c.b16 %v1196, %v1192
  %v2205 = vpack.c.b16 %v1201, %v1197
  %v2206 = vpack.c.b16 %v1202, %v1198
  %v2207 = vpack.c.b16 %v1203, %v1199
  %v2208 = vpack.c.b16 %v1204, %v1200
  %v2209 = vpack.c.b16 %v1209, %v1205
  %v2210 = vpack.c.b16 %v1210, %v1206
  %v2211 = vpack.c.b16 %v1211, %v1207
  %v2212 = vpack.c.b16 %v1212, %v1208
  %v2213 = vpack.c.b16 %v1217, %v1213
  %v2214 = vpack.c.b16 %v1218, %v1214
  %v2215 = vpack.c.b16 %v1219, %v1215
  %v2216 = vpack.c.b16 %v1220, %v1216
  %v2217 = vpack.c.b16 %v1225, %v1221
  %v2218 = vpack.c.b16 %v1226, %v1222
  %v2219 = vpack.c.b16 %v1227, %v1223
  %v2220 = vpack.c.b16 %v1228, %v1224
  %v2221 = vpack.c.b16 %v1233, %v1229
  %v2222 = vpack.c.b16 %v1234, %v1230
  %v2223 = vpack.c.b16 %v1235, %v1231
  %v2224 = vpack.c.b16 %v1236, %v1232
  %v2225 = vpack.c.b16 %v1241, %v1237
  %v2226 = vpack.c.b16 %v1242, %v1238
  %v2227 = vpack.c.b16 %v1243, %v1239
  %v2228 = vpack.c.b16 %v1244, %v1240
  %v2229 = vpack.c.b16 %v1249, %v1245
  %v2230 = vpack.c.b16 %v1250, %v1246
  %v2231 = vpack.c.b16 %v1251, %v1247
  %v2232 = vpack.c.b16 %v1252, %v1248
  %v2233 = vpack.c.b16 %v1257, %v1253
  %v2234 = vpack.c.b16 %v1258, %v1254
  %v2235 = vpack.c.b16 %v1259, %v1255
  %v2236 = vpack.c.b16 %v1260, %v1256
  %v2237 = vpack.c.b16 %v1265, %v1261
  %v2238 = vpack.c.b16 %v1266, %v1262
  %v2239 = vpack.c.b16 %v1267, %v1263
  %v2240 = vpack.c.b16 %v1268, %v1264
  %v2241 = vpack.c.b16 %v1273, %v1269
  %v2242 = vpack.c.b16 %v1274, %v1270
  %v2243 = vpack.c.b16 %v1275, %v1271
  %v2244 = vpack.c.b16 %v1276, %v1272
  %v2245 = vpack.c.b16 %v1281, %v1277
  %v2246 = vpack.c.b16 %v1282, %v1278
  %v2247 = vpack.c.b16 %v1283, %v1279
  %v2248 = vpack.c.b16 %v1284, %v1280
  %v2249 = vpack.c.b16 %v1289, %v1285
  %v2250 = vpack.c.b16 %v1290, %v1286
  %v2251 = vpack.c.b16 %v1291, %v1287
  %v2252 = vpack.c.b16 %v1292, %v1288
  %v2253 = vpack.c.b16 %v1297, %v1293
  %v2254 = vpack.c.b16 %v1298, %v1294
  %v2255 = vpack.c.b16 %v1299, %v1295
  %v2256 = vpack.c.b16 %v1300, %v1296
  %v2257 = vpack.c.b16 %v1305, %v1301
  %v2258 = vpack.c.b16 %v1306, %v1302
  %v2259 = vpack.c.b16 %v1307, %v1303
  %v2260 = vpack.c.b16 %v1308, %v1304
  %v2261 = vpack.c.b16 %v1313, %v1309
  %v2262 = vpack.c.b16 %v1314, %v1310
  %v2263 = vpack.c.b16 %v1315, %v1311
  %v2264 = vpack.c.b16 %v1316, %v1312
  %v2265 = vpack.c.b16 %v1321, %v1317
  %v2266 = vpack.c.b16 %v1322, %v1318
  %v2267 = vpack.c.b16 %v1323, %v1319
  %v2268 = vpack.c.b16 %v1324, %v1320
  %v2269 = vpack.c.b16 %v1329, %v1325
  %v2270 = vpack.c.b16 %v1330, %v1326
  %v2271 = vpack.c.b16 %v1331, %v1327
  %v2272 = vpack.c.b16 %v1332, %v1328
  %v2273 = vpack.c.b16 %v1337, %v1333
  %v2274 = vpack.c.b16 %v1338, %v1334
  %v2275 = vpack.c.b16 %v1339, %v1335
  %v2276 = vpack.c.b16 %v1340, %v1336
  %v2277 = vpack.c.b16 %v1345, %v1341
  %v2278 = vpack.c.b16 %v1346, %v1342
  %v2279 = vpack.c.b16 %v1347, %v1343
  %v2280 = vpack.c.b16 %v1348, %v1344
  %v2281 = vpack.c.b16 %v1353, %v1349
  %v2282 = vpack.c.b16 %v1354, %v1350
  %v2283 = vpack.c.b16 %v1355, %v1351
  %v2284 = vpack.c.b16 %v1356, %v1352
  %v2285 = vpack.c.b16 %v1361, %v1357
  %v2286 = vpack.c.b16 %v1362, %v1358
  %v2287 = vpack.c.b16 %v1363, %v1359
  %v2288 = vpack.c.b16 %v1364, %v1360
  %v2289 = vpack.c.b16 %v1369, %v1365
  %v2290 = vpack.c.b16 %v1370, %v1366
  %v2291 = vpack.c.b16 %v1371, %v1367
  %v2292 = vpack.c.b16 %v1372, %v1368
  %v2293 = vpack.c.b16 %v1377, %v1373
  %v2294 = vpack.c.b16 %v1378, %v1374
  %v2295 = vpack.c.b16 %v1379, %v1375
  %v2296 = vpack.c.b16 %v1380, %v1376
  %v2297 = vpack.c.b16 %v1385, %v1381
  %v2298 = vpack.c.b16 %v1386, %v1382
  %v2299 = vpack.c.b16 %v1387, %v1383
  %v2300 = vpack.c.b16 %v1388, %v1384
  %v2301 = vpack.c.b16 %v1393, %v1389
  %v2302 = vpack.c.b16 %v1394, %v1390
  %v2303 = vpack.c.b16 %v1395, %v1391
  %v2304 = vpack.c.b16 %v1396, %v1392
  %v2305 = vpack.c.b16 %v1401, %v1397
  %v2306 = vpack.c.b16 %v1402, %v1398
  %v2307 = vpack.c.b16 %v1403, %v1399
  %v2308 = vpack.c.b16 %v1404, %v1400
  %v2309 = vpack.c.b16 %v1409, %v1405
  %v2310 = vpack.c.b16 %v1410, %v1406
  %v2311 = vpack.c.b16 %v1411, %v1407
  %v2312 = vpack.c.b16 %v1412, %v1408
  %v2313 = vpack.c.b16 %v1417, %v1413
  %v2314 = vpack.c.b16 %v1418, %v1414
  %v2315 = vpack.c.b16 %v1419, %v1415
  %v2316 = vpack.c.b16 %v1420, %v1416
  %v2317 = vpack.c.b16 %v1425, %v1421
  %v2318 = vpack.c.b16 %v1426, %v1422
  %v2319 = vpack.c.b16 %v1427, %v1423
  %v2320 = vpack.c.b16 %v1428, %v1424
  %v2321 = vpack.c.b16 %v1433, %v1429
  %v2322 = vpack.c.b16 %v1434, %v1430
  %v2323 = vpack.c.b16 %v1435, %v1431
  %v2324 = vpack.c.b16 %v1436, %v1432
  %v2325 = vpack.c.b16 %v1441, %v1437
  %v2326 = vpack.c.b16 %v1442, %v1438
  %v2327 = vpack.c.b16 %v1443, %v1439
  %v2328 = vpack.c.b16 %v1444, %v1440
  %v2329 = vpack.c.b16 %v1449, %v1445
  %v2330 = vpack.c.b16 %v1450, %v1446
  %v2331 = vpack.c.b16 %v1451, %v1447
  %v2332 = vpack.c.b16 %v1452, %v1448
  %v2333 = vpack.c.b16 %v1457, %v1453
  %v2334 = vpack.c.b16 %v1458, %v1454
  %v2335 = vpack.c.b16 %v1459, %v1455
  %v2336 = vpack.c.b16 %v1460, %v1456
  %v2337 = vpack.c.b16 %v1465, %v1461
  %v2338 = vpack.c.b16 %v1466, %v1462
  %v2339 = vpack.c.b16 %v1467, %v1463
  %v2340 = vpack.c.b16 %v1468, %v1464
  %v2341 = vpack.c.b16 %v1473, %v1469
  %v2342 = vpack.c.b16 %v1474, %v1470
  %v2343 = vpack.c.b16 %v1475, %v1471
  %v2344 = vpack.c.b16 %v1476, %v1472
  %v2345 = vpack.c.b16 %v1481, %v1477
  %v2346 = vpack.c.b16 %v1482, %v1478
  %v2347 = vpack.c.b16 %v1483, %v1479
  %v2348 = vpack.c.b16 %v1484, %v1480
  %v2349 = vpack.c.b16 %v1489, %v1485
  %v2350 = vpack.c.b16 %v1490, %v1486
  %v2351 = vpack.c.b16 %v1491, %v1487
  %v2352 = vpack.c.b16 %v1492, %v1488
  %v2353 = vpack.c.b16 %v1497, %v1493
  %v2354 = vpack.c.b16 %v1498, %v1494
  %v2355 = vpack.c.b16 %v1499, %v1495
  %v2356 = vpack.c.b16 %v1500, %v1496
  %v2357 = vpack.c.b16 %v1505, %v1501
  %v2358 = vpack.c.b16 %v1506, %v1502
  %v2359 = vpack.c.b16 %v1507, %v1503
  %v2360 = vpack.c.b16 %v1508, %v1504
  %v2361 = vpack.c.b16 %v1513, %v1509
  %v2362 = vpack.c.b16 %v1514, %v1510
  %v2363 = vpack.c.b16 %v1515, %v1511
  %v2364 = vpack.c.b16 %v1516, %v1512
  %v2365 = vpack.c.b16 %v1521, %v1517
  %v2366 = vpack.c.b16 %v1522, %v1518
  %v2367 = vpack.c.b16 %v1523, %v1519
  %v2368 = vpack.c.b16 %v1524, %v1520
  %v2369 = vpack.c.b16 %v1529, %v1525
  %v2370 = vpack.c.b16 %v1530, %v1526
  %v2371 = vpack.c.b16 %v1531, %v1527
  %v2372 = vpack.c.b16 %v1532, %v1528
  %v2373 = vpack.c.b16 %v1537, %v1533
  %v2374 = vpack.c.b16 %v1538, %v1534
  %v2375 = vpack.c.b16 %v1539, %v1535
  %v2376 = vpack.c.b16 %v1540, %v1536
  %v2377 = vpack.c.b16 %v1545, %v1541
  %v2378 = vpack.c.b16 %v1546, %v1542
  %v2379 = vpack.c.b16 %v1547, %v1543
  %v2380 = vpack.c.b16 %v1548, %v1544
  %v2381 = vpack.c.b16 %v1553, %v1549
  %v2382 = vpack.c.b16 %v1554, %v1550
  %v2383 = vpack.c.b16 %v1555, %v1551
  %v2384 = vpack.c.b16 %v1556, %v1552
  %v2385 = vpack.c.b16 %v1561, %v1557
  %v2386 = vpack.c.b16 %v1562, %v1558
  %v2387 = vpack.c.b16 %v1563, %v1559
  %v2388 = vpack.c.b16 %v1564, %v1560
  %v2389 = vpack.c.b16 %v1569, %v1565
  %v2390 = vpack.c.b16 %v1570, %v1566
  %v2391 = vpack.c.b16 %v1571, %v1567
  %v2392 = vpack.c.b16 %v1572, %v1568
  %v2393 = vpack.c.b16 %v1577, %v1573
  %v2394 = vpack.c.b16 %v1578, %v1574
  %v2395 = vpack.c.b16 %v1579, %v1575
  %v2396 = vpack.c.b16 %v1580, %v1576
  %v2397 = vpack.c.b16 %v1585, %v1581
  %v2398 = vpack.c.b16 %v1586, %v1582
  %v2399 = vpack.c.b16 %v1587, %v1583
  %v2400 = vpack.c.b16 %v1588, %v1584
  %v2401 = vpack.c.b16 %v1593, %v1589
  %v2402 = vpack.c.b16 %v1594, %v1590
  %v2403 = vpack.c.b16 %v1595, %v1591
  %v2404 = vpack.c.b16 %v1596, %v1592
  %v2405 = vpack.c.b16 %v1601, %v1597
  %v2406 = vpack.c.b16 %v1602, %v1598
  %v2407 = vpack.c.b16 %v1603, %v1599
  %v2408 = vpack.c.b16 %v1604, %v1600
  %v2409 = vpack.c.b16 %v1609, %v1605
  %v2410 = vpack.c.b16 %v1610, %v1606
  %v2411 = vpack.c.b16 %v1611, %v1607
  %v2412 = vpack.c.b16 %v1612, %v1608
  %v2413 = vpack.c.b16 %v1617, %v1613
  %v2414 = vpack.c.b16 %v1618, %v1614
  %v2415 = vpack.c.b16 %v1619, %v1615
  %v2416 = vpack.c.b16 %v1620, %v1616
  %v2417 = vpack.c.b16 %v1625, %v1621
  %v2418 = vpack.c.b16 %v1626, %v1622
  %v2419 = vpack.c.b16 %v1627, %v1623
  %v2420 = vpack.c.b16 %v1628, %v1624
  %v2421 = vpack.c.b16 %v1633, %v1629
  %v2422 = vpack.c.b16 %v1634, %v1630
  %v2423 = vpack.c.b16 %v1635, %v1631
  %v2424 = vpack.c.b16 %v1636, %v1632
  %v2425 = vpack.c.b16 %v1641, %v1637
  %v2426 = vpack.c.b16 %v1642, %v1638
  %v2427 = vpack.c.b16 %v1643, %v1639
  %v2428 = vpack.c.b16 %v1644, %v1640
  %v2429 = vpack.c.b16 %v1649, %v1645
  %v2430 = vpack.c.b16 %v1650, %v1646
  %v2431 = vpack.c.b16 %v1651, %v1647
  %v2432 = vpack.c.b16 %v1652, %v1648
  %v2433 = vpack.c.b16 %v1657, %v1653
  %v2434 = vpack.c.b16 %v1658, %v1654
  %v2435 = vpack.c.b16 %v1659, %v1655
  %v2436 = vpack.c.b16 %v1660, %v1656
  %v2437 = vpack.c.b16 %v1665, %v1661
  %v2438 = vpack.c.b16 %v1666, %v1662
  %v2439 = vpack.c.b16 %v1667, %v1663
  %v2440 = vpack.c.b16 %v1668, %v1664
  %v2441 = vpack.c.b16 %v1673, %v1669
  %v2442 = vpack.c.b16 %v1674, %v1670
  %v2443 = vpack.c.b16 %v1675, %v1671
  %v2444 = vpack.c.b16 %v1676, %v1672
  %v2445 = vpack.c.b16 %v1681, %v1677
  %v2446 = vpack.c.b16 %v1682, %v1678
  %v2447 = vpack.c.b16 %v1683, %v1679
  %v2448 = vpack.c.b16 %v1684, %v1680
  %v2449 = vpack.c.b16 %v1689, %v1685
  %v2450 = vpack.c.b16 %v1690, %v1686
  %v2451 = vpack.c.b16 %v1691, %v1687
  %v2452 = vpack.c.b16 %v1692, %v1688
  %v2453 = vpack.c.b16 %v1697, %v1693
  %v2454 = vpack.c.b16 %v1698, %v1694
  %v2455 = vpack.c.b16 %v1699, %v1695
  %v2456 = vpack.c.b16 %v1700, %v1696
  %v2457 = vpack.c.b16 %v1705, %v1701
  %v2458 = vpack.c.b16 %v1706, %v1702
  %v2459 = vpack.c.b16 %v1707, %v1703
  %v2460 = vpack.c.b16 %v1708, %v1704
  %v2461 = vpack.c.b16 %v1713, %v1709
  %v2462 = vpack.c.b16 %v1714, %v1710
  %v2463 = vpack.c.b16 %v1715, %v1711
  %v2464 = vpack.c.b16 %v1716, %v1712
  %v2465 = vpack.c.b16 %v1721, %v1717
  %v2466 = vpack.c.b16 %v1722, %v1718
  %v2467 = vpack.c.b16 %v1723, %v1719
  %v2468 = vpack.c.b16 %v1724, %v1720
  %v2469 = vpack.c.b16 %v1729, %v1725
  %v2470 = vpack.c.b16 %v1730, %v1726
  %v2471 = vpack.c.b16 %v1731, %v1727
  %v2472 = vpack.c.b16 %v1732, %v1728
  %v2473 = vpack.c.b16 %v1737, %v1733
  %v2474 = vpack.c.b16 %v1738, %v1734
  %v2475 = vpack.c.b16 %v1739, %v1735
  %v2476 = vpack.c.b16 %v1740, %v1736
  %v2477 = vpack.c.b16 %v1745, %v1741
  %v2478 = vpack.c.b16 %v1746, %v1742
  %v2479 = vpack.c.b16 %v1747, %v1743
  %v2480 = vpack.c.b16 %v1748, %v1744
  %v2481 = vpack.c.b16 %v1753, %v1749
  %v2482 = vpack.c.b16 %v1754, %v1750
  %v2483 = vpack.c.b16 %v1755, %v1751
  %v2484 = vpack.c.b16 %v1756, %v1752
  %v2485 = vpack.c.b16 %v1761, %v1757
  %v2486 = vpack.c.b16 %v1762, %v1758
  %v2487 = vpack.c.b16 %v1763, %v1759
  %v2488 = vpack.c.b16 %v1764, %v1760
  %v2489 = vpack.c.b16 %v1769, %v1765
  %v2490 = vpack.c.b16 %v1770, %v1766
  %v2491 = vpack.c.b16 %v1771, %v1767
  %v2492 = vpack.c.b16 %v1772, %v1768
  %v2493 = vpack.c.b16 %v1777, %v1773
  %v2494 = vpack.c.b16 %v1778, %v1774
  %v2495 = vpack.c.b16 %v1779, %v1775
  %v2496 = vpack.c.b16 %v1780, %v1776
  %v2497 = vpack.c.b16 %v1785, %v1781
  %v2498 = vpack.c.b16 %v1786, %v1782
  %v2499 = vpack.c.b16 %v1787, %v1783
  %v2500 = vpack.c.b16 %v1788, %v1784
  %v2501 = vpack.c.b16 %v1793, %v1789
  %v2502 = vpack.c.b16 %v1794, %v1790
  %v2503 = vpack.c.b16 %v1795, %v1791
  %v2504 = vpack.c.b16 %v1796, %v1792
  %v2505 = vpack.c.b16 %v1801, %v1797
  %v2506 = vpack.c.b16 %v1802, %v1798
  %v2507 = vpack.c.b16 %v1803, %v1799
  %v2508 = vpack.c.b16 %v1804, %v1800
  %v2509 = vpack.c.b16 %v1809, %v1805
  %v2510 = vpack.c.b16 %v1810, %v1806
  %v2511 = vpack.c.b16 %v1811, %v1807
  %v2512 = vpack.c.b16 %v1812, %v1808
  %v2513 = vpack.c.b16 %v1817, %v1813
  %v2514 = vpack.c.b16 %v1818, %v1814
  %v2515 = vpack.c.b16 %v1819, %v1815
  %v2516 = vpack.c.b16 %v1820, %v1816
  %v2517 = vpack.c.b16 %v1825, %v1821
  %v2518 = vpack.c.b16 %v1826, %v1822
  %v2519 = vpack.c.b16 %v1827, %v1823
  %v2520 = vpack.c.b16 %v1828, %v1824
  %v2521 = vpack.c.b16 %v1833, %v1829
  %v2522 = vpack.c.b16 %v1834, %v1830
  %v2523 = vpack.c.b16 %v1835, %v1831
  %v2524 = vpack.c.b16 %v1836, %v1832
  %v2525 = vpack.c.b16 %v1841, %v1837
  %v2526 = vpack.c.b16 %v1842, %v1838
  %v2527 = vpack.c.b16 %v1843, %v1839
  %v2528 = vpack.c.b16 %v1844, %v1840
  %v2529 = vpack.c.b16 %v1849, %v1845
  %v2530 = vpack.c.b16 %v1850, %v1846
  %v2531 = vpack.c.b16 %v1851, %v1847
  %v2532 = vpack.c.b16 %v1852, %v1848
  %v2533 = vpack.c.b16 %v1857, %v1853
  %v2534 = vpack.c.b16 %v1858, %v1854
  %v2535 = vpack.c.b16 %v1859, %v1855
  %v2536 = vpack.c.b16 %v1860, %v1856
  %v2537 = vpack.c.b16 %v1865, %v1861
  %v2538 = vpack.c.b16 %v1866, %v1862
  %v2539 = vpack.c.b16 %v1867, %v1863
  %v2540 = vpack.c.b16 %v1868, %v1864
  %v2541 = vpack.c.b16 %v1873, %v1869
  %v2542 = vpack.c.b16 %v1874, %v1870
  %v2543 = vpack.c.b16 %v1875, %v1871
  %v2544 = vpack.c.b16 %v1876, %v1872
  %v2545 = vpack.c.b16 %v1881, %v1877
  %v2546 = vpack.c.b16 %v1882, %v1878
  %v2547 = vpack.c.b16 %v1883, %v1879
  %v2548 = vpack.c.b16 %v1884, %v1880
  %v2549 = vpack.c.b16 %v1889, %v1885
  %v2550 = vpack.c.b16 %v1890, %v1886
  %v2551 = vpack.c.b16 %v1891, %v1887
  %v2552 = vpack.c.b16 %v1892, %v1888
  %v2553 = vpack.c.b16 %v1897, %v1893
  %v2554 = vpack.c.b16 %v1898, %v1894
  %v2555 = vpack.c.b16 %v1899, %v1895
  %v2556 = vpack.c.b16 %v1900, %v1896
  %v2557 = vpack.c.b16 %v1905, %v1901
  %v2558 = vpack.c.b16 %v1906, %v1902
  %v2559 = vpack.c.b16 %v1907, %v1903
  %v2560 = vpack.c.b16 %v1908, %v1904
  %v2561 = vpack.c.b16 %v1913, %v1909
  %v2562 = vpack.c.b16 %v1914, %v1910
  %v2563 = vpack.c.b16 %v1915, %v1911
  %v2564 = vpack.c.b16 %v1916, %v1912
  %v2565 = vpack.c.b16 %v1921, %v1917
  %v2566 = vpack.c.b16 %v1922, %v1918
  %v2567 = vpack.c.b16 %v1923, %v1919
  %v2568 = vpack.c.b16 %v1924, %v1920
  %v2569 = vpack.c.b16 %v1929, %v1925
  %v2570 = vpack.c.b16 %v1930, %v1926
  %v2571 = vpack.c.b16 %v1931, %v1927
  %v2572 = vpack.c.b16 %v1932, %v1928
  %v2573 = vpack.c.b16 %v1937, %v1933
  %v2574 = vpack.c.b16 %v1938, %v1934
  %v2575 = vpack.c.b16 %v1939, %v1935
  %v2576 = vpack.c.b16 %v1940, %v1936
  %v2577 = vpack.c.b16 %v1945, %v1941
  %v2578 = vpack.c.b16 %v1946, %v1942
  %v2579 = vpack.c.b16 %v1947, %v1943
  %v2580 = vpack.c.b16 %v1948, %v1944
  %v2581 = vpack.c.b16 %v1953, %v1949
  %v2582 = vpack.c.b16 %v1954, %v1950
  %v2583 = vpack.c.b16 %v1955, %v1951
  %v2584 = vpack.c.b16 %v1956, %v1952
  %v2585 = vpack.c.b16 %v1961, %v1957
  %v2586 = vpack.c.b16 %v1962, %v1958
  %v2587 = vpack.c.b16 %v1963, %v1959
  %v2588 = vpack.c.b16 %v1964, %v1960
  %v2589 = vpack.c.b16 %v1969, %v1965
  %v2590 = vpack.c.b16 %v1970, %v1966
  %v2591 = vpack.c.b16 %v1971, %v1967
  %v2592 = vpack.c.b16 %v1972, %v1968
  %v2593 = vpack.c.b16 %v1977, %v1973
  %v2594 = vpack.c.b16 %v1978, %v1974
  %v2595 = vpack.c.b16 %v1979, %v1975
  %v2596 = vpack.c.b16 %v1980, %v1976
  %v2597 = vpack.c.b16 %v1985, %v1981
  %v2598 = vpack.c.b16 %v1986, %v1982
  %v2599 = vpack.c.b16 %v1987, %v1983
  %v2600 = vpack.c.b16 %v1988, %v1984
  %v2601 = vpack.c.b16 %v1993, %v1989
  %v2602 = vpack.c.b16 %v1994, %v1990
  %v2603 = vpack.c.b16 %v1995, %v1991
  %v2604 = vpack.c.b16 %v1996, %v1992
  %v2605 = vpack.c.b16 %v2001, %v1997
  %v2606 = vpack.c.b16 %v2002, %v1998
  %v2607 = vpack.c.b16 %v2003, %v1999
  %v2608 = vpack.c.b16 %v2004, %v2000
  %v2609 = vpack.c.b16 %v2009, %v2005
  %v2610 = vpack.c.b16 %v2010, %v2006
  %v2611 = vpack.c.b16 %v2011, %v2007
  %v2612 = vpack.c.b16 %v2012, %v2008
  %v2613 = vpack.c.b16 %v2017, %v2013
  %v2614 = vpack.c.b16 %v2018, %v2014
  %v2615 = vpack.c.b16 %v2019, %v2015
  %v2616 = vpack.c.b16 %v2020, %v2016
  %v2617 = vpack.c.b16 %v2025, %v2021
  %v2618 = vpack.c.b16 %v2026, %v2022
  %v2619 = vpack.c.b16 %v2027, %v2023
  %v2620 = vpack.c.b16 %v2028, %v2024
  %v2621 = vpack.c.b16 %v2033, %v2029
  %v2622 = vpack.c.b16 %v2034, %v2030
  %v2623 = vpack.c.b16 %v2035, %v2031
  %v2624 = vpack.c.b16 %v2036, %v2032
  %v2625 = vpack.c.b16 %v2041, %v2037
  %v2626 = vpack.c.b16 %v2042, %v2038
  %v2627 = vpack.c.b16 %v2043, %v2039
  %v2628 = vpack.c.b16 %v2044, %v2040
  %v2629 = vpack.c.b16 %v2049, %v2045
  %v2630 = vpack.c.b16 %v2050, %v2046
  %v2631 = vpack.c.b16 %v2051, %v2047
  %v2632 = vpack.c.b16 %v2052, %v2048
  %v2633 = vpack.c.b16 %v2057, %v2053
  %v2634 = vpack.c.b16 %v2058, %v2054
  %v2635 = vpack.c.b16 %v2059, %v2055
  %v2636 = vpack.c.b16 %v2060, %v2056
  %v2637 = vpack.c.b16 %v2065, %v2061
  %v2638 = vpack.c.b16 %v2066, %v2062
  %v2639 = vpack.c.b16 %v2067, %v2063
  %v2640 = vpack.c.b16 %v2068, %v2064
  %v2641 = vpack.c.b16 %v2073, %v2069
  %v2642 = vpack.c.b16 %v2074, %v2070
  %v2643 = vpack.c.b16 %v2075, %v2071
  %v2644 = vpack.c.b16 %v2076, %v2072
  %v2645 = vpack.c.b16 %v2081, %v2077
  %v2646 = vpack.c.b16 %v2082, %v2078
  %v2647 = vpack.c.b16 %v2083, %v2079
  %v2648 = vpack.c.b16 %v2084, %v2080
  %v2649 = vpack.c.b16 %v2089, %v2085
  %v2650 = vpack.c.b16 %v2090, %v2086
  %v2651 = vpack.c.b16 %v2091, %v2087
  %v2652 = vpack.c.b16 %v2092, %v2088
  %v2653 = vpack.c.b16 %v2097, %v2093
  %v2654 = vpack.c.b16 %v2098, %v2094
  %v2655 = vpack.c.b16 %v2099, %v2095
  %v2656 = vpack.c.b16 %v2100, %v2096
  %v2657 = vpack.c.b16 %v2105, %v2101
  %v2658 = vpack.c.b16 %v2106, %v2102
  %v2659 = vpack.c.b16 %v2107, %v2103
  %v2660 = vpack.c.b16 %v2108, %v2104
  %v2661 = vpack.c.b16 %v2113, %v2109
  %v2662 = vpack.c.b16 %v2114, %v2110
  %v2663 = vpack.c.b16 %v2115, %v2111
  %v2664 = vpack.c.b16 %v2116, %v2112
  %v2665 = vpack.c.b16 %v2121, %v2117
  %v2666 = vpack.c.b16 %v2122, %v2118
  %v2667 = vpack.c.b16 %v2123, %v2119
  %v2668 = vpack.c.b16 %v2124, %v2120
  %v2669 = vpack.c.b16 %v2129, %v2125
  %v2670 = vpack.c.b16 %v2130, %v2126
  %v2671 = vpack.c.b16 %v2131, %v2127
  %v2672 = vpack.c.b16 %v2132, %v2128
  %v2673 = vpack.c.b16 %v2137, %v2133
  %v2674 = vpack.c.b16 %v2138, %v2134
  %v2675 = vpack.c.b16 %v2139, %v2135
  %v2676 = vpack.c.b16 %v2140, %v2136
  %v2677 = vpack.c.b16 %v2145, %v2141
  %v2678 = vpack.c.b16 %v2146, %v2142
  %v2679 = vpack.c.b16 %v2147, %v2143
  %v2680 = vpack.c.b16 %v2148, %v2144
  %v2681 = vpack.c.b16 %v2153, %v2149
  %v2682 = vpack.c.b16 %v2154, %v2150
  %v2683 = vpack.c.b16 %v2155, %v2151
  %v2684 = vpack.c.b16 %v2156, %v2152
  %v2685 = vpack.c.b16 %v2161, %v2157
  %v2686 = vpack.c.b16 %v2162, %v2158
  %v2687 = vpack.c.b16 %v2163, %v2159
  %v2688 = vpack.c.b16 %v2164, %v2160
  %v2689 = vpack.c.b16 %v2169, %v2165
  %v2690 = vpack.c.b16 %v2170, %v2166
  %v2691 = vpack.c.b16 %v2171, %v2167
  %v2692 = vpack.c.b16 %v2172, %v2168
  %v2693 = vpack.c.b16 %v2177, %v2173
  %v2694 = vpack.c.b16 %v2178, %v2174
  %v2695 = vpack.c.b16 %v2179, %v2175
  %v2696 = vpack.c.b16 %v2180, %v2176
  %v2697 = vpack.c.b16 %v2185, %v2181
  %v2698 = vpack.c.b16 %v2186, %v2182
  %v2699 = vpack.c.b16 %v2187, %v2183
  %v2700 = vpack.c.b16 %v2188, %v2184
  %3213 = vmatprep.subr.bf16.mxu0 %v2218
  %3214 = vmatpush1.bf16.msra.mxu0 %v2217
  %3215 = vmatprep.subr.bf16.mxu0 %v2214
  %3216 = vmatpush1.bf16.msra.mxu0 %v2213
  %3217 = vmatprep.subr.bf16.mxu0 %v2210
  %3218 = vmatpush1.bf16.msra.mxu0 %v2209
  %3219 = vmatprep.subr.bf16.mxu0 %v2206
  %3220 = vmatpush1.bf16.msra.mxu0 %v2205
  %3221 = vmatprep.subr.bf16.mxu0 %v2202
  %3222 = vmatpush1.bf16.msra.mxu0 %v2201
  %3223 = vmatprep.subr.bf16.mxu0 %v2198
  %3224 = vmatpush1.bf16.msra.mxu0 %v2197
  %3225 = vmatprep.subr.bf16.mxu0 %v2194
  %3226 = vmatpush1.bf16.msra.mxu0 %v2193
  %3227 = vmatprep.subr.bf16.mxu0 %v2190
  %3228 = vmatpush1.bf16.msra.mxu0 %v2189
  %3229 = vmatprep.subr.bf16.mxu0 %v2250
  %3230 = vmatpush2.bf16.msra.mxu0 %v2249
  %3231 = vmatprep.subr.bf16.mxu0 %v2246
  %3232 = vmatpush2.bf16.msra.mxu0 %v2245
  %3233 = vmatprep.subr.bf16.mxu0 %v2242
  %3234 = vmatpush2.bf16.msra.mxu0 %v2241
  %3235 = vmatprep.subr.bf16.mxu0 %v2238
  %3236 = vmatpush2.bf16.msra.mxu0 %v2237
  %3237 = vmatprep.subr.bf16.mxu0 %v2234
  %3238 = vmatpush2.bf16.msra.mxu0 %v2233
  %3239 = vmatprep.subr.bf16.mxu0 %v2230
  %3240 = vmatpush2.bf16.msra.mxu0 %v2229
  %3241 = vmatprep.subr.bf16.mxu0 %v2226
  %3242 = vmatpush2.bf16.msra.mxu0 %v2225
  %3243 = vmatprep.subr.bf16.mxu0 %v2222
  %3244 = vmatpush2.bf16.msra.mxu0 %v2221
  %3245 = vmatprep.mubr.bf16.mxu0 %v622
  %3246 = vmatmul.mubr.bf16.gmra.mxu0 %v621
  %v3247 = vpop.f32.mrf.mxu0
  %v3248 = vadd.f32 %v556, %v3247
  %v3249 = vpop.f32.mrf.mxu0
  %v3250 = vadd.f32 %v560, %v3249
  %v3251 = vpop.f32.mrf.mxu0
  %v3252 = vadd.f32 %v556, %v3251
  %v3253 = vpop.f32.mrf.mxu0
  %v3254 = vadd.f32 %v560, %v3253
  %3255 = vdwg.mxu0
  %3256 = vmatprep.subr.bf16.mxu0 %v2282
  %3257 = vmatpush1.bf16.msra.mxu0 %v2281
  %3258 = vmatprep.subr.bf16.mxu0 %v2278
  %3259 = vmatpush1.bf16.msra.mxu0 %v2277
  %3260 = vmatprep.subr.bf16.mxu0 %v2274
  %3261 = vmatpush1.bf16.msra.mxu0 %v2273
  %3262 = vmatprep.subr.bf16.mxu0 %v2270
  %3263 = vmatpush1.bf16.msra.mxu0 %v2269
  %3264 = vmatprep.subr.bf16.mxu0 %v2266
  %3265 = vmatpush1.bf16.msra.mxu0 %v2265
  %3266 = vmatprep.subr.bf16.mxu0 %v2262
  %3267 = vmatpush1.bf16.msra.mxu0 %v2261
  %3268 = vmatprep.subr.bf16.mxu0 %v2258
  %3269 = vmatpush1.bf16.msra.mxu0 %v2257
  %3270 = vmatprep.subr.bf16.mxu0 %v2254
  %3271 = vmatpush1.bf16.msra.mxu0 %v2253
  %3272 = vmatprep.subr.bf16.mxu0 %v2314
  %3273 = vmatpush2.bf16.msra.mxu0 %v2313
  %3274 = vmatprep.subr.bf16.mxu0 %v2310
  %3275 = vmatpush2.bf16.msra.mxu0 %v2309
  %3276 = vmatprep.subr.bf16.mxu0 %v2306
  %3277 = vmatpush2.bf16.msra.mxu0 %v2305
  %3278 = vmatprep.subr.bf16.mxu0 %v2302
  %3279 = vmatpush2.bf16.msra.mxu0 %v2301
  %3280 = vmatprep.subr.bf16.mxu0 %v2298
  %3281 = vmatpush2.bf16.msra.mxu0 %v2297
  %3282 = vmatprep.subr.bf16.mxu0 %v2294
  %3283 = vmatpush2.bf16.msra.mxu0 %v2293
  %3284 = vmatprep.subr.bf16.mxu0 %v2290
  %3285 = vmatpush2.bf16.msra.mxu0 %v2289
  %3286 = vmatprep.subr.bf16.mxu0 %v2286
  %3287 = vmatpush2.bf16.msra.mxu0 %v2285
  %3288 = vmatprep.mubr.bf16.mxu0 %v624
  %3289 = vmatmul.mubr.bf16.gmra.mxu0 %v623
  %v3290 = vpop.f32.mrf.mxu0
  %v3291 = vadd.f32 %v3248, %v3290
  %v3292 = vpop.f32.mrf.mxu0
  %v3293 = vadd.f32 %v3250, %v3292
  %v3294 = vpop.f32.mrf.mxu0
  %v3295 = vadd.f32 %v3252, %v3294
  %v3296 = vpop.f32.mrf.mxu0
  %v3297 = vadd.f32 %v3254, %v3296
  %3298 = vdwg.mxu0
  %3299 = vmatprep.subr.bf16.mxu0 %v2346
  %3300 = vmatpush1.bf16.msra.mxu0 %v2345
  %3301 = vmatprep.subr.bf16.mxu0 %v2342
  %3302 = vmatpush1.bf16.msra.mxu0 %v2341
  %3303 = vmatprep.subr.bf16.mxu0 %v2338
  %3304 = vmatpush1.bf16.msra.mxu0 %v2337
  %3305 = vmatprep.subr.bf16.mxu0 %v2334
  %3306 = vmatpush1.bf16.msra.mxu0 %v2333
  %3307 = vmatprep.subr.bf16.mxu0 %v2330
  %3308 = vmatpush1.bf16.msra.mxu0 %v2329
  %3309 = vmatprep.subr.bf16.mxu0 %v2326
  %3310 = vmatpush1.bf16.msra.mxu0 %v2325
  %3311 = vmatprep.subr.bf16.mxu0 %v2322
  %3312 = vmatpush1.bf16.msra.mxu0 %v2321
  %3313 = vmatprep.subr.bf16.mxu0 %v2318
  %3314 = vmatpush1.bf16.msra.mxu0 %v2317
  %3315 = vmatprep.subr.bf16.mxu0 %v2378
  %3316 = vmatpush2.bf16.msra.mxu0 %v2377
  %3317 = vmatprep.subr.bf16.mxu0 %v2374
  %3318 = vmatpush2.bf16.msra.mxu0 %v2373
  %3319 = vmatprep.subr.bf16.mxu0 %v2370
  %3320 = vmatpush2.bf16.msra.mxu0 %v2369
  %3321 = vmatprep.subr.bf16.mxu0 %v2366
  %3322 = vmatpush2.bf16.msra.mxu0 %v2365
  %3323 = vmatprep.subr.bf16.mxu0 %v2362
  %3324 = vmatpush2.bf16.msra.mxu0 %v2361
  %3325 = vmatprep.subr.bf16.mxu0 %v2358
  %3326 = vmatpush2.bf16.msra.mxu0 %v2357
  %3327 = vmatprep.subr.bf16.mxu0 %v2354
  %3328 = vmatpush2.bf16.msra.mxu0 %v2353
  %3329 = vmatprep.subr.bf16.mxu0 %v2350
  %3330 = vmatpush2.bf16.msra.mxu0 %v2349
  %3331 = vmatprep.mubr.bf16.mxu0 %v626
  %3332 = vmatmul.mubr.bf16.gmra.mxu0 %v625
  %v3333 = vpop.f32.mrf.mxu0
  %v3334 = vadd.f32 %v3291, %v3333
  %v3335 = vpop.f32.mrf.mxu0
  %v3336 = vadd.f32 %v3293, %v3335
  %v3337 = vpop.f32.mrf.mxu0
  %v3338 = vadd.f32 %v3295, %v3337
  %v3339 = vpop.f32.mrf.mxu0
  %v3340 = vadd.f32 %v3297, %v3339
  %3341 = vdwg.mxu0
  %3342 = vmatprep.subr.bf16.mxu0 %v2410
  %3343 = vmatpush1.bf16.msra.mxu0 %v2409
  %3344 = vmatprep.subr.bf16.mxu0 %v2406
  %3345 = vmatpush1.bf16.msra.mxu0 %v2405
  %3346 = vmatprep.subr.bf16.mxu0 %v2402
  %3347 = vmatpush1.bf16.msra.mxu0 %v2401
  %3348 = vmatprep.subr.bf16.mxu0 %v2398
  %3349 = vmatpush1.bf16.msra.mxu0 %v2397
  %3350 = vmatprep.subr.bf16.mxu0 %v2394
  %3351 = vmatpush1.bf16.msra.mxu0 %v2393
  %3352 = vmatprep.subr.bf16.mxu0 %v2390
  %3353 = vmatpush1.bf16.msra.mxu0 %v2389
  %3354 = vmatprep.subr.bf16.mxu0 %v2386
  %3355 = vmatpush1.bf16.msra.mxu0 %v2385
  %3356 = vmatprep.subr.bf16.mxu0 %v2382
  %3357 = vmatpush1.bf16.msra.mxu0 %v2381
  %3358 = vmatprep.subr.bf16.mxu0 %v2442
  %3359 = vmatpush2.bf16.msra.mxu0 %v2441
  %3360 = vmatprep.subr.bf16.mxu0 %v2438
  %3361 = vmatpush2.bf16.msra.mxu0 %v2437
  %3362 = vmatprep.subr.bf16.mxu0 %v2434
  %3363 = vmatpush2.bf16.msra.mxu0 %v2433
  %3364 = vmatprep.subr.bf16.mxu0 %v2430
  %3365 = vmatpush2.bf16.msra.mxu0 %v2429
  %3366 = vmatprep.subr.bf16.mxu0 %v2426
  %3367 = vmatpush2.bf16.msra.mxu0 %v2425
  %3368 = vmatprep.subr.bf16.mxu0 %v2422
  %3369 = vmatpush2.bf16.msra.mxu0 %v2421
  %3370 = vmatprep.subr.bf16.mxu0 %v2418
  %3371 = vmatpush2.bf16.msra.mxu0 %v2417
  %3372 = vmatprep.subr.bf16.mxu0 %v2414
  %3373 = vmatpush2.bf16.msra.mxu0 %v2413
  %3374 = vmatprep.mubr.bf16.mxu0 %v628
  %3375 = vmatmul.mubr.bf16.gmra.mxu0 %v627
  %v3376 = vpop.f32.mrf.mxu0
  %v3377 = vadd.f32 %v3334, %v3376
  %v3378 = vpop.f32.mrf.mxu0
  %v3379 = vadd.f32 %v3336, %v3378
  %v3380 = vpop.f32.mrf.mxu0
  %v3381 = vadd.f32 %v3338, %v3380
  %v3382 = vpop.f32.mrf.mxu0
  %v3383 = vadd.f32 %v3340, %v3382
  %3384 = vdwg.mxu0
  %3385 = vmatprep.subr.bf16.mxu0 %v2474
  %3386 = vmatpush1.bf16.msra.mxu0 %v2473
  %3387 = vmatprep.subr.bf16.mxu0 %v2470
  %3388 = vmatpush1.bf16.msra.mxu0 %v2469
  %3389 = vmatprep.subr.bf16.mxu0 %v2466
  %3390 = vmatpush1.bf16.msra.mxu0 %v2465
  %3391 = vmatprep.subr.bf16.mxu0 %v2462
  %3392 = vmatpush1.bf16.msra.mxu0 %v2461
  %3393 = vmatprep.subr.bf16.mxu0 %v2458
  %3394 = vmatpush1.bf16.msra.mxu0 %v2457
  %3395 = vmatprep.subr.bf16.mxu0 %v2454
  %3396 = vmatpush1.bf16.msra.mxu0 %v2453
  %3397 = vmatprep.subr.bf16.mxu0 %v2450
  %3398 = vmatpush1.bf16.msra.mxu0 %v2449
  %3399 = vmatprep.subr.bf16.mxu0 %v2446
  %3400 = vmatpush1.bf16.msra.mxu0 %v2445
  %3401 = vmatprep.subr.bf16.mxu0 %v2506
  %3402 = vmatpush2.bf16.msra.mxu0 %v2505
  %3403 = vmatprep.subr.bf16.mxu0 %v2502
  %3404 = vmatpush2.bf16.msra.mxu0 %v2501
  %3405 = vmatprep.subr.bf16.mxu0 %v2498
  %3406 = vmatpush2.bf16.msra.mxu0 %v2497
  %3407 = vmatprep.subr.bf16.mxu0 %v2494
  %3408 = vmatpush2.bf16.msra.mxu0 %v2493
  %3409 = vmatprep.subr.bf16.mxu0 %v2490
  %3410 = vmatpush2.bf16.msra.mxu0 %v2489
  %3411 = vmatprep.subr.bf16.mxu0 %v2486
  %3412 = vmatpush2.bf16.msra.mxu0 %v2485
  %3413 = vmatprep.subr.bf16.mxu0 %v2482
  %3414 = vmatpush2.bf16.msra.mxu0 %v2481
  %3415 = vmatprep.subr.bf16.mxu0 %v2478
  %3416 = vmatpush2.bf16.msra.mxu0 %v2477
  %3417 = vmatprep.mubr.bf16.mxu0 %v630
  %3418 = vmatmul.mubr.bf16.gmra.mxu0 %v629
  %v3419 = vpop.f32.mrf.mxu0
  %v3420 = vadd.f32 %v3377, %v3419
  %v3421 = vpop.f32.mrf.mxu0
  %v3422 = vadd.f32 %v3379, %v3421
  %v3423 = vpop.f32.mrf.mxu0
  %v3424 = vadd.f32 %v3381, %v3423
  %v3425 = vpop.f32.mrf.mxu0
  %v3426 = vadd.f32 %v3383, %v3425
  %3427 = vdwg.mxu0
  %3428 = vmatprep.subr.bf16.mxu0 %v2538
  %3429 = vmatpush1.bf16.msra.mxu0 %v2537
  %3430 = vmatprep.subr.bf16.mxu0 %v2534
  %3431 = vmatpush1.bf16.msra.mxu0 %v2533
  %3432 = vmatprep.subr.bf16.mxu0 %v2530
  %3433 = vmatpush1.bf16.msra.mxu0 %v2529
  %3434 = vmatprep.subr.bf16.mxu0 %v2526
  %3435 = vmatpush1.bf16.msra.mxu0 %v2525
  %3436 = vmatprep.subr.bf16.mxu0 %v2522
  %3437 = vmatpush1.bf16.msra.mxu0 %v2521
  %3438 = vmatprep.subr.bf16.mxu0 %v2518
  %3439 = vmatpush1.bf16.msra.mxu0 %v2517
  %3440 = vmatprep.subr.bf16.mxu0 %v2514
  %3441 = vmatpush1.bf16.msra.mxu0 %v2513
  %3442 = vmatprep.subr.bf16.mxu0 %v2510
  %3443 = vmatpush1.bf16.msra.mxu0 %v2509
  %3444 = vmatprep.subr.bf16.mxu0 %v2570
  %3445 = vmatpush2.bf16.msra.mxu0 %v2569
  %3446 = vmatprep.subr.bf16.mxu0 %v2566
  %3447 = vmatpush2.bf16.msra.mxu0 %v2565
  %3448 = vmatprep.subr.bf16.mxu0 %v2562
  %3449 = vmatpush2.bf16.msra.mxu0 %v2561
  %3450 = vmatprep.subr.bf16.mxu0 %v2558
  %3451 = vmatpush2.bf16.msra.mxu0 %v2557
  %3452 = vmatprep.subr.bf16.mxu0 %v2554
  %3453 = vmatpush2.bf16.msra.mxu0 %v2553
  %3454 = vmatprep.subr.bf16.mxu0 %v2550
  %3455 = vmatpush2.bf16.msra.mxu0 %v2549
  %3456 = vmatprep.subr.bf16.mxu0 %v2546
  %3457 = vmatpush2.bf16.msra.mxu0 %v2545
  %3458 = vmatprep.subr.bf16.mxu0 %v2542
  %3459 = vmatpush2.bf16.msra.mxu0 %v2541
  %3460 = vmatprep.mubr.bf16.mxu0 %v632
  %3461 = vmatmul.mubr.bf16.gmra.mxu0 %v631
  %v3462 = vpop.f32.mrf.mxu0
  %v3463 = vadd.f32 %v3420, %v3462
  %v3464 = vpop.f32.mrf.mxu0
  %v3465 = vadd.f32 %v3422, %v3464
  %v3466 = vpop.f32.mrf.mxu0
  %v3467 = vadd.f32 %v3424, %v3466
  %v3468 = vpop.f32.mrf.mxu0
  %v3469 = vadd.f32 %v3426, %v3468
  %3470 = vdwg.mxu0
  %3471 = vmatprep.subr.bf16.mxu0 %v2602
  %3472 = vmatpush1.bf16.msra.mxu0 %v2601
  %3473 = vmatprep.subr.bf16.mxu0 %v2598
  %3474 = vmatpush1.bf16.msra.mxu0 %v2597
  %3475 = vmatprep.subr.bf16.mxu0 %v2594
  %3476 = vmatpush1.bf16.msra.mxu0 %v2593
  %3477 = vmatprep.subr.bf16.mxu0 %v2590
  %3478 = vmatpush1.bf16.msra.mxu0 %v2589
  %3479 = vmatprep.subr.bf16.mxu0 %v2586
  %3480 = vmatpush1.bf16.msra.mxu0 %v2585
  %3481 = vmatprep.subr.bf16.mxu0 %v2582
  %3482 = vmatpush1.bf16.msra.mxu0 %v2581
  %3483 = vmatprep.subr.bf16.mxu0 %v2578
  %3484 = vmatpush1.bf16.msra.mxu0 %v2577
  %3485 = vmatprep.subr.bf16.mxu0 %v2574
  %3486 = vmatpush1.bf16.msra.mxu0 %v2573
  %3487 = vmatprep.subr.bf16.mxu0 %v2634
  %3488 = vmatpush2.bf16.msra.mxu0 %v2633
  %3489 = vmatprep.subr.bf16.mxu0 %v2630
  %3490 = vmatpush2.bf16.msra.mxu0 %v2629
  %3491 = vmatprep.subr.bf16.mxu0 %v2626
  %3492 = vmatpush2.bf16.msra.mxu0 %v2625
  %3493 = vmatprep.subr.bf16.mxu0 %v2622
  %3494 = vmatpush2.bf16.msra.mxu0 %v2621
  %3495 = vmatprep.subr.bf16.mxu0 %v2618
  %3496 = vmatpush2.bf16.msra.mxu0 %v2617
  %3497 = vmatprep.subr.bf16.mxu0 %v2614
  %3498 = vmatpush2.bf16.msra.mxu0 %v2613
  %3499 = vmatprep.subr.bf16.mxu0 %v2610
  %3500 = vmatpush2.bf16.msra.mxu0 %v2609
  %3501 = vmatprep.subr.bf16.mxu0 %v2606
  %3502 = vmatpush2.bf16.msra.mxu0 %v2605
  %3503 = vmatprep.mubr.bf16.mxu0 %v634
  %3504 = vmatmul.mubr.bf16.gmra.mxu0 %v633
  %v3505 = vpop.f32.mrf.mxu0
  %v3506 = vadd.f32 %v3463, %v3505
  %v3507 = vpop.f32.mrf.mxu0
  %v3508 = vadd.f32 %v3465, %v3507
  %v3509 = vpop.f32.mrf.mxu0
  %v3510 = vadd.f32 %v3467, %v3509
  %v3511 = vpop.f32.mrf.mxu0
  %v3512 = vadd.f32 %v3469, %v3511
  %3513 = vdwg.mxu0
  %3514 = vmatprep.subr.bf16.mxu0 %v2666
  %3515 = vmatpush1.bf16.msra.mxu0 %v2665
  %3516 = vmatprep.subr.bf16.mxu0 %v2662
  %3517 = vmatpush1.bf16.msra.mxu0 %v2661
  %3518 = vmatprep.subr.bf16.mxu0 %v2658
  %3519 = vmatpush1.bf16.msra.mxu0 %v2657
  %3520 = vmatprep.subr.bf16.mxu0 %v2654
  %3521 = vmatpush1.bf16.msra.mxu0 %v2653
  %3522 = vmatprep.subr.bf16.mxu0 %v2650
  %3523 = vmatpush1.bf16.msra.mxu0 %v2649
  %3524 = vmatprep.subr.bf16.mxu0 %v2646
  %3525 = vmatpush1.bf16.msra.mxu0 %v2645
  %3526 = vmatprep.subr.bf16.mxu0 %v2642
  %3527 = vmatpush1.bf16.msra.mxu0 %v2641
  %3528 = vmatprep.subr.bf16.mxu0 %v2638
  %3529 = vmatpush1.bf16.msra.mxu0 %v2637
  %3530 = vmatprep.subr.bf16.mxu0 %v2698
  %3531 = vmatpush2.bf16.msra.mxu0 %v2697
  %3532 = vmatprep.subr.bf16.mxu0 %v2694
  %3533 = vmatpush2.bf16.msra.mxu0 %v2693
  %3534 = vmatprep.subr.bf16.mxu0 %v2690
  %3535 = vmatpush2.bf16.msra.mxu0 %v2689
  %3536 = vmatprep.subr.bf16.mxu0 %v2686
  %3537 = vmatpush2.bf16.msra.mxu0 %v2685
  %3538 = vmatprep.subr.bf16.mxu0 %v2682
  %3539 = vmatpush2.bf16.msra.mxu0 %v2681
  %3540 = vmatprep.subr.bf16.mxu0 %v2678
  %3541 = vmatpush2.bf16.msra.mxu0 %v2677
  %3542 = vmatprep.subr.bf16.mxu0 %v2674
  %3543 = vmatpush2.bf16.msra.mxu0 %v2673
  %3544 = vmatprep.subr.bf16.mxu0 %v2670
  %3545 = vmatpush2.bf16.msra.mxu0 %v2669
  %3546 = vmatprep.mubr.bf16.mxu0 %v636
  %3547 = vmatmul.mubr.bf16.gmra.mxu0 %v635
  %v3548 = vpop.f32.mrf.mxu0
  %v3549 = vadd.f32 %v3506, %v3548
  %v3550 = vpop.f32.mrf.mxu0
  %v3551 = vadd.f32 %v3508, %v3550
  %v3552 = vpop.f32.mrf.mxu0
  %v3553 = vadd.f32 %v3510, %v3552
  %v3554 = vpop.f32.mrf.mxu0
  %v3555 = vadd.f32 %v3512, %v3554
  %3556 = vdwg.mxu0
  %3557 = vmatprep.subr.bf16.mxu0 %v2220
  %3558 = vmatpush1.bf16.msra.mxu0 %v2219
  %3559 = vmatprep.subr.bf16.mxu0 %v2216
  %3560 = vmatpush1.bf16.msra.mxu0 %v2215
  %3561 = vmatprep.subr.bf16.mxu0 %v2212
  %3562 = vmatpush1.bf16.msra.mxu0 %v2211
  %3563 = vmatprep.subr.bf16.mxu0 %v2208
  %3564 = vmatpush1.bf16.msra.mxu0 %v2207
  %3565 = vmatprep.subr.bf16.mxu0 %v2204
  %3566 = vmatpush1.bf16.msra.mxu0 %v2203
  %3567 = vmatprep.subr.bf16.mxu0 %v2200
  %3568 = vmatpush1.bf16.msra.mxu0 %v2199
  %3569 = vmatprep.subr.bf16.mxu0 %v2196
  %3570 = vmatpush1.bf16.msra.mxu0 %v2195
  %3571 = vmatprep.subr.bf16.mxu0 %v2192
  %3572 = vmatpush1.bf16.msra.mxu0 %v2191
  %3573 = vmatprep.subr.bf16.mxu0 %v2252
  %3574 = vmatpush2.bf16.msra.mxu0 %v2251
  %3575 = vmatprep.subr.bf16.mxu0 %v2248
  %3576 = vmatpush2.bf16.msra.mxu0 %v2247
  %3577 = vmatprep.subr.bf16.mxu0 %v2244
  %3578 = vmatpush2.bf16.msra.mxu0 %v2243
  %3579 = vmatprep.subr.bf16.mxu0 %v2240
  %3580 = vmatpush2.bf16.msra.mxu0 %v2239
  %3581 = vmatprep.subr.bf16.mxu0 %v2236
  %3582 = vmatpush2.bf16.msra.mxu0 %v2235
  %3583 = vmatprep.subr.bf16.mxu0 %v2232
  %3584 = vmatpush2.bf16.msra.mxu0 %v2231
  %3585 = vmatprep.subr.bf16.mxu0 %v2228
  %3586 = vmatpush2.bf16.msra.mxu0 %v2227
  %3587 = vmatprep.subr.bf16.mxu0 %v2224
  %3588 = vmatpush2.bf16.msra.mxu0 %v2223
  %3589 = vmatprep.mubr.bf16.mxu0 %v622
  %3590 = vmatmul.mubr.bf16.gmra.mxu0 %v621
  %v3591 = vpop.f32.mrf.mxu0
  %v3592 = vadd.f32 %v564, %v3591
  %v3593 = vpop.f32.mrf.mxu0
  %v3594 = vadd.f32 %v568, %v3593
  %v3595 = vpop.f32.mrf.mxu0
  %v3596 = vadd.f32 %v564, %v3595
  %v3597 = vpop.f32.mrf.mxu0
  %v3598 = vadd.f32 %v568, %v3597
  %3599 = vdwg.mxu0
  %3600 = vmatprep.subr.bf16.mxu0 %v2284
  %3601 = vmatpush1.bf16.msra.mxu0 %v2283
  %3602 = vmatprep.subr.bf16.mxu0 %v2280
  %3603 = vmatpush1.bf16.msra.mxu0 %v2279
  %3604 = vmatprep.subr.bf16.mxu0 %v2276
  %3605 = vmatpush1.bf16.msra.mxu0 %v2275
  %3606 = vmatprep.subr.bf16.mxu0 %v2272
  %3607 = vmatpush1.bf16.msra.mxu0 %v2271
  %3608 = vmatprep.subr.bf16.mxu0 %v2268
  %3609 = vmatpush1.bf16.msra.mxu0 %v2267
  %3610 = vmatprep.subr.bf16.mxu0 %v2264
  %3611 = vmatpush1.bf16.msra.mxu0 %v2263
  %3612 = vmatprep.subr.bf16.mxu0 %v2260
  %3613 = vmatpush1.bf16.msra.mxu0 %v2259
  %3614 = vmatprep.subr.bf16.mxu0 %v2256
  %3615 = vmatpush1.bf16.msra.mxu0 %v2255
  %3616 = vmatprep.subr.bf16.mxu0 %v2316
  %3617 = vmatpush2.bf16.msra.mxu0 %v2315
  %3618 = vmatprep.subr.bf16.mxu0 %v2312
  %3619 = vmatpush2.bf16.msra.mxu0 %v2311
  %3620 = vmatprep.subr.bf16.mxu0 %v2308
  %3621 = vmatpush2.bf16.msra.mxu0 %v2307
  %3622 = vmatprep.subr.bf16.mxu0 %v2304
  %3623 = vmatpush2.bf16.msra.mxu0 %v2303
  %3624 = vmatprep.subr.bf16.mxu0 %v2300
  %3625 = vmatpush2.bf16.msra.mxu0 %v2299
  %3626 = vmatprep.subr.bf16.mxu0 %v2296
  %3627 = vmatpush2.bf16.msra.mxu0 %v2295
  %3628 = vmatprep.subr.bf16.mxu0 %v2292
  %3629 = vmatpush2.bf16.msra.mxu0 %v2291
  %3630 = vmatprep.subr.bf16.mxu0 %v2288
  %3631 = vmatpush2.bf16.msra.mxu0 %v2287
  %3632 = vmatprep.mubr.bf16.mxu0 %v624
  %3633 = vmatmul.mubr.bf16.gmra.mxu0 %v623
  %v3634 = vpop.f32.mrf.mxu0
  %v3635 = vadd.f32 %v3592, %v3634
  %v3636 = vpop.f32.mrf.mxu0
  %v3637 = vadd.f32 %v3594, %v3636
  %v3638 = vpop.f32.mrf.mxu0
  %v3639 = vadd.f32 %v3596, %v3638
  %v3640 = vpop.f32.mrf.mxu0
  %v3641 = vadd.f32 %v3598, %v3640
  %3642 = vdwg.mxu0
  %3643 = vmatprep.subr.bf16.mxu0 %v2348
  %3644 = vmatpush1.bf16.msra.mxu0 %v2347
  %3645 = vmatprep.subr.bf16.mxu0 %v2344
  %3646 = vmatpush1.bf16.msra.mxu0 %v2343
  %3647 = vmatprep.subr.bf16.mxu0 %v2340
  %3648 = vmatpush1.bf16.msra.mxu0 %v2339
  %3649 = vmatprep.subr.bf16.mxu0 %v2336
  %3650 = vmatpush1.bf16.msra.mxu0 %v2335
  %3651 = vmatprep.subr.bf16.mxu0 %v2332
  %3652 = vmatpush1.bf16.msra.mxu0 %v2331
  %3653 = vmatprep.subr.bf16.mxu0 %v2328
  %3654 = vmatpush1.bf16.msra.mxu0 %v2327
  %3655 = vmatprep.subr.bf16.mxu0 %v2324
  %3656 = vmatpush1.bf16.msra.mxu0 %v2323
  %3657 = vmatprep.subr.bf16.mxu0 %v2320
  %3658 = vmatpush1.bf16.msra.mxu0 %v2319
  %3659 = vmatprep.subr.bf16.mxu0 %v2380
  %3660 = vmatpush2.bf16.msra.mxu0 %v2379
  %3661 = vmatprep.subr.bf16.mxu0 %v2376
  %3662 = vmatpush2.bf16.msra.mxu0 %v2375
  %3663 = vmatprep.subr.bf16.mxu0 %v2372
  %3664 = vmatpush2.bf16.msra.mxu0 %v2371
  %3665 = vmatprep.subr.bf16.mxu0 %v2368
  %3666 = vmatpush2.bf16.msra.mxu0 %v2367
  %3667 = vmatprep.subr.bf16.mxu0 %v2364
  %3668 = vmatpush2.bf16.msra.mxu0 %v2363
  %3669 = vmatprep.subr.bf16.mxu0 %v2360
  %3670 = vmatpush2.bf16.msra.mxu0 %v2359
  %3671 = vmatprep.subr.bf16.mxu0 %v2356
  %3672 = vmatpush2.bf16.msra.mxu0 %v2355
  %3673 = vmatprep.subr.bf16.mxu0 %v2352
  %3674 = vmatpush2.bf16.msra.mxu0 %v2351
  %3675 = vmatprep.mubr.bf16.mxu0 %v626
  %3676 = vmatmul.mubr.bf16.gmra.mxu0 %v625
  %v3677 = vpop.f32.mrf.mxu0
  %v3678 = vadd.f32 %v3635, %v3677
  %v3679 = vpop.f32.mrf.mxu0
  %v3680 = vadd.f32 %v3637, %v3679
  %v3681 = vpop.f32.mrf.mxu0
  %v3682 = vadd.f32 %v3639, %v3681
  %v3683 = vpop.f32.mrf.mxu0
  %v3684 = vadd.f32 %v3641, %v3683
  %3685 = vdwg.mxu0
  %3686 = vmatprep.subr.bf16.mxu0 %v2412
  %3687 = vmatpush1.bf16.msra.mxu0 %v2411
  %3688 = vmatprep.subr.bf16.mxu0 %v2408
  %3689 = vmatpush1.bf16.msra.mxu0 %v2407
  %3690 = vmatprep.subr.bf16.mxu0 %v2404
  %3691 = vmatpush1.bf16.msra.mxu0 %v2403
  %3692 = vmatprep.subr.bf16.mxu0 %v2400
  %3693 = vmatpush1.bf16.msra.mxu0 %v2399
  %3694 = vmatprep.subr.bf16.mxu0 %v2396
  %3695 = vmatpush1.bf16.msra.mxu0 %v2395
  %3696 = vmatprep.subr.bf16.mxu0 %v2392
  %3697 = vmatpush1.bf16.msra.mxu0 %v2391
  %3698 = vmatprep.subr.bf16.mxu0 %v2388
  %3699 = vmatpush1.bf16.msra.mxu0 %v2387
  %3700 = vmatprep.subr.bf16.mxu0 %v2384
  %3701 = vmatpush1.bf16.msra.mxu0 %v2383
  %3702 = vmatprep.subr.bf16.mxu0 %v2444
  %3703 = vmatpush2.bf16.msra.mxu0 %v2443
  %3704 = vmatprep.subr.bf16.mxu0 %v2440
  %3705 = vmatpush2.bf16.msra.mxu0 %v2439
  %3706 = vmatprep.subr.bf16.mxu0 %v2436
  %3707 = vmatpush2.bf16.msra.mxu0 %v2435
  %3708 = vmatprep.subr.bf16.mxu0 %v2432
  %3709 = vmatpush2.bf16.msra.mxu0 %v2431
  %3710 = vmatprep.subr.bf16.mxu0 %v2428
  %3711 = vmatpush2.bf16.msra.mxu0 %v2427
  %3712 = vmatprep.subr.bf16.mxu0 %v2424
  %3713 = vmatpush2.bf16.msra.mxu0 %v2423
  %3714 = vmatprep.subr.bf16.mxu0 %v2420
  %3715 = vmatpush2.bf16.msra.mxu0 %v2419
  %3716 = vmatprep.subr.bf16.mxu0 %v2416
  %3717 = vmatpush2.bf16.msra.mxu0 %v2415
  %3718 = vmatprep.mubr.bf16.mxu0 %v628
  %3719 = vmatmul.mubr.bf16.gmra.mxu0 %v627
  %v3720 = vpop.f32.mrf.mxu0
  %v3721 = vadd.f32 %v3678, %v3720
  %v3722 = vpop.f32.mrf.mxu0
  %v3723 = vadd.f32 %v3680, %v3722
  %v3724 = vpop.f32.mrf.mxu0
  %v3725 = vadd.f32 %v3682, %v3724
  %v3726 = vpop.f32.mrf.mxu0
  %v3727 = vadd.f32 %v3684, %v3726
  %3728 = vdwg.mxu0
  %3729 = vmatprep.subr.bf16.mxu0 %v2476
  %3730 = vmatpush1.bf16.msra.mxu0 %v2475
  %3731 = vmatprep.subr.bf16.mxu0 %v2472
  %3732 = vmatpush1.bf16.msra.mxu0 %v2471
  %3733 = vmatprep.subr.bf16.mxu0 %v2468
  %3734 = vmatpush1.bf16.msra.mxu0 %v2467
  %3735 = vmatprep.subr.bf16.mxu0 %v2464
  %3736 = vmatpush1.bf16.msra.mxu0 %v2463
  %3737 = vmatprep.subr.bf16.mxu0 %v2460
  %3738 = vmatpush1.bf16.msra.mxu0 %v2459
  %3739 = vmatprep.subr.bf16.mxu0 %v2456
  %3740 = vmatpush1.bf16.msra.mxu0 %v2455
  %3741 = vmatprep.subr.bf16.mxu0 %v2452
  %3742 = vmatpush1.bf16.msra.mxu0 %v2451
  %3743 = vmatprep.subr.bf16.mxu0 %v2448
  %3744 = vmatpush1.bf16.msra.mxu0 %v2447
  %3745 = vmatprep.subr.bf16.mxu0 %v2508
  %3746 = vmatpush2.bf16.msra.mxu0 %v2507
  %3747 = vmatprep.subr.bf16.mxu0 %v2504
  %3748 = vmatpush2.bf16.msra.mxu0 %v2503
  %3749 = vmatprep.subr.bf16.mxu0 %v2500
  %3750 = vmatpush2.bf16.msra.mxu0 %v2499
  %3751 = vmatprep.subr.bf16.mxu0 %v2496
  %3752 = vmatpush2.bf16.msra.mxu0 %v2495
  %3753 = vmatprep.subr.bf16.mxu0 %v2492
  %3754 = vmatpush2.bf16.msra.mxu0 %v2491
  %3755 = vmatprep.subr.bf16.mxu0 %v2488
  %3756 = vmatpush2.bf16.msra.mxu0 %v2487
  %3757 = vmatprep.subr.bf16.mxu0 %v2484
  %3758 = vmatpush2.bf16.msra.mxu0 %v2483
  %3759 = vmatprep.subr.bf16.mxu0 %v2480
  %3760 = vmatpush2.bf16.msra.mxu0 %v2479
  %3761 = vmatprep.mubr.bf16.mxu0 %v630
  %3762 = vmatmul.mubr.bf16.gmra.mxu0 %v629
  %v3763 = vpop.f32.mrf.mxu0
  %v3764 = vadd.f32 %v3721, %v3763
  %v3765 = vpop.f32.mrf.mxu0
  %v3766 = vadd.f32 %v3723, %v3765
  %v3767 = vpop.f32.mrf.mxu0
  %v3768 = vadd.f32 %v3725, %v3767
  %v3769 = vpop.f32.mrf.mxu0
  %v3770 = vadd.f32 %v3727, %v3769
  %3771 = vdwg.mxu0
  %3772 = vmatprep.subr.bf16.mxu0 %v2540
  %3773 = vmatpush1.bf16.msra.mxu0 %v2539
  %3774 = vmatprep.subr.bf16.mxu0 %v2536
  %3775 = vmatpush1.bf16.msra.mxu0 %v2535
  %3776 = vmatprep.subr.bf16.mxu0 %v2532
  %3777 = vmatpush1.bf16.msra.mxu0 %v2531
  %3778 = vmatprep.subr.bf16.mxu0 %v2528
  %3779 = vmatpush1.bf16.msra.mxu0 %v2527
  %3780 = vmatprep.subr.bf16.mxu0 %v2524
  %3781 = vmatpush1.bf16.msra.mxu0 %v2523
  %3782 = vmatprep.subr.bf16.mxu0 %v2520
  %3783 = vmatpush1.bf16.msra.mxu0 %v2519
  %3784 = vmatprep.subr.bf16.mxu0 %v2516
  %3785 = vmatpush1.bf16.msra.mxu0 %v2515
  %3786 = vmatprep.subr.bf16.mxu0 %v2512
  %3787 = vmatpush1.bf16.msra.mxu0 %v2511
  %3788 = vmatprep.subr.bf16.mxu0 %v2572
  %3789 = vmatpush2.bf16.msra.mxu0 %v2571
  %3790 = vmatprep.subr.bf16.mxu0 %v2568
  %3791 = vmatpush2.bf16.msra.mxu0 %v2567
  %3792 = vmatprep.subr.bf16.mxu0 %v2564
  %3793 = vmatpush2.bf16.msra.mxu0 %v2563
  %3794 = vmatprep.subr.bf16.mxu0 %v2560
  %3795 = vmatpush2.bf16.msra.mxu0 %v2559
  %3796 = vmatprep.subr.bf16.mxu0 %v2556
  %3797 = vmatpush2.bf16.msra.mxu0 %v2555
  %3798 = vmatprep.subr.bf16.mxu0 %v2552
  %3799 = vmatpush2.bf16.msra.mxu0 %v2551
  %3800 = vmatprep.subr.bf16.mxu0 %v2548
  %3801 = vmatpush2.bf16.msra.mxu0 %v2547
  %3802 = vmatprep.subr.bf16.mxu0 %v2544
  %3803 = vmatpush2.bf16.msra.mxu0 %v2543
  %3804 = vmatprep.mubr.bf16.mxu0 %v632
  %3805 = vmatmul.mubr.bf16.gmra.mxu0 %v631
  %v3806 = vpop.f32.mrf.mxu0
  %v3807 = vadd.f32 %v3764, %v3806
  %v3808 = vpop.f32.mrf.mxu0
  %v3809 = vadd.f32 %v3766, %v3808
  %v3810 = vpop.f32.mrf.mxu0
  %v3811 = vadd.f32 %v3768, %v3810
  %v3812 = vpop.f32.mrf.mxu0
  %v3813 = vadd.f32 %v3770, %v3812
  %3814 = vdwg.mxu0
  %3815 = vmatprep.subr.bf16.mxu0 %v2604
  %3816 = vmatpush1.bf16.msra.mxu0 %v2603
  %3817 = vmatprep.subr.bf16.mxu0 %v2600
  %3818 = vmatpush1.bf16.msra.mxu0 %v2599
  %3819 = vmatprep.subr.bf16.mxu0 %v2596
  %3820 = vmatpush1.bf16.msra.mxu0 %v2595
  %3821 = vmatprep.subr.bf16.mxu0 %v2592
  %3822 = vmatpush1.bf16.msra.mxu0 %v2591
  %3823 = vmatprep.subr.bf16.mxu0 %v2588
  %3824 = vmatpush1.bf16.msra.mxu0 %v2587
  %3825 = vmatprep.subr.bf16.mxu0 %v2584
  %3826 = vmatpush1.bf16.msra.mxu0 %v2583
  %3827 = vmatprep.subr.bf16.mxu0 %v2580
  %3828 = vmatpush1.bf16.msra.mxu0 %v2579
  %3829 = vmatprep.subr.bf16.mxu0 %v2576
  %3830 = vmatpush1.bf16.msra.mxu0 %v2575
  %3831 = vmatprep.subr.bf16.mxu0 %v2636
  %3832 = vmatpush2.bf16.msra.mxu0 %v2635
  %3833 = vmatprep.subr.bf16.mxu0 %v2632
  %3834 = vmatpush2.bf16.msra.mxu0 %v2631
  %3835 = vmatprep.subr.bf16.mxu0 %v2628
  %3836 = vmatpush2.bf16.msra.mxu0 %v2627
  %3837 = vmatprep.subr.bf16.mxu0 %v2624
  %3838 = vmatpush2.bf16.msra.mxu0 %v2623
  %3839 = vmatprep.subr.bf16.mxu0 %v2620
  %3840 = vmatpush2.bf16.msra.mxu0 %v2619
  %3841 = vmatprep.subr.bf16.mxu0 %v2616
  %3842 = vmatpush2.bf16.msra.mxu0 %v2615
  %3843 = vmatprep.subr.bf16.mxu0 %v2612
  %3844 = vmatpush2.bf16.msra.mxu0 %v2611
  %3845 = vmatprep.subr.bf16.mxu0 %v2608
  %3846 = vmatpush2.bf16.msra.mxu0 %v2607
  %3847 = vmatprep.mubr.bf16.mxu0 %v634
  %3848 = vmatmul.mubr.bf16.gmra.mxu0 %v633
  %v3849 = vpop.f32.mrf.mxu0
  %v3850 = vadd.f32 %v3807, %v3849
  %v3851 = vpop.f32.mrf.mxu0
  %v3852 = vadd.f32 %v3809, %v3851
  %v3853 = vpop.f32.mrf.mxu0
  %v3854 = vadd.f32 %v3811, %v3853
  %v3855 = vpop.f32.mrf.mxu0
  %v3856 = vadd.f32 %v3813, %v3855
  %3857 = vdwg.mxu0
  %3858 = vmatprep.subr.bf16.mxu0 %v2668
  %3859 = vmatpush1.bf16.msra.mxu0 %v2667
  %3860 = vmatprep.subr.bf16.mxu0 %v2664
  %3861 = vmatpush1.bf16.msra.mxu0 %v2663
  %3862 = vmatprep.subr.bf16.mxu0 %v2660
  %3863 = vmatpush1.bf16.msra.mxu0 %v2659
  %3864 = vmatprep.subr.bf16.mxu0 %v2656
  %3865 = vmatpush1.bf16.msra.mxu0 %v2655
  %3866 = vmatprep.subr.bf16.mxu0 %v2652
  %3867 = vmatpush1.bf16.msra.mxu0 %v2651
  %3868 = vmatprep.subr.bf16.mxu0 %v2648
  %3869 = vmatpush1.bf16.msra.mxu0 %v2647
  %3870 = vmatprep.subr.bf16.mxu0 %v2644
  %3871 = vmatpush1.bf16.msra.mxu0 %v2643
  %3872 = vmatprep.subr.bf16.mxu0 %v2640
  %3873 = vmatpush1.bf16.msra.mxu0 %v2639
  %3874 = vmatprep.subr.bf16.mxu0 %v2700
  %3875 = vmatpush2.bf16.msra.mxu0 %v2699
  %3876 = vmatprep.subr.bf16.mxu0 %v2696
  %3877 = vmatpush2.bf16.msra.mxu0 %v2695
  %3878 = vmatprep.subr.bf16.mxu0 %v2692
  %3879 = vmatpush2.bf16.msra.mxu0 %v2691
  %3880 = vmatprep.subr.bf16.mxu0 %v2688
  %3881 = vmatpush2.bf16.msra.mxu0 %v2687
  %3882 = vmatprep.subr.bf16.mxu0 %v2684
  %3883 = vmatpush2.bf16.msra.mxu0 %v2683
  %3884 = vmatprep.subr.bf16.mxu0 %v2680
  %3885 = vmatpush2.bf16.msra.mxu0 %v2679
  %3886 = vmatprep.subr.bf16.mxu0 %v2676
  %3887 = vmatpush2.bf16.msra.mxu0 %v2675
  %3888 = vmatprep.subr.bf16.mxu0 %v2672
  %3889 = vmatpush2.bf16.msra.mxu0 %v2671
  %3890 = vmatprep.mubr.bf16.mxu0 %v636
  %3891 = vmatmul.mubr.bf16.gmra.mxu0 %v635
  %v3892 = vpop.f32.mrf.mxu0
  %v3893 = vadd.f32 %v3850, %v3892
  %v3894 = vpop.f32.mrf.mxu0
  %v3895 = vadd.f32 %v3852, %v3894
  %v3896 = vpop.f32.mrf.mxu0
  %v3897 = vadd.f32 %v3854, %v3896
  %v3898 = vpop.f32.mrf.mxu0
  %v3899 = vadd.f32 %v3856, %v3898
  %3900 = vdwg.mxu0
  %v3901 = vmax.f32 %v3549, 0.0
  %v3902 = vmax.f32 %v3551, 0.0
  %v3903 = vmax.f32 %v3893, 0.0
  %v3904 = vmax.f32 %v3895, 0.0
  %v3905 = vmax.f32 %v3553, 0.0
  %v3906 = vmax.f32 %v3555, 0.0
  %v3907 = vmax.f32 %v3897, 0.0
  %v3908 = vmax.f32 %v3899, 0.0
  %v3909 = vpack.c.bf16 %v3905, %v3901
  %v3910 = vpack.c.bf16 %v3906, %v3902
  %v3911 = vpack.c.bf16 %v3907, %v3903
  %v3912 = vpack.c.bf16 %v3908, %v3904
  %v3913 = vld [vmem:[%s3] sm:$0xf]
  %v3914 = vld [vmem:[%s3 + $0x4] sm:$0xf]
  %v3915 = vld [vmem:[%s3 + $0x8] sm:$0xf]
  %v3916 = vld [vmem:[%s3 + $0xc] sm:$0xf]
  %v3917 = vld [vmem:[%s3 + $0x10] sm:$0xf]
  %v3918 = vld [vmem:[%s3 + $0x14] sm:$0xf]
  %v3919 = vld [vmem:[%s3 + $0x18] sm:$0xf]
  %v3920 = vld [vmem:[%s3 + $0x1c] sm:$0xf]
  %v3921 = vld [vmem:[%s3 + $0x20] sm:$0xf]
  %v3922 = vld [vmem:[%s3 + $0x24] sm:$0xf]
  %v3923 = vld [vmem:[%s3 + $0x28] sm:$0xf]
  %v3924 = vld [vmem:[%s3 + $0x2c] sm:$0xf]
  %v3925 = vld [vmem:[%s3 + $0x30] sm:$0xf]
  %v3926 = vld [vmem:[%s3 + $0x34] sm:$0xf]
  %v3927 = vld [vmem:[%s3 + $0x38] sm:$0xf]
  %v3928 = vld [vmem:[%s3 + $0x3c] sm:$0xf]
  %v3929 = vld [vmem:[%s3 + $0x40] sm:$0xf]
  %v3930 = vld [vmem:[%s3 + $0x44] sm:$0xf]
  %v3931 = vld [vmem:[%s3 + $0x48] sm:$0xf]
  %v3932 = vld [vmem:[%s3 + $0x4c] sm:$0xf]
  %v3933 = vld [vmem:[%s3 + $0x50] sm:$0xf]
  %v3934 = vld [vmem:[%s3 + $0x54] sm:$0xf]
  %v3935 = vld [vmem:[%s3 + $0x58] sm:$0xf]
  %v3936 = vld [vmem:[%s3 + $0x5c] sm:$0xf]
  %v3937 = vld [vmem:[%s3 + $0x60] sm:$0xf]
  %v3938 = vld [vmem:[%s3 + $0x64] sm:$0xf]
  %v3939 = vld [vmem:[%s3 + $0x68] sm:$0xf]
  %v3940 = vld [vmem:[%s3 + $0x6c] sm:$0xf]
  %v3941 = vld [vmem:[%s3 + $0x70] sm:$0xf]
  %v3942 = vld [vmem:[%s3 + $0x74] sm:$0xf]
  %v3943 = vld [vmem:[%s3 + $0x78] sm:$0xf]
  %v3944 = vld [vmem:[%s3 + $0x7c] sm:$0xf]
  %v3945 = vld [vmem:[%s3 + $0x80] sm:$0xf]
  %v3946 = vld [vmem:[%s3 + $0x84] sm:$0xf]
  %v3947 = vld [vmem:[%s3 + $0x88] sm:$0xf]
  %v3948 = vld [vmem:[%s3 + $0x8c] sm:$0xf]
  %v3949 = vld [vmem:[%s3 + $0x90] sm:$0xf]
  %v3950 = vld [vmem:[%s3 + $0x94] sm:$0xf]
  %v3951 = vld [vmem:[%s3 + $0x98] sm:$0xf]
  %v3952 = vld [vmem:[%s3 + $0x9c] sm:$0xf]
  %v3953 = vld [vmem:[%s3 + $0xa0] sm:$0xf]
  %v3954 = vld [vmem:[%s3 + $0xa4] sm:$0xf]
  %v3955 = vld [vmem:[%s3 + $0xa8] sm:$0xf]
  %v3956 = vld [vmem:[%s3 + $0xac] sm:$0xf]
  %v3957 = vld [vmem:[%s3 + $0xb0] sm:$0xf]
  %v3958 = vld [vmem:[%s3 + $0xb4] sm:$0xf]
  %v3959 = vld [vmem:[%s3 + $0xb8] sm:$0xf]
  %v3960 = vld [vmem:[%s3 + $0xbc] sm:$0xf]
  %v3961 = vld [vmem:[%s3 + $0xc0] sm:$0xf]
  %v3962 = vld [vmem:[%s3 + $0xc4] sm:$0xf]
  %v3963 = vld [vmem:[%s3 + $0xc8] sm:$0xf]
  %v3964 = vld [vmem:[%s3 + $0xcc] sm:$0xf]
  %v3965 = vld [vmem:[%s3 + $0xd0] sm:$0xf]
  %v3966 = vld [vmem:[%s3 + $0xd4] sm:$0xf]
  %v3967 = vld [vmem:[%s3 + $0xd8] sm:$0xf]
  %v3968 = vld [vmem:[%s3 + $0xdc] sm:$0xf]
  %v3969 = vld [vmem:[%s3 + $0xe0] sm:$0xf]
  %v3970 = vld [vmem:[%s3 + $0xe4] sm:$0xf]
  %v3971 = vld [vmem:[%s3 + $0xe8] sm:$0xf]
  %v3972 = vld [vmem:[%s3 + $0xec] sm:$0xf]
  %v3973 = vld [vmem:[%s3 + $0xf0] sm:$0xf]
  %v3974 = vld [vmem:[%s3 + $0xf4] sm:$0xf]
  %v3975 = vld [vmem:[%s3 + $0xf8] sm:$0xf]
  %v3976 = vld [vmem:[%s3 + $0xfc] sm:$0xf]
  %v3977 = vld [vmem:[#allocation2] sm:$0x1]
  %v3979 = vlaneseq
  %v3980 = vshrl.u32 %v3979, 7
  %v3981 = vsub.s32 0, %v3980
  %v3982 = vrot.slane %v3977, %v3981
  %v4048 = vunpack.c.l.b16 %v3913
  %v4049 = vunpack.c.l.b16 %v3914
  %v4050 = vunpack.c.l.b16 %v3915
  %v4051 = vunpack.c.l.b16 %v3916
  %v4052 = vunpack.c.l.b16 %v3917
  %v4053 = vunpack.c.l.b16 %v3918
  %v4054 = vunpack.c.l.b16 %v3919
  %v4055 = vunpack.c.l.b16 %v3920
  %v4056 = vunpack.c.l.b16 %v3921
  %v4057 = vunpack.c.l.b16 %v3922
  %v4058 = vunpack.c.l.b16 %v3923
  %v4059 = vunpack.c.l.b16 %v3924
  %v4060 = vunpack.c.l.b16 %v3925
  %v4061 = vunpack.c.l.b16 %v3926
  %v4062 = vunpack.c.l.b16 %v3927
  %v4063 = vunpack.c.l.b16 %v3928
  %v4064 = vunpack.c.l.b16 %v3929
  %v4065 = vunpack.c.l.b16 %v3930
  %v4066 = vunpack.c.l.b16 %v3931
  %v4067 = vunpack.c.l.b16 %v3932
  %v4068 = vunpack.c.l.b16 %v3933
  %v4069 = vunpack.c.l.b16 %v3934
  %v4070 = vunpack.c.l.b16 %v3935
  %v4071 = vunpack.c.l.b16 %v3936
  %v4072 = vunpack.c.l.b16 %v3937
  %v4073 = vunpack.c.l.b16 %v3938
  %v4074 = vunpack.c.l.b16 %v3939
  %v4075 = vunpack.c.l.b16 %v3940
  %v4076 = vunpack.c.l.b16 %v3941
  %v4077 = vunpack.c.l.b16 %v3942
  %v4078 = vunpack.c.l.b16 %v3943
  %v4079 = vunpack.c.l.b16 %v3944
  %v4080 = vunpack.c.l.b16 %v3945
  %v4081 = vunpack.c.l.b16 %v3946
  %v4082 = vunpack.c.l.b16 %v3947
  %v4083 = vunpack.c.l.b16 %v3948
  %v4084 = vunpack.c.l.b16 %v3949
  %v4085 = vunpack.c.l.b16 %v3950
  %v4086 = vunpack.c.l.b16 %v3951
  %v4087 = vunpack.c.l.b16 %v3952
  %v4088 = vunpack.c.l.b16 %v3953
  %v4089 = vunpack.c.l.b16 %v3954
  %v4090 = vunpack.c.l.b16 %v3955
  %v4091 = vunpack.c.l.b16 %v3956
  %v4092 = vunpack.c.l.b16 %v3957
  %v4093 = vunpack.c.l.b16 %v3958
  %v4094 = vunpack.c.l.b16 %v3959
  %v4095 = vunpack.c.l.b16 %v3960
  %v4096 = vunpack.c.l.b16 %v3961
  %v4097 = vunpack.c.l.b16 %v3962
  %v4098 = vunpack.c.l.b16 %v3963
  %v4099 = vunpack.c.l.b16 %v3964
  %v4100 = vunpack.c.l.b16 %v3965
  %v4101 = vunpack.c.l.b16 %v3966
  %v4102 = vunpack.c.l.b16 %v3967
  %v4103 = vunpack.c.l.b16 %v3968
  %v4104 = vunpack.c.l.b16 %v3969
  %v4105 = vunpack.c.l.b16 %v3970
  %v4106 = vunpack.c.l.b16 %v3971
  %v4107 = vunpack.c.l.b16 %v3972
  %v4108 = vunpack.c.l.b16 %v3973
  %v4109 = vunpack.c.l.b16 %v3974
  %v4110 = vunpack.c.l.b16 %v3975
  %v4111 = vunpack.c.l.b16 %v3976
  %v4112 = vpack.c.b16 %v4049, %v4048
  %v4113 = vpack.c.b16 %v4051, %v4050
  %v4114 = vpack.c.b16 %v4053, %v4052
  %v4115 = vpack.c.b16 %v4055, %v4054
  %v4116 = vpack.c.b16 %v4057, %v4056
  %v4117 = vpack.c.b16 %v4059, %v4058
  %v4118 = vpack.c.b16 %v4061, %v4060
  %v4119 = vpack.c.b16 %v4063, %v4062
  %v4120 = vpack.c.b16 %v4065, %v4064
  %v4121 = vpack.c.b16 %v4067, %v4066
  %v4122 = vpack.c.b16 %v4069, %v4068
  %v4123 = vpack.c.b16 %v4071, %v4070
  %v4124 = vpack.c.b16 %v4073, %v4072
  %v4125 = vpack.c.b16 %v4075, %v4074
  %v4126 = vpack.c.b16 %v4077, %v4076
  %v4127 = vpack.c.b16 %v4079, %v4078
  %v4128 = vpack.c.b16 %v4081, %v4080
  %v4129 = vpack.c.b16 %v4083, %v4082
  %v4130 = vpack.c.b16 %v4085, %v4084
  %v4131 = vpack.c.b16 %v4087, %v4086
  %v4132 = vpack.c.b16 %v4089, %v4088
  %v4133 = vpack.c.b16 %v4091, %v4090
  %v4134 = vpack.c.b16 %v4093, %v4092
  %v4135 = vpack.c.b16 %v4095, %v4094
  %v4136 = vpack.c.b16 %v4097, %v4096
  %v4137 = vpack.c.b16 %v4099, %v4098
  %v4138 = vpack.c.b16 %v4101, %v4100
  %v4139 = vpack.c.b16 %v4103, %v4102
  %v4140 = vpack.c.b16 %v4105, %v4104
  %v4141 = vpack.c.b16 %v4107, %v4106
  %v4142 = vpack.c.b16 %v4109, %v4108
  %v4143 = vpack.c.b16 %v4111, %v4110
  %4176 = vmatprep.subr.bf16.mxu0 0
  %4177 = vmatpush1.bf16.msra.mxu0 %v4119
  %4178 = vmatprep.subr.bf16.mxu0 0
  %4179 = vmatpush1.bf16.msra.mxu0 %v4118
  %4180 = vmatprep.subr.bf16.mxu0 0
  %4181 = vmatpush1.bf16.msra.mxu0 %v4117
  %4182 = vmatprep.subr.bf16.mxu0 0
  %4183 = vmatpush1.bf16.msra.mxu0 %v4116
  %4184 = vmatprep.subr.bf16.mxu0 0
  %4185 = vmatpush1.bf16.msra.mxu0 %v4115
  %4186 = vmatprep.subr.bf16.mxu0 0
  %4187 = vmatpush1.bf16.msra.mxu0 %v4114
  %4188 = vmatprep.subr.bf16.mxu0 0
  %4189 = vmatpush1.bf16.msra.mxu0 %v4113
  %4190 = vmatprep.subr.bf16.mxu0 0
  %4191 = vmatpush1.bf16.msra.mxu0 %v4112
  %4192 = vmatprep.subr.bf16.mxu0 0
  %4193 = vmatpush2.bf16.msra.mxu0 %v4127
  %4194 = vmatprep.subr.bf16.mxu0 0
  %4195 = vmatpush2.bf16.msra.mxu0 %v4126
  %4196 = vmatprep.subr.bf16.mxu0 0
  %4197 = vmatpush2.bf16.msra.mxu0 %v4125
  %4198 = vmatprep.subr.bf16.mxu0 0
  %4199 = vmatpush2.bf16.msra.mxu0 %v4124
  %4200 = vmatprep.subr.bf16.mxu0 0
  %4201 = vmatpush2.bf16.msra.mxu0 %v4123
  %4202 = vmatprep.subr.bf16.mxu0 0
  %4203 = vmatpush2.bf16.msra.mxu0 %v4122
  %4204 = vmatprep.subr.bf16.mxu0 0
  %4205 = vmatpush2.bf16.msra.mxu0 %v4121
  %4206 = vmatprep.subr.bf16.mxu0 0
  %4207 = vmatpush2.bf16.msra.mxu0 %v4120
  %4208 = vmatprep.mubr.bf16.mxu0 %v3910
  %4209 = vmatmul.mubr.bf16.gmra.mxu0 %v3909
  %v4210 = vpop.f32.mrf.mxu0
  %v4211 = vadd.f32 %v3982, %v4210
  %v4212 = vpop.f32.mrf.mxu0
  %v4213 = vpop.f32.mrf.mxu0
  %v4214 = vadd.f32 %v3982, %v4213
  %v4215 = vpop.f32.mrf.mxu0
  %4216 = vdwg.mxu0
  %4217 = vmatprep.subr.bf16.mxu0 0
  %4218 = vmatpush1.bf16.msra.mxu0 %v4135
  %4219 = vmatprep.subr.bf16.mxu0 0
  %4220 = vmatpush1.bf16.msra.mxu0 %v4134
  %4221 = vmatprep.subr.bf16.mxu0 0
  %4222 = vmatpush1.bf16.msra.mxu0 %v4133
  %4223 = vmatprep.subr.bf16.mxu0 0
  %4224 = vmatpush1.bf16.msra.mxu0 %v4132
  %4225 = vmatprep.subr.bf16.mxu0 0
  %4226 = vmatpush1.bf16.msra.mxu0 %v4131
  %4227 = vmatprep.subr.bf16.mxu0 0
  %4228 = vmatpush1.bf16.msra.mxu0 %v4130
  %4229 = vmatprep.subr.bf16.mxu0 0
  %4230 = vmatpush1.bf16.msra.mxu0 %v4129
  %4231 = vmatprep.subr.bf16.mxu0 0
  %4232 = vmatpush1.bf16.msra.mxu0 %v4128
  %4233 = vmatprep.subr.bf16.mxu0 0
  %4234 = vmatpush2.bf16.msra.mxu0 %v4143
  %4235 = vmatprep.subr.bf16.mxu0 0
  %4236 = vmatpush2.bf16.msra.mxu0 %v4142
  %4237 = vmatprep.subr.bf16.mxu0 0
  %4238 = vmatpush2.bf16.msra.mxu0 %v4141
  %4239 = vmatprep.subr.bf16.mxu0 0
  %4240 = vmatpush2.bf16.msra.mxu0 %v4140
  %4241 = vmatprep.subr.bf16.mxu0 0
  %4242 = vmatpush2.bf16.msra.mxu0 %v4139
  %4243 = vmatprep.subr.bf16.mxu0 0
  %4244 = vmatpush2.bf16.msra.mxu0 %v4138
  %4245 = vmatprep.subr.bf16.mxu0 0
  %4246 = vmatpush2.bf16.msra.mxu0 %v4137
  %4247 = vmatprep.subr.bf16.mxu0 0
  %4248 = vmatpush2.bf16.msra.mxu0 %v4136
  %4249 = vmatprep.mubr.bf16.mxu0 %v3912
  %4250 = vmatmul.mubr.bf16.gmra.mxu0 %v3911
  %v4251 = vpop.f32.mrf.mxu0
  %v4252 = vadd.f32 %v4211, %v4251
  %v4253 = vpop.f32.mrf.mxu0
  %v4254 = vpop.f32.mrf.mxu0
  %v4255 = vadd.f32 %v4214, %v4254
  %v4256 = vpop.f32.mrf.mxu0
  %4257 = vdwg.mxu0
  %v4258 = vsub.f32 0.0, %v4252
  %v4259 = vsub.f32 0.0, %v4255
  %v4260 = vmul.f32 %v4258, 1.442695
  %v4261 = vpow.pop %v4260
  %v4262 = vmul.f32 %v4259, 1.442695
  %v4263 = vpow.pop %v4262
  %v4264 = vadd.f32 %v4261, 1.0
  %v4265 = vadd.f32 %v4263, 1.0
  %v4266 = vrcp.pop %v4264
  %v4267 = vrcp.pop %v4265
  %vm4268 = vcmask 7168
  %4269 = vst.msk [vmem:[%s5] sm:$0xff] %vm4268, %v4266
  %4270 = vst.msk [vmem:[%s5 + $0x8] sm:$0xff] %vm4268, %v4267
  // Predicated region
  $region22: #{learner_forward.1} parent=0 // pred_check
    _
  $region23: #{learner_forward.1} parent=0 // pred_check_branch
    %4272 = sbr.rel (0) target = $region25
  $region24: #{learner_forward.1} parent=0 // pred_region
    _
  $region25: #{learner_forward.1} parent=0 // pred_fallthru
    _
  // Predicated region
  $region26: #{learner_forward.1} parent=0 // pred_check
    _
  $region27: #{learner_forward.1} parent=0 // pred_check_branch
    %4274 = sbr.rel (0) target = $region29
  $region28: #{learner_forward.1} parent=0 // pred_region
    _
  $region29: #{learner_forward.1} parent=0 // pred_fallthru
    _

</llo_original>
